<compile_context>
chip_gen: v6e
topology: v6e:2x2x1
jax: 0.10.0
libtpu: 0.0.40
codegen_flags: <defaults>
</compile_context>

<pallas_src>
import functools
import math

import jax
import jax.numpy as jnp
from jax.experimental import pallas as pl
from jax.experimental.pallas import tpu as pltpu

# --- module constants (from the PyTorch source) ---
d_k = d_v = 32
n_heads = 8
d_ff = 128
LN_EPS = 1e-5  # torch.nn.LayerNorm default


def _layer_norm(v, gamma, beta):
    mu = jnp.mean(v, axis=-1, keepdims=True)
    var = jnp.mean((v - mu) ** 2, axis=-1, keepdims=True)
    return (v - mu) * jax.lax.rsqrt(var + LN_EPS) * gamma + beta


def encoder_layer_kernel(x_ref, mask_ref,
                         wq_ref, wk_ref, wv_ref, wo_ref,
                         g1_ref, b1_ref,
                         w1_ref, w2_ref, g2_ref, b2_ref,
                         out_ref, attn_ref, *, approx_recip):
    Bb, S, D = x_ref.shape
    mmdt = wq_ref.dtype                     # matmul operand dtype (f32 or bf16)

    x3 = x_ref[...]                         # (Bb, S, D) f32
    x2 = x3.reshape(Bb * S, D)              # fold batch into the matmul M dim (major-dim merge: free)
    xm = x2.astype(mmdt)

    # --- Q / K / V projections over the whole (Bb*S)-row block (MXU) ---
    Q = jnp.dot(xm, wq_ref[...], preferred_element_type=jnp.float32)   # (Bb*S, H*d_k)
    K = jnp.dot(xm, wk_ref[...], preferred_element_type=jnp.float32)
    V = jnp.dot(xm, wv_ref[...], preferred_element_type=jnp.float32)

    # hoisted: one scale of Q instead of 8 per-head score scalings
    Q = Q * (1.0 / math.sqrt(d_k))

    Q3 = Q.reshape(Bb, S, n_heads * d_k)    # major-dim split: free
    K3 = K.reshape(Bb, S, n_heads * d_k)
    V3 = V.reshape(Bb, S, n_heads * d_v)

    # hoisted: one mask compare, reused by every head
    mask_bool = mask_ref[...] != 0          # (Bb, S, S)

    attn_parts = []
    ctx_parts = []
    for h in range(n_heads):                # static unroll; einsums are batched over Bb
        qh = Q3[:, :, h * d_k:(h + 1) * d_k].astype(mmdt)   # (Bb, S, d_k)
        kh = K3[:, :, h * d_k:(h + 1) * d_k].astype(mmdt)
        vh = V3[:, :, h * d_v:(h + 1) * d_v]

        s = jnp.einsum('bqd,bkd->bqk', qh, kh,
                       preferred_element_type=jnp.float32)             # (Bb, S, S)
        s = jnp.where(mask_bool, jnp.float32(-1e9), s)                  # masked_fill_

        m = jnp.max(s, axis=-1, keepdims=True)
        e = jnp.exp(s - m)
        p = e * pl.reciprocal(jnp.sum(e, axis=-1, keepdims=True),
                              approx=approx_recip)                      # softmax, f32

        attn_parts.append(p)
        ctx_parts.append(jnp.einsum('bqk,bkd->bqd',
                                    p.astype(mmdt), vh.astype(mmdt),
                                    preferred_element_type=jnp.float32))

    # one lane-concatenated store for all heads' attention weights of this block
    attn_ref[...] = jnp.concatenate(attn_parts, axis=-1)                # (Bb, S, H*S)

    context = jnp.concatenate(ctx_parts, axis=-1).reshape(Bb * S, n_heads * d_v)

    # --- output projection + residual + LayerNorm (MHA) ---
    mha = jnp.dot(context.astype(mmdt), wo_ref[...],
                  preferred_element_type=jnp.float32) + x2
    ln1 = _layer_norm(mha, g1_ref[...], b1_ref[...])

    # --- position-wise FFN: LayerNorm(W2(ReLU(W1(x)))) + x ---
    h1 = jnp.maximum(jnp.dot(ln1.astype(mmdt), w1_ref[...],
                             preferred_element_type=jnp.float32), 0.0)
    h2 = jnp.dot(h1.astype(mmdt), w2_ref[...], preferred_element_type=jnp.float32)
    ln2 = _layer_norm(h2, g2_ref[...], b2_ref[...])

    out_ref[...] = (ln2 + ln1).reshape(Bb, S, D)    # single whole-block store


def encoder_layer(x, mask_i32, params, *, block_b=None,
                  matmul_dtype=jnp.float32, approx_recip=False):
    """x: (B,S,D) f32, mask_i32: (B,S,S) int32 (1 == masked).
    Returns (enc_outputs (B,S,D) f32, attn (B,H,S,S) f32)."""
    B, S, D = x.shape
    wq, wk, wv, wo, g1, b1, w1, w2, g2, b2 = params

    if block_b is None:
        # Fold the whole batch into one grid step (minimises per-step overhead and
        # maximises matmul M).  On v7x choose block_b = B // 2 (when B is even and
        # large) so the "parallel" axis has >= 2 steps and both TensorCores work.
        block_b = B
    assert B % block_b == 0, "block_b must divide the batch"
    grid = (B // block_b,)

    # cast matmul weights once in the wrapper -> halves the weight DMA in bf16 mode
    wq_c, wk_c, wv_c, wo_c, w1_c, w2_c = (w.astype(matmul_dtype)
                                          for w in (wq, wk, wv, wo, w1, w2))

    wspec = lambda shape: pl.BlockSpec(shape, lambda i: (0, 0))
    kernel = functools.partial(encoder_layer_kernel, approx_recip=approx_recip)

    out, attn_flat = pl.pallas_call(
        kernel,
        out_shape=(
            jax.ShapeDtypeStruct((B, S, D), jnp.float32),
            # lane-dense attention slab: (B, S, H*S); reshaped back to (B,H,S,S)
            # in the wrapper (free XLA layout plumbing).
            jax.ShapeDtypeStruct((B, S, n_heads * S), jnp.float32),
        ),
        grid=grid,
        in_specs=[
            pl.BlockSpec((block_b, S, D), lambda i: (i, 0, 0)),    # x
            pl.BlockSpec((block_b, S, S), lambda i: (i, 0, 0)),    # mask
            wspec((D, n_heads * d_k)),                              # W_Q
            wspec((D, n_heads * d_k)),                              # W_K
            wspec((D, n_heads * d_v)),                              # W_V
            wspec((n_heads * d_v, D)),                              # fc (output proj)
            wspec((1, D)),                                          # ln1 gamma
            wspec((1, D)),                                          # ln1 beta
            wspec((D, d_ff)),                                       # ffn W1
            wspec((d_ff, D)),                                       # ffn W2
            wspec((1, D)),                                          # ln2 gamma
            wspec((1, D)),                                          # ln2 beta
        ],
        out_specs=(
            pl.BlockSpec((block_b, S, D), lambda i: (i, 0, 0)),
            pl.BlockSpec((block_b, S, n_heads * S), lambda i: (i, 0, 0)),
        ),
        compiler_params=pltpu.CompilerParams(
            dimension_semantics=("parallel",)),
    )(x, mask_i32, wq_c, wk_c, wv_c, wo_c, g1, b1, w1_c, w2_c, g2, b2)

    # attn_flat[b, q, h*S + k] == attn[b, h, q, k]
    attn = attn_flat.reshape(B, S, n_heads, S).transpose(0, 2, 1, 3)
    return out, attn


def reference_jax(x, mask_bool, params):
    """Pure-JAX f32 reference mirroring the PyTorch forward, for verification."""
    wq, wk, wv, wo, g1, b1, w1, w2, g2, b2 = params
    B, S, D = x.shape

    def ln(v, g, b):
        mu = jnp.mean(v, axis=-1, keepdims=True)
        var = jnp.mean((v - mu) ** 2, axis=-1, keepdims=True)
        return (v - mu) / jnp.sqrt(var + LN_EPS) * g + b

    Q = (x @ wq).reshape(B, S, n_heads, d_k).transpose(0, 2, 1, 3)
    K = (x @ wk).reshape(B, S, n_heads, d_k).transpose(0, 2, 1, 3)
    V = (x @ wv).reshape(B, S, n_heads, d_v).transpose(0, 2, 1, 3)
    scores = jnp.einsum("bhqd,bhkd->bhqk", Q, K) / math.sqrt(d_k)
    scores = jnp.where(mask_bool[:, None, :, :], -1e9, scores)
    attn = jax.nn.softmax(scores, axis=-1)
    ctx = jnp.einsum("bhqk,bhkd->bhqd", attn, V).transpose(0, 2, 1, 3).reshape(B, S, -1)
    mha = ln(ctx @ wo + x, g1[0], b1[0])
    ffn = ln(jnp.maximum(mha @ w1, 0.0) @ w2, g2[0], b2[0]) + mha
    return ffn, attn


if __name__ == "__main__":
    B, S, d_model = 2, 8, 32

    key = jax.random.PRNGKey(0)
    ks = jax.random.split(key, 8)
    scale = 0.05
    wq = scale * jax.random.normal(ks[0], (d_model, n_heads * d_k), jnp.float32)
    wk = scale * jax.random.normal(ks[1], (d_model, n_heads * d_k), jnp.float32)
    wv = scale * jax.random.normal(ks[2], (d_model, n_heads * d_v), jnp.float32)
    wo = scale * jax.random.normal(ks[3], (n_heads * d_v, d_model), jnp.float32)
    w1 = scale * jax.random.normal(ks[4], (d_model, d_ff), jnp.float32)
    w2 = scale * jax.random.normal(ks[5], (d_ff, d_model), jnp.float32)
    g1 = jnp.ones((1, d_model), jnp.float32)
    b1 = jnp.zeros((1, d_model), jnp.float32)
    g2 = jnp.ones((1, d_model), jnp.float32)
    b2 = jnp.zeros((1, d_model), jnp.float32)
    params = (wq, wk, wv, wo, g1, b1, w1, w2, g2, b2)

    x = jax.random.normal(ks[6], (B, S, d_model), jnp.float32)

    # padding-style self-attention mask: batch 1 has its last 2 keys masked
    pad = jnp.array([[0, 0, 0, 0, 0, 0, 0, 0],
                     [0, 0, 0, 0, 0, 0, 1, 1]], dtype=jnp.int32)     # (B, S)
    mask_i32 = jnp.broadcast_to(pad[:, None, :], (B, S, S)).astype(jnp.int32)
    mask_bool = mask_i32.astype(bool)

    ref_out, ref_attn = reference_jax(x, mask_bool, params)

    # 1) exact-semantics configuration: f32 MXU operands, exact reciprocal
    out, attn = encoder_layer(x, mask_i32, params,
                              matmul_dtype=jnp.float32, approx_recip=False)
    jax.block_until_ready((out, attn))
    assert jnp.allclose(out, ref_out, atol=1e-4, rtol=1e-4), "enc_outputs mismatch (f32)"
    assert jnp.allclose(attn, ref_attn, atol=1e-5, rtol=1e-5), "attn mismatch (f32)"

    # 2) fast configuration (perf-review recipe for v6e/v7x): bf16 MXU operands,
    #    f32 accumulation / softmax / LayerNorm, EUP approximate reciprocal.
    out_f, attn_f = encoder_layer(x, mask_i32, params,
                                  matmul_dtype=jnp.bfloat16, approx_recip=True)
    jax.block_until_ready((out_f, attn_f))
    assert jnp.allclose(out_f, ref_out, atol=5e-2, rtol=5e-2), "enc_outputs mismatch (bf16)"
    assert jnp.allclose(attn_f, ref_attn, atol=5e-3, rtol=5e-3), "attn mismatch (bf16)"

    print("KERNEL_OK")
</pallas_src>

<mosaic_0001>
module attributes {stable_mosaic.version = 11 : i64} {
  func.func @encoder_layer_kernel(%arg0: i32, %arg1: memref<2x8x32xf32, #tpu.memory_space<vmem>>, %arg2: memref<2x8x8xi32, #tpu.memory_space<vmem>>, %arg3: memref<32x256xf32, #tpu.memory_space<vmem>>, %arg4: memref<32x256xf32, #tpu.memory_space<vmem>>, %arg5: memref<32x256xf32, #tpu.memory_space<vmem>>, %arg6: memref<256x32xf32, #tpu.memory_space<vmem>>, %arg7: memref<1x32xf32, #tpu.memory_space<vmem>>, %arg8: memref<1x32xf32, #tpu.memory_space<vmem>>, %arg9: memref<32x128xf32, #tpu.memory_space<vmem>>, %arg10: memref<128x32xf32, #tpu.memory_space<vmem>>, %arg11: memref<1x32xf32, #tpu.memory_space<vmem>>, %arg12: memref<1x32xf32, #tpu.memory_space<vmem>>, %arg13: memref<2x8x32xf32, #tpu.memory_space<vmem>>, %arg14: memref<2x8x64xf32, #tpu.memory_space<vmem>>) attributes {dimension_semantics = [#tpu.dimension_semantics<parallel>], iteration_bounds = array<i64: 1>, scalar_prefetch = 0 : i64, scratch_operands = 0 : i64, tpu.core_type = #tpu.core_type<tc>, window_params = [{transform_indices = @transform_0, window_bounds = array<i64: 2, 8, 32>}, {transform_indices = @transform_1, window_bounds = array<i64: 2, 8, 8>}, {pipeline_mode = #tpu.pipeline_mode<synchronous>, transform_indices = @transform_2, window_bounds = array<i64: 32, 256>}, {pipeline_mode = #tpu.pipeline_mode<synchronous>, transform_indices = @transform_3, window_bounds = array<i64: 32, 256>}, {pipeline_mode = #tpu.pipeline_mode<synchronous>, transform_indices = @transform_4, window_bounds = array<i64: 32, 256>}, {pipeline_mode = #tpu.pipeline_mode<synchronous>, transform_indices = @transform_5, window_bounds = array<i64: 256, 32>}, {pipeline_mode = #tpu.pipeline_mode<synchronous>, transform_indices = @transform_6, window_bounds = array<i64: 1, 32>}, {pipeline_mode = #tpu.pipeline_mode<synchronous>, transform_indices = @transform_7, window_bounds = array<i64: 1, 32>}, {pipeline_mode = #tpu.pipeline_mode<synchronous>, transform_indices = @transform_8, window_bounds = array<i64: 32, 128>}, {pipeline_mode = #tpu.pipeline_mode<synchronous>, transform_indices = @transform_9, window_bounds = array<i64: 128, 32>}, {pipeline_mode = #tpu.pipeline_mode<synchronous>, transform_indices = @transform_10, window_bounds = array<i64: 1, 32>}, {pipeline_mode = #tpu.pipeline_mode<synchronous>, transform_indices = @transform_11, window_bounds = array<i64: 1, 32>}, {transform_indices = @transform_12, window_bounds = array<i64: 2, 8, 32>}, {transform_indices = @transform_13, window_bounds = array<i64: 2, 8, 64>}]} {
    %c0 = arith.constant 0 : index
    %c0_0 = arith.constant 0 : index
    %c0_1 = arith.constant 0 : index
    %0 = vector.load %arg1[%c0, %c0_0, %c0_1] : memref<2x8x32xf32, #tpu.memory_space<vmem>>, vector<2x8x32xf32>
    %1 = vector.shape_cast %0 : vector<2x8x32xf32> to vector<16x32xf32>
    %c0_2 = arith.constant 0 : index
    %c0_3 = arith.constant 0 : index
    %2 = vector.load %arg3[%c0_2, %c0_3] : memref<32x256xf32, #tpu.memory_space<vmem>>, vector<32x256xf32>
    %cst = arith.constant dense<0.000000e+00> : vector<16x256xf32>
    %3 = tpu.matmul %1, %2, %cst {dimension_numbers = #tpu.dot_dimension_numbers<[1], [0], [0], [1], [0, 0, 1, 1], [], []>} : vector<16x32xf32>, vector<32x256xf32>, vector<16x256xf32> -> vector<16x256xf32>
    %c0_4 = arith.constant 0 : index
    %c0_5 = arith.constant 0 : index
    %4 = vector.load %arg4[%c0_4, %c0_5] : memref<32x256xf32, #tpu.memory_space<vmem>>, vector<32x256xf32>
    %cst_6 = arith.constant dense<0.000000e+00> : vector<16x256xf32>
    %5 = tpu.matmul %1, %4, %cst_6 {dimension_numbers = #tpu.dot_dimension_numbers<[1], [0], [0], [1], [0, 0, 1, 1], [], []>} : vector<16x32xf32>, vector<32x256xf32>, vector<16x256xf32> -> vector<16x256xf32>
    %c0_7 = arith.constant 0 : index
    %c0_8 = arith.constant 0 : index
    %6 = vector.load %arg5[%c0_7, %c0_8] : memref<32x256xf32, #tpu.memory_space<vmem>>, vector<32x256xf32>
    %cst_9 = arith.constant dense<0.000000e+00> : vector<16x256xf32>
    %7 = tpu.matmul %1, %6, %cst_9 {dimension_numbers = #tpu.dot_dimension_numbers<[1], [0], [0], [1], [0, 0, 1, 1], [], []>} : vector<16x32xf32>, vector<32x256xf32>, vector<16x256xf32> -> vector<16x256xf32>
    %cst_10 = arith.constant 0.176776692 : f32
    %8 = vector.broadcast %cst_10 : f32 to vector<16x256xf32>
    %9 = arith.mulf %3, %8 : vector<16x256xf32>
    %10 = vector.shape_cast %9 : vector<16x256xf32> to vector<2x8x256xf32>
    %11 = vector.shape_cast %5 : vector<16x256xf32> to vector<2x8x256xf32>
    %12 = vector.shape_cast %7 : vector<16x256xf32> to vector<2x8x256xf32>
    %c0_11 = arith.constant 0 : index
    %c0_12 = arith.constant 0 : index
    %c0_13 = arith.constant 0 : index
    %13 = vector.load %arg2[%c0_11, %c0_12, %c0_13] : memref<2x8x8xi32, #tpu.memory_space<vmem>>, vector<2x8x8xi32>
    %c0_i32 = arith.constant 0 : i32
    %14 = vector.broadcast %c0_i32 : i32 to vector<2x8x8xi32>
    %15 = arith.cmpi ne, %13, %14 : vector<2x8x8xi32>
    %16 = vector.extract_strided_slice %10 {offsets = [0, 0, 0], sizes = [2, 8, 32], strides = [1, 1, 1]} : vector<2x8x256xf32> to vector<2x8x32xf32>
    %17 = vector.extract_strided_slice %11 {offsets = [0, 0, 0], sizes = [2, 8, 32], strides = [1, 1, 1]} : vector<2x8x256xf32> to vector<2x8x32xf32>
    %18 = vector.extract_strided_slice %12 {offsets = [0, 0, 0], sizes = [2, 8, 32], strides = [1, 1, 1]} : vector<2x8x256xf32> to vector<2x8x32xf32>
    "tpu.trace_start"() <{level = 10 : i32, message = "bqd,bkd->bqk"}> : () -> ()
    %cst_14 = arith.constant dense<0.000000e+00> : vector<2x8x8xf32>
    %19 = tpu.matmul %16, %17, %cst_14 {dimension_numbers = #tpu.dot_dimension_numbers<[2], [2], [1], [1], [0, 0, 0, 1, 1, 1], [0], [0]>} : vector<2x8x32xf32>, vector<2x8x32xf32>, vector<2x8x8xf32> -> vector<2x8x8xf32>
    %cst_15 = arith.constant -1.000000e+09 : f32
    "tpu.trace_stop"() : () -> ()
    %20 = vector.broadcast %cst_15 : f32 to vector<2x8x8xf32>
    %21 = arith.select %15, %20, %19 : vector<2x8x8xi1>, vector<2x8x8xf32>
    %cst_16 = arith.constant dense<0xFF800000> : vector<2x8xf32>
    %22 = vector.multi_reduction <maximumf>, %21, %cst_16 [2] : vector<2x8x8xf32> to vector<2x8xf32>
    %23 = vector.shape_cast %22 : vector<2x8xf32> to vector<2x8x1xf32>
    %24 = vector.broadcast %23 : vector<2x8x1xf32> to vector<2x8x8xf32>
    %25 = arith.subf %21, %24 : vector<2x8x8xf32>
    %26 = math.exp %25 : vector<2x8x8xf32>
    %cst_17 = arith.constant dense<0.000000e+00> : vector<2x8xf32>
    %27 = vector.multi_reduction <add>, %26, %cst_17 [2] : vector<2x8x8xf32> to vector<2x8xf32>
    %28 = vector.shape_cast %27 : vector<2x8xf32> to vector<2x8x1xf32>
    %29 = tpu.reciprocal %28 : vector<2x8x1xf32> -> vector<2x8x1xf32>
    %30 = vector.broadcast %29 : vector<2x8x1xf32> to vector<2x8x8xf32>
    %31 = arith.mulf %26, %30 : vector<2x8x8xf32>
    "tpu.trace_start"() <{level = 10 : i32, message = "bqk,bkd->bqd"}> : () -> ()
    %cst_18 = arith.constant dense<0.000000e+00> : vector<2x8x32xf32>
    %32 = tpu.matmul %31, %18, %cst_18 {dimension_numbers = #tpu.dot_dimension_numbers<[2], [1], [1], [2], [0, 0, 0, 1, 1, 2], [0], [0]>} : vector<2x8x8xf32>, vector<2x8x32xf32>, vector<2x8x32xf32> -> vector<2x8x32xf32>
    "tpu.trace_stop"() : () -> ()
    %33 = vector.extract_strided_slice %10 {offsets = [0, 0, 32], sizes = [2, 8, 32], strides = [1, 1, 1]} : vector<2x8x256xf32> to vector<2x8x32xf32>
    %34 = vector.extract_strided_slice %11 {offsets = [0, 0, 32], sizes = [2, 8, 32], strides = [1, 1, 1]} : vector<2x8x256xf32> to vector<2x8x32xf32>
    %35 = vector.extract_strided_slice %12 {offsets = [0, 0, 32], sizes = [2, 8, 32], strides = [1, 1, 1]} : vector<2x8x256xf32> to vector<2x8x32xf32>
    "tpu.trace_start"() <{level = 10 : i32, message = "bqd,bkd->bqk"}> : () -> ()
    %cst_19 = arith.constant dense<0.000000e+00> : vector<2x8x8xf32>
    %36 = tpu.matmul %33, %34, %cst_19 {dimension_numbers = #tpu.dot_dimension_numbers<[2], [2], [1], [1], [0, 0, 0, 1, 1, 1], [0], [0]>} : vector<2x8x32xf32>, vector<2x8x32xf32>, vector<2x8x8xf32> -> vector<2x8x8xf32>
    %cst_20 = arith.constant -1.000000e+09 : f32
    "tpu.trace_stop"() : () -> ()
    %37 = vector.broadcast %cst_20 : f32 to vector<2x8x8xf32>
    %38 = arith.select %15, %37, %36 : vector<2x8x8xi1>, vector<2x8x8xf32>
    %cst_21 = arith.constant dense<0xFF800000> : vector<2x8xf32>
    %39 = vector.multi_reduction <maximumf>, %38, %cst_21 [2] : vector<2x8x8xf32> to vector<2x8xf32>
    %40 = vector.shape_cast %39 : vector<2x8xf32> to vector<2x8x1xf32>
    %41 = vector.broadcast %40 : vector<2x8x1xf32> to vector<2x8x8xf32>
    %42 = arith.subf %38, %41 : vector<2x8x8xf32>
    %43 = math.exp %42 : vector<2x8x8xf32>
    %cst_22 = arith.constant dense<0.000000e+00> : vector<2x8xf32>
    %44 = vector.multi_reduction <add>, %43, %cst_22 [2] : vector<2x8x8xf32> to vector<2x8xf32>
    %45 = vector.shape_cast %44 : vector<2x8xf32> to vector<2x8x1xf32>
    %46 = tpu.reciprocal %45 : vector<2x8x1xf32> -> vector<2x8x1xf32>
    %47 = vector.broadcast %46 : vector<2x8x1xf32> to vector<2x8x8xf32>
    %48 = arith.mulf %43, %47 : vector<2x8x8xf32>
    "tpu.trace_start"() <{level = 10 : i32, message = "bqk,bkd->bqd"}> : () -> ()
    %cst_23 = arith.constant dense<0.000000e+00> : vector<2x8x32xf32>
    %49 = tpu.matmul %48, %35, %cst_23 {dimension_numbers = #tpu.dot_dimension_numbers<[2], [1], [1], [2], [0, 0, 0, 1, 1, 2], [0], [0]>} : vector<2x8x8xf32>, vector<2x8x32xf32>, vector<2x8x32xf32> -> vector<2x8x32xf32>
    "tpu.trace_stop"() : () -> ()
    %50 = vector.extract_strided_slice %10 {offsets = [0, 0, 64], sizes = [2, 8, 32], strides = [1, 1, 1]} : vector<2x8x256xf32> to vector<2x8x32xf32>
    %51 = vector.extract_strided_slice %11 {offsets = [0, 0, 64], sizes = [2, 8, 32], strides = [1, 1, 1]} : vector<2x8x256xf32> to vector<2x8x32xf32>
    %52 = vector.extract_strided_slice %12 {offsets = [0, 0, 64], sizes = [2, 8, 32], strides = [1, 1, 1]} : vector<2x8x256xf32> to vector<2x8x32xf32>
    "tpu.trace_start"() <{level = 10 : i32, message = "bqd,bkd->bqk"}> : () -> ()
    %cst_24 = arith.constant dense<0.000000e+00> : vector<2x8x8xf32>
    %53 = tpu.matmul %50, %51, %cst_24 {dimension_numbers = #tpu.dot_dimension_numbers<[2], [2], [1], [1], [0, 0, 0, 1, 1, 1], [0], [0]>} : vector<2x8x32xf32>, vector<2x8x32xf32>, vector<2x8x8xf32> -> vector<2x8x8xf32>
    %cst_25 = arith.constant -1.000000e+09 : f32
    "tpu.trace_stop"() : () -> ()
    %54 = vector.broadcast %cst_25 : f32 to vector<2x8x8xf32>
    %55 = arith.select %15, %54, %53 : vector<2x8x8xi1>, vector<2x8x8xf32>
    %cst_26 = arith.constant dense<0xFF800000> : vector<2x8xf32>
    %56 = vector.multi_reduction <maximumf>, %55, %cst_26 [2] : vector<2x8x8xf32> to vector<2x8xf32>
    %57 = vector.shape_cast %56 : vector<2x8xf32> to vector<2x8x1xf32>
    %58 = vector.broadcast %57 : vector<2x8x1xf32> to vector<2x8x8xf32>
    %59 = arith.subf %55, %58 : vector<2x8x8xf32>
    %60 = math.exp %59 : vector<2x8x8xf32>
    %cst_27 = arith.constant dense<0.000000e+00> : vector<2x8xf32>
    %61 = vector.multi_reduction <add>, %60, %cst_27 [2] : vector<2x8x8xf32> to vector<2x8xf32>
    %62 = vector.shape_cast %61 : vector<2x8xf32> to vector<2x8x1xf32>
    %63 = tpu.reciprocal %62 : vector<2x8x1xf32> -> vector<2x8x1xf32>
    %64 = vector.broadcast %63 : vector<2x8x1xf32> to vector<2x8x8xf32>
    %65 = arith.mulf %60, %64 : vector<2x8x8xf32>
    "tpu.trace_start"() <{level = 10 : i32, message = "bqk,bkd->bqd"}> : () -> ()
    %cst_28 = arith.constant dense<0.000000e+00> : vector<2x8x32xf32>
    %66 = tpu.matmul %65, %52, %cst_28 {dimension_numbers = #tpu.dot_dimension_numbers<[2], [1], [1], [2], [0, 0, 0, 1, 1, 2], [0], [0]>} : vector<2x8x8xf32>, vector<2x8x32xf32>, vector<2x8x32xf32> -> vector<2x8x32xf32>
    "tpu.trace_stop"() : () -> ()
    %67 = vector.extract_strided_slice %10 {offsets = [0, 0, 96], sizes = [2, 8, 32], strides = [1, 1, 1]} : vector<2x8x256xf32> to vector<2x8x32xf32>
    %68 = vector.extract_strided_slice %11 {offsets = [0, 0, 96], sizes = [2, 8, 32], strides = [1, 1, 1]} : vector<2x8x256xf32> to vector<2x8x32xf32>
    %69 = vector.extract_strided_slice %12 {offsets = [0, 0, 96], sizes = [2, 8, 32], strides = [1, 1, 1]} : vector<2x8x256xf32> to vector<2x8x32xf32>
    "tpu.trace_start"() <{level = 10 : i32, message = "bqd,bkd->bqk"}> : () -> ()
    %cst_29 = arith.constant dense<0.000000e+00> : vector<2x8x8xf32>
    %70 = tpu.matmul %67, %68, %cst_29 {dimension_numbers = #tpu.dot_dimension_numbers<[2], [2], [1], [1], [0, 0, 0, 1, 1, 1], [0], [0]>} : vector<2x8x32xf32>, vector<2x8x32xf32>, vector<2x8x8xf32> -> vector<2x8x8xf32>
    %cst_30 = arith.constant -1.000000e+09 : f32
    "tpu.trace_stop"() : () -> ()
    %71 = vector.broadcast %cst_30 : f32 to vector<2x8x8xf32>
    %72 = arith.select %15, %71, %70 : vector<2x8x8xi1>, vector<2x8x8xf32>
    %cst_31 = arith.constant dense<0xFF800000> : vector<2x8xf32>
    %73 = vector.multi_reduction <maximumf>, %72, %cst_31 [2] : vector<2x8x8xf32> to vector<2x8xf32>
    %74 = vector.shape_cast %73 : vector<2x8xf32> to vector<2x8x1xf32>
    %75 = vector.broadcast %74 : vector<2x8x1xf32> to vector<2x8x8xf32>
    %76 = arith.subf %72, %75 : vector<2x8x8xf32>
    %77 = math.exp %76 : vector<2x8x8xf32>
    %cst_32 = arith.constant dense<0.000000e+00> : vector<2x8xf32>
    %78 = vector.multi_reduction <add>, %77, %cst_32 [2] : vector<2x8x8xf32> to vector<2x8xf32>
    %79 = vector.shape_cast %78 : vector<2x8xf32> to vector<2x8x1xf32>
    %80 = tpu.reciprocal %79 : vector<2x8x1xf32> -> vector<2x8x1xf32>
    %81 = vector.broadcast %80 : vector<2x8x1xf32> to vector<2x8x8xf32>
    %82 = arith.mulf %77, %81 : vector<2x8x8xf32>
    "tpu.trace_start"() <{level = 10 : i32, message = "bqk,bkd->bqd"}> : () -> ()
    %cst_33 = arith.constant dense<0.000000e+00> : vector<2x8x32xf32>
    %83 = tpu.matmul %82, %69, %cst_33 {dimension_numbers = #tpu.dot_dimension_numbers<[2], [1], [1], [2], [0, 0, 0, 1, 1, 2], [0], [0]>} : vector<2x8x8xf32>, vector<2x8x32xf32>, vector<2x8x32xf32> -> vector<2x8x32xf32>
    "tpu.trace_stop"() : () -> ()
    %84 = vector.extract_strided_slice %10 {offsets = [0, 0, 128], sizes = [2, 8, 32], strides = [1, 1, 1]} : vector<2x8x256xf32> to vector<2x8x32xf32>
    %85 = vector.extract_strided_slice %11 {offsets = [0, 0, 128], sizes = [2, 8, 32], strides = [1, 1, 1]} : vector<2x8x256xf32> to vector<2x8x32xf32>
    %86 = vector.extract_strided_slice %12 {offsets = [0, 0, 128], sizes = [2, 8, 32], strides = [1, 1, 1]} : vector<2x8x256xf32> to vector<2x8x32xf32>
    "tpu.trace_start"() <{level = 10 : i32, message = "bqd,bkd->bqk"}> : () -> ()
    %cst_34 = arith.constant dense<0.000000e+00> : vector<2x8x8xf32>
    %87 = tpu.matmul %84, %85, %cst_34 {dimension_numbers = #tpu.dot_dimension_numbers<[2], [2], [1], [1], [0, 0, 0, 1, 1, 1], [0], [0]>} : vector<2x8x32xf32>, vector<2x8x32xf32>, vector<2x8x8xf32> -> vector<2x8x8xf32>
    %cst_35 = arith.constant -1.000000e+09 : f32
    "tpu.trace_stop"() : () -> ()
    %88 = vector.broadcast %cst_35 : f32 to vector<2x8x8xf32>
    %89 = arith.select %15, %88, %87 : vector<2x8x8xi1>, vector<2x8x8xf32>
    %cst_36 = arith.constant dense<0xFF800000> : vector<2x8xf32>
    %90 = vector.multi_reduction <maximumf>, %89, %cst_36 [2] : vector<2x8x8xf32> to vector<2x8xf32>
    %91 = vector.shape_cast %90 : vector<2x8xf32> to vector<2x8x1xf32>
    %92 = vector.broadcast %91 : vector<2x8x1xf32> to vector<2x8x8xf32>
    %93 = arith.subf %89, %92 : vector<2x8x8xf32>
    %94 = math.exp %93 : vector<2x8x8xf32>
    %cst_37 = arith.constant dense<0.000000e+00> : vector<2x8xf32>
    %95 = vector.multi_reduction <add>, %94, %cst_37 [2] : vector<2x8x8xf32> to vector<2x8xf32>
    %96 = vector.shape_cast %95 : vector<2x8xf32> to vector<2x8x1xf32>
    %97 = tpu.reciprocal %96 : vector<2x8x1xf32> -> vector<2x8x1xf32>
    %98 = vector.broadcast %97 : vector<2x8x1xf32> to vector<2x8x8xf32>
    %99 = arith.mulf %94, %98 : vector<2x8x8xf32>
    "tpu.trace_start"() <{level = 10 : i32, message = "bqk,bkd->bqd"}> : () -> ()
    %cst_38 = arith.constant dense<0.000000e+00> : vector<2x8x32xf32>
    %100 = tpu.matmul %99, %86, %cst_38 {dimension_numbers = #tpu.dot_dimension_numbers<[2], [1], [1], [2], [0, 0, 0, 1, 1, 2], [0], [0]>} : vector<2x8x8xf32>, vector<2x8x32xf32>, vector<2x8x32xf32> -> vector<2x8x32xf32>
    "tpu.trace_stop"() : () -> ()
    %101 = vector.extract_strided_slice %10 {offsets = [0, 0, 160], sizes = [2, 8, 32], strides = [1, 1, 1]} : vector<2x8x256xf32> to vector<2x8x32xf32>
    %102 = vector.extract_strided_slice %11 {offsets = [0, 0, 160], sizes = [2, 8, 32], strides = [1, 1, 1]} : vector<2x8x256xf32> to vector<2x8x32xf32>
    %103 = vector.extract_strided_slice %12 {offsets = [0, 0, 160], sizes = [2, 8, 32], strides = [1, 1, 1]} : vector<2x8x256xf32> to vector<2x8x32xf32>
    "tpu.trace_start"() <{level = 10 : i32, message = "bqd,bkd->bqk"}> : () -> ()
    %cst_39 = arith.constant dense<0.000000e+00> : vector<2x8x8xf32>
    %104 = tpu.matmul %101, %102, %cst_39 {dimension_numbers = #tpu.dot_dimension_numbers<[2], [2], [1], [1], [0, 0, 0, 1, 1, 1], [0], [0]>} : vector<2x8x32xf32>, vector<2x8x32xf32>, vector<2x8x8xf32> -> vector<2x8x8xf32>
    %cst_40 = arith.constant -1.000000e+09 : f32
    "tpu.trace_stop"() : () -> ()
    %105 = vector.broadcast %cst_40 : f32 to vector<2x8x8xf32>
    %106 = arith.select %15, %105, %104 : vector<2x8x8xi1>, vector<2x8x8xf32>
    %cst_41 = arith.constant dense<0xFF800000> : vector<2x8xf32>
    %107 = vector.multi_reduction <maximumf>, %106, %cst_41 [2] : vector<2x8x8xf32> to vector<2x8xf32>
    %108 = vector.shape_cast %107 : vector<2x8xf32> to vector<2x8x1xf32>
    %109 = vector.broadcast %108 : vector<2x8x1xf32> to vector<2x8x8xf32>
    %110 = arith.subf %106, %109 : vector<2x8x8xf32>
    %111 = math.exp %110 : vector<2x8x8xf32>
    %cst_42 = arith.constant dense<0.000000e+00> : vector<2x8xf32>
    %112 = vector.multi_reduction <add>, %111, %cst_42 [2] : vector<2x8x8xf32> to vector<2x8xf32>
    %113 = vector.shape_cast %112 : vector<2x8xf32> to vector<2x8x1xf32>
    %114 = tpu.reciprocal %113 : vector<2x8x1xf32> -> vector<2x8x1xf32>
    %115 = vector.broadcast %114 : vector<2x8x1xf32> to vector<2x8x8xf32>
    %116 = arith.mulf %111, %115 : vector<2x8x8xf32>
    "tpu.trace_start"() <{level = 10 : i32, message = "bqk,bkd->bqd"}> : () -> ()
    %cst_43 = arith.constant dense<0.000000e+00> : vector<2x8x32xf32>
    %117 = tpu.matmul %116, %103, %cst_43 {dimension_numbers = #tpu.dot_dimension_numbers<[2], [1], [1], [2], [0, 0, 0, 1, 1, 2], [0], [0]>} : vector<2x8x8xf32>, vector<2x8x32xf32>, vector<2x8x32xf32> -> vector<2x8x32xf32>
    "tpu.trace_stop"() : () -> ()
    %118 = vector.extract_strided_slice %10 {offsets = [0, 0, 192], sizes = [2, 8, 32], strides = [1, 1, 1]} : vector<2x8x256xf32> to vector<2x8x32xf32>
    %119 = vector.extract_strided_slice %11 {offsets = [0, 0, 192], sizes = [2, 8, 32], strides = [1, 1, 1]} : vector<2x8x256xf32> to vector<2x8x32xf32>
    %120 = vector.extract_strided_slice %12 {offsets = [0, 0, 192], sizes = [2, 8, 32], strides = [1, 1, 1]} : vector<2x8x256xf32> to vector<2x8x32xf32>
    "tpu.trace_start"() <{level = 10 : i32, message = "bqd,bkd->bqk"}> : () -> ()
    %cst_44 = arith.constant dense<0.000000e+00> : vector<2x8x8xf32>
    %121 = tpu.matmul %118, %119, %cst_44 {dimension_numbers = #tpu.dot_dimension_numbers<[2], [2], [1], [1], [0, 0, 0, 1, 1, 1], [0], [0]>} : vector<2x8x32xf32>, vector<2x8x32xf32>, vector<2x8x8xf32> -> vector<2x8x8xf32>
    %cst_45 = arith.constant -1.000000e+09 : f32
    "tpu.trace_stop"() : () -> ()
    %122 = vector.broadcast %cst_45 : f32 to vector<2x8x8xf32>
    %123 = arith.select %15, %122, %121 : vector<2x8x8xi1>, vector<2x8x8xf32>
    %cst_46 = arith.constant dense<0xFF800000> : vector<2x8xf32>
    %124 = vector.multi_reduction <maximumf>, %123, %cst_46 [2] : vector<2x8x8xf32> to vector<2x8xf32>
    %125 = vector.shape_cast %124 : vector<2x8xf32> to vector<2x8x1xf32>
    %126 = vector.broadcast %125 : vector<2x8x1xf32> to vector<2x8x8xf32>
    %127 = arith.subf %123, %126 : vector<2x8x8xf32>
    %128 = math.exp %127 : vector<2x8x8xf32>
    %cst_47 = arith.constant dense<0.000000e+00> : vector<2x8xf32>
    %129 = vector.multi_reduction <add>, %128, %cst_47 [2] : vector<2x8x8xf32> to vector<2x8xf32>
    %130 = vector.shape_cast %129 : vector<2x8xf32> to vector<2x8x1xf32>
    %131 = tpu.reciprocal %130 : vector<2x8x1xf32> -> vector<2x8x1xf32>
    %132 = vector.broadcast %131 : vector<2x8x1xf32> to vector<2x8x8xf32>
    %133 = arith.mulf %128, %132 : vector<2x8x8xf32>
    "tpu.trace_start"() <{level = 10 : i32, message = "bqk,bkd->bqd"}> : () -> ()
    %cst_48 = arith.constant dense<0.000000e+00> : vector<2x8x32xf32>
    %134 = tpu.matmul %133, %120, %cst_48 {dimension_numbers = #tpu.dot_dimension_numbers<[2], [1], [1], [2], [0, 0, 0, 1, 1, 2], [0], [0]>} : vector<2x8x8xf32>, vector<2x8x32xf32>, vector<2x8x32xf32> -> vector<2x8x32xf32>
    "tpu.trace_stop"() : () -> ()
    %135 = vector.extract_strided_slice %10 {offsets = [0, 0, 224], sizes = [2, 8, 32], strides = [1, 1, 1]} : vector<2x8x256xf32> to vector<2x8x32xf32>
    %136 = vector.extract_strided_slice %11 {offsets = [0, 0, 224], sizes = [2, 8, 32], strides = [1, 1, 1]} : vector<2x8x256xf32> to vector<2x8x32xf32>
    %137 = vector.extract_strided_slice %12 {offsets = [0, 0, 224], sizes = [2, 8, 32], strides = [1, 1, 1]} : vector<2x8x256xf32> to vector<2x8x32xf32>
    "tpu.trace_start"() <{level = 10 : i32, message = "bqd,bkd->bqk"}> : () -> ()
    %cst_49 = arith.constant dense<0.000000e+00> : vector<2x8x8xf32>
    %138 = tpu.matmul %135, %136, %cst_49 {dimension_numbers = #tpu.dot_dimension_numbers<[2], [2], [1], [1], [0, 0, 0, 1, 1, 1], [0], [0]>} : vector<2x8x32xf32>, vector<2x8x32xf32>, vector<2x8x8xf32> -> vector<2x8x8xf32>
    %cst_50 = arith.constant -1.000000e+09 : f32
    "tpu.trace_stop"() : () -> ()
    %139 = vector.broadcast %cst_50 : f32 to vector<2x8x8xf32>
    %140 = arith.select %15, %139, %138 : vector<2x8x8xi1>, vector<2x8x8xf32>
    %cst_51 = arith.constant dense<0xFF800000> : vector<2x8xf32>
    %141 = vector.multi_reduction <maximumf>, %140, %cst_51 [2] : vector<2x8x8xf32> to vector<2x8xf32>
    %142 = vector.shape_cast %141 : vector<2x8xf32> to vector<2x8x1xf32>
    %143 = vector.broadcast %142 : vector<2x8x1xf32> to vector<2x8x8xf32>
    %144 = arith.subf %140, %143 : vector<2x8x8xf32>
    %145 = math.exp %144 : vector<2x8x8xf32>
    %cst_52 = arith.constant dense<0.000000e+00> : vector<2x8xf32>
    %146 = vector.multi_reduction <add>, %145, %cst_52 [2] : vector<2x8x8xf32> to vector<2x8xf32>
    %147 = vector.shape_cast %146 : vector<2x8xf32> to vector<2x8x1xf32>
    %148 = tpu.reciprocal %147 : vector<2x8x1xf32> -> vector<2x8x1xf32>
    %149 = vector.broadcast %148 : vector<2x8x1xf32> to vector<2x8x8xf32>
    %150 = arith.mulf %145, %149 : vector<2x8x8xf32>
    "tpu.trace_start"() <{level = 10 : i32, message = "bqk,bkd->bqd"}> : () -> ()
    %cst_53 = arith.constant dense<0.000000e+00> : vector<2x8x32xf32>
    %151 = tpu.matmul %150, %137, %cst_53 {dimension_numbers = #tpu.dot_dimension_numbers<[2], [1], [1], [2], [0, 0, 0, 1, 1, 2], [0], [0]>} : vector<2x8x8xf32>, vector<2x8x32xf32>, vector<2x8x32xf32> -> vector<2x8x32xf32>
    "tpu.trace_stop"() : () -> ()
    %152 = tpu.concatenate %31, %48, %65, %82, %99, %116, %133, %150 in 2 : vector<2x8x8xf32>, vector<2x8x8xf32>, vector<2x8x8xf32>, vector<2x8x8xf32>, vector<2x8x8xf32>, vector<2x8x8xf32>, vector<2x8x8xf32>, vector<2x8x8xf32> -> vector<2x8x64xf32>
    %c0_54 = arith.constant 0 : index
    %c0_55 = arith.constant 0 : index
    %c0_56 = arith.constant 0 : index
    %153 = vector.load %arg14[%c0_54, %c0_55, %c0_56] : memref<2x8x64xf32, #tpu.memory_space<vmem>>, vector<2x8x64xf32>
    tpu.vector_store %arg14[%c0_54, %c0_55, %c0_56], %152 {strides = array<i32>} : memref<2x8x64xf32, #tpu.memory_space<vmem>>, vector<2x8x64xf32>,
    %154 = tpu.concatenate %32, %49, %66, %83, %100, %117, %134, %151 in 2 : vector<2x8x32xf32>, vector<2x8x32xf32>, vector<2x8x32xf32>, vector<2x8x32xf32>, vector<2x8x32xf32>, vector<2x8x32xf32>, vector<2x8x32xf32>, vector<2x8x32xf32> -> vector<2x8x256xf32>
    %155 = vector.shape_cast %154 : vector<2x8x256xf32> to vector<16x256xf32>
    %c0_57 = arith.constant 0 : index
    %c0_58 = arith.constant 0 : index
    %156 = vector.load %arg6[%c0_57, %c0_58] : memref<256x32xf32, #tpu.memory_space<vmem>>, vector<256x32xf32>
    %cst_59 = arith.constant dense<0.000000e+00> : vector<16x32xf32>
    %157 = tpu.matmul %155, %156, %cst_59 {dimension_numbers = #tpu.dot_dimension_numbers<[1], [0], [0], [1], [0, 0, 1, 1], [], []>} : vector<16x256xf32>, vector<256x32xf32>, vector<16x32xf32> -> vector<16x32xf32>
    %158 = arith.addf %157, %1 : vector<16x32xf32>
    %c0_60 = arith.constant 0 : index
    %c0_61 = arith.constant 0 : index
    %159 = vector.load %arg7[%c0_60, %c0_61] : memref<1x32xf32, #tpu.memory_space<vmem>>, vector<1x32xf32>
    %c0_62 = arith.constant 0 : index
    %c0_63 = arith.constant 0 : index
    %160 = vector.load %arg8[%c0_62, %c0_63] : memref<1x32xf32, #tpu.memory_space<vmem>>, vector<1x32xf32>
    %cst_64 = arith.constant dense<0.000000e+00> : vector<16xf32>
    %161 = vector.multi_reduction <add>, %158, %cst_64 [1] : vector<16x32xf32> to vector<16xf32>
    %162 = vector.shape_cast %161 : vector<16xf32> to vector<16x1xf32>
    %cst_65 = arith.constant 3.200000e+01 : f32
    %163 = vector.broadcast %cst_65 : f32 to vector<16x1xf32>
    %164 = arith.divf %162, %163 : vector<16x1xf32>
    %165 = vector.broadcast %164 : vector<16x1xf32> to vector<16x32xf32>
    %166 = arith.subf %158, %165 : vector<16x32xf32>
    %167 = arith.mulf %166, %166 : vector<16x32xf32>
    %cst_66 = arith.constant dense<0.000000e+00> : vector<16xf32>
    %168 = vector.multi_reduction <add>, %167, %cst_66 [1] : vector<16x32xf32> to vector<16xf32>
    %169 = vector.shape_cast %168 : vector<16xf32> to vector<16x1xf32>
    %cst_67 = arith.constant 3.200000e+01 : f32
    %170 = vector.broadcast %cst_67 : f32 to vector<16x1xf32>
    %171 = arith.divf %169, %170 : vector<16x1xf32>
    %172 = vector.broadcast %164 : vector<16x1xf32> to vector<16x32xf32>
    %173 = arith.subf %158, %172 : vector<16x32xf32>
    %cst_68 = arith.constant 9.99999974E-6 : f32
    %174 = vector.broadcast %cst_68 : f32 to vector<16x1xf32>
    %175 = arith.addf %171, %174 : vector<16x1xf32>
    %176 = math.rsqrt %175 : vector<16x1xf32>
    %177 = vector.broadcast %176 : vector<16x1xf32> to vector<16x32xf32>
    %178 = arith.mulf %173, %177 : vector<16x32xf32>
    %179 = vector.broadcast %159 : vector<1x32xf32> to vector<16x32xf32>
    %180 = arith.mulf %178, %179 : vector<16x32xf32>
    %181 = vector.broadcast %160 : vector<1x32xf32> to vector<16x32xf32>
    %182 = arith.addf %180, %181 : vector<16x32xf32>
    %c0_69 = arith.constant 0 : index
    %c0_70 = arith.constant 0 : index
    %183 = vector.load %arg9[%c0_69, %c0_70] : memref<32x128xf32, #tpu.memory_space<vmem>>, vector<32x128xf32>
    %cst_71 = arith.constant dense<0.000000e+00> : vector<16x128xf32>
    %184 = tpu.matmul %182, %183, %cst_71 {dimension_numbers = #tpu.dot_dimension_numbers<[1], [0], [0], [1], [0, 0, 1, 1], [], []>} : vector<16x32xf32>, vector<32x128xf32>, vector<16x128xf32> -> vector<16x128xf32>
    %cst_72 = arith.constant 0.000000e+00 : f32
    %185 = vector.broadcast %cst_72 : f32 to vector<16x128xf32>
    %186 = arith.maximumf %184, %185 : vector<16x128xf32>
    %c0_73 = arith.constant 0 : index
    %c0_74 = arith.constant 0 : index
    %187 = vector.load %arg10[%c0_73, %c0_74] : memref<128x32xf32, #tpu.memory_space<vmem>>, vector<128x32xf32>
    %cst_75 = arith.constant dense<0.000000e+00> : vector<16x32xf32>
    %188 = tpu.matmul %186, %187, %cst_75 {dimension_numbers = #tpu.dot_dimension_numbers<[1], [0], [0], [1], [0, 0, 1, 1], [], []>} : vector<16x128xf32>, vector<128x32xf32>, vector<16x32xf32> -> vector<16x32xf32>
    %c0_76 = arith.constant 0 : index
    %c0_77 = arith.constant 0 : index
    %189 = vector.load %arg11[%c0_76, %c0_77] : memref<1x32xf32, #tpu.memory_space<vmem>>, vector<1x32xf32>
    %c0_78 = arith.constant 0 : index
    %c0_79 = arith.constant 0 : index
    %190 = vector.load %arg12[%c0_78, %c0_79] : memref<1x32xf32, #tpu.memory_space<vmem>>, vector<1x32xf32>
    %cst_80 = arith.constant dense<0.000000e+00> : vector<16xf32>
    %191 = vector.multi_reduction <add>, %188, %cst_80 [1] : vector<16x32xf32> to vector<16xf32>
    %192 = vector.shape_cast %191 : vector<16xf32> to vector<16x1xf32>
    %cst_81 = arith.constant 3.200000e+01 : f32
    %193 = vector.broadcast %cst_81 : f32 to vector<16x1xf32>
    %194 = arith.divf %192, %193 : vector<16x1xf32>
    %195 = vector.broadcast %194 : vector<16x1xf32> to vector<16x32xf32>
    %196 = arith.subf %188, %195 : vector<16x32xf32>
    %197 = arith.mulf %196, %196 : vector<16x32xf32>
    %cst_82 = arith.constant dense<0.000000e+00> : vector<16xf32>
    %198 = vector.multi_reduction <add>, %197, %cst_82 [1] : vector<16x32xf32> to vector<16xf32>
    %199 = vector.shape_cast %198 : vector<16xf32> to vector<16x1xf32>
    %cst_83 = arith.constant 3.200000e+01 : f32
    %200 = vector.broadcast %cst_83 : f32 to vector<16x1xf32>
    %201 = arith.divf %199, %200 : vector<16x1xf32>
    %202 = vector.broadcast %194 : vector<16x1xf32> to vector<16x32xf32>
    %203 = arith.subf %188, %202 : vector<16x32xf32>
    %cst_84 = arith.constant 9.99999974E-6 : f32
    %204 = vector.broadcast %cst_84 : f32 to vector<16x1xf32>
    %205 = arith.addf %201, %204 : vector<16x1xf32>
    %206 = math.rsqrt %205 : vector<16x1xf32>
    %207 = vector.broadcast %206 : vector<16x1xf32> to vector<16x32xf32>
    %208 = arith.mulf %203, %207 : vector<16x32xf32>
    %209 = vector.broadcast %189 : vector<1x32xf32> to vector<16x32xf32>
    %210 = arith.mulf %208, %209 : vector<16x32xf32>
    %211 = vector.broadcast %190 : vector<1x32xf32> to vector<16x32xf32>
    %212 = arith.addf %210, %211 : vector<16x32xf32>
    %213 = arith.addf %212, %182 : vector<16x32xf32>
    %214 = vector.shape_cast %213 : vector<16x32xf32> to vector<2x8x32xf32>
    %c0_85 = arith.constant 0 : index
    %c0_86 = arith.constant 0 : index
    %c0_87 = arith.constant 0 : index
    %215 = vector.load %arg13[%c0_85, %c0_86, %c0_87] : memref<2x8x32xf32, #tpu.memory_space<vmem>>, vector<2x8x32xf32>
    tpu.vector_store %arg13[%c0_85, %c0_86, %c0_87], %214 {strides = array<i32>} : memref<2x8x32xf32, #tpu.memory_space<vmem>>, vector<2x8x32xf32>,
    return
  }
  func.func @transform_0(%arg0: i32) -> (i32, i32, i32) {
    %c0_i32 = arith.constant 0 : i32
    %c0_i32_0 = arith.constant 0 : i32
    %c0_i32_1 = arith.constant 0 : i32
    return %arg0, %c0_i32, %c0_i32_0 : i32, i32, i32
  }
  func.func @transform_1(%arg0: i32) -> (i32, i32, i32) {
    %c0_i32 = arith.constant 0 : i32
    %c0_i32_0 = arith.constant 0 : i32
    %c0_i32_1 = arith.constant 0 : i32
    return %arg0, %c0_i32, %c0_i32_0 : i32, i32, i32
  }
  func.func @transform_2(%arg0: i32) -> (i32, i32) {
    %c0_i32 = arith.constant 0 : i32
    %c0_i32_0 = arith.constant 0 : i32
    %c0_i32_1 = arith.constant 0 : i32
    return %c0_i32, %c0_i32_0 : i32, i32
  }
  func.func @transform_3(%arg0: i32) -> (i32, i32) {
    %c0_i32 = arith.constant 0 : i32
    %c0_i32_0 = arith.constant 0 : i32
    %c0_i32_1 = arith.constant 0 : i32
    return %c0_i32, %c0_i32_0 : i32, i32
  }
  func.func @transform_4(%arg0: i32) -> (i32, i32) {
    %c0_i32 = arith.constant 0 : i32
    %c0_i32_0 = arith.constant 0 : i32
    %c0_i32_1 = arith.constant 0 : i32
    return %c0_i32, %c0_i32_0 : i32, i32
  }
  func.func @transform_5(%arg0: i32) -> (i32, i32) {
    %c0_i32 = arith.constant 0 : i32
    %c0_i32_0 = arith.constant 0 : i32
    %c0_i32_1 = arith.constant 0 : i32
    return %c0_i32, %c0_i32_0 : i32, i32
  }
  func.func @transform_6(%arg0: i32) -> (i32, i32) {
    %c0_i32 = arith.constant 0 : i32
    %c0_i32_0 = arith.constant 0 : i32
    %c0_i32_1 = arith.constant 0 : i32
    return %c0_i32, %c0_i32_0 : i32, i32
  }
  func.func @transform_7(%arg0: i32) -> (i32, i32) {
    %c0_i32 = arith.constant 0 : i32
    %c0_i32_0 = arith.constant 0 : i32
    %c0_i32_1 = arith.constant 0 : i32
    return %c0_i32, %c0_i32_0 : i32, i32
  }
  func.func @transform_8(%arg0: i32) -> (i32, i32) {
    %c0_i32 = arith.constant 0 : i32
    %c0_i32_0 = arith.constant 0 : i32
    %c0_i32_1 = arith.constant 0 : i32
    return %c0_i32, %c0_i32_0 : i32, i32
  }
  func.func @transform_9(%arg0: i32) -> (i32, i32) {
    %c0_i32 = arith.constant 0 : i32
    %c0_i32_0 = arith.constant 0 : i32
    %c0_i32_1 = arith.constant 0 : i32
    return %c0_i32, %c0_i32_0 : i32, i32
  }
  func.func @transform_10(%arg0: i32) -> (i32, i32) {
    %c0_i32 = arith.constant 0 : i32
    %c0_i32_0 = arith.constant 0 : i32
    %c0_i32_1 = arith.constant 0 : i32
    return %c0_i32, %c0_i32_0 : i32, i32
  }
  func.func @transform_11(%arg0: i32) -> (i32, i32) {
    %c0_i32 = arith.constant 0 : i32
    %c0_i32_0 = arith.constant 0 : i32
    %c0_i32_1 = arith.constant 0 : i32
    return %c0_i32, %c0_i32_0 : i32, i32
  }
  func.func @transform_12(%arg0: i32) -> (i32, i32, i32) {
    %c0_i32 = arith.constant 0 : i32
    %c0_i32_0 = arith.constant 0 : i32
    %c0_i32_1 = arith.constant 0 : i32
    return %arg0, %c0_i32, %c0_i32_0 : i32, i32, i32
  }
  func.func @transform_13(%arg0: i32) -> (i32, i32, i32) {
    %c0_i32 = arith.constant 0 : i32
    %c0_i32_0 = arith.constant 0 : i32
    %c0_i32_1 = arith.constant 0 : i32
    return %arg0, %c0_i32, %c0_i32_0 : i32, i32, i32
  }
}

</mosaic_0001>

<llo_original>
// kernel: tpu_custom_call.1
$region0: #{tpu_custom_call.1}
  #allocation0 [shape = 'u32[]', space=smem, size = 0x4, offset = 0x4, fixed_abs, tag = 'smem constant byte address 0x4 - core index']
  #allocation1 [shape = 'u32[144,128]{1,0:T(1,128)}', space=vmem, size = 0x12000, scoped, tag = 'internal scratch']
  %s0 = inlined_call_operand.vmem [shape: f32[2,8,32], index: 0, kind: input, shape index: {}]
  %s1 = inlined_call_operand.vmem [shape: s32[2,8,8], index: 1, kind: input, shape index: {}]
  %s2 = inlined_call_operand.vmem [shape: f32[32,256], index: 2, kind: input, shape index: {}]
  %s3 = inlined_call_operand.vmem [shape: f32[32,256], index: 3, kind: input, shape index: {}]
  %s4 = inlined_call_operand.vmem [shape: f32[32,256], index: 4, kind: input, shape index: {}]
  %s5 = inlined_call_operand.vmem [shape: f32[256,32], index: 5, kind: input, shape index: {}]
  %s6 = inlined_call_operand.vmem [shape: f32[1,32], index: 6, kind: input, shape index: {}]
  %s7 = inlined_call_operand.vmem [shape: f32[1,32], index: 7, kind: input, shape index: {}]
  %s8 = inlined_call_operand.vmem [shape: f32[32,128], index: 8, kind: input, shape index: {}]
  %s9 = inlined_call_operand.vmem [shape: f32[128,32], index: 9, kind: input, shape index: {}]
  %s10 = inlined_call_operand.vmem [shape: f32[1,32], index: 10, kind: input, shape index: {}]
  %s11 = inlined_call_operand.vmem [shape: f32[1,32], index: 11, kind: input, shape index: {}]
  %s12 = inlined_call_operand.hbm [shape: f32[2,8,32], index: 12, kind: output, shape index: {0}]
  %s13 = inlined_call_operand.hbm [shape: f32[2,8,64], index: 13, kind: output, shape index: {1}]
  %14 = xla_tuple %s12, %s13
  %s15 = sld [smem:[#allocation0]]
  $region66: #{tpu_custom_call.1} parent=0
    _
  %s17 = ssub.s32 1, %s15
  %s18 = scalar_select 0, %s17, %s15
  $region1: #{tpu_custom_call.1} parent=0
    #allocation2 [shape = 'u8[8192]{0}', space=vmem, size = 0x2000, scoped, tag = 'output window, operand 0, single buffered']
    #allocation3 [shape = 's32[1]{0}', space=sflag, size = 0x4, scoped, tag = 'scoped memory for tpu_custom_call.1']
    #allocation4 [shape = 'u8[8192]{0}', space=vmem, size = 0x2000, scoped, tag = 'output window, operand 1, single buffered']
    #allocation5 [shape = 's32[1]{0}', space=sflag, size = 0x4, scoped, tag = 'scoped memory for tpu_custom_call.1']
    %19 = vsyncpa [#allocation3], 0
    %20 = vsyncpa [#allocation5], 0
    // Predicated region
    $region2: #{tpu_custom_call.1} parent=1 // pred_check
      _
    $region3: #{tpu_custom_call.1} parent=1 // pred_check_branch
      %22 = sbr.rel (0) target = $region5
    $region4: #{tpu_custom_call.1} parent=1 // pred_region
      _
    $region5: #{tpu_custom_call.1} parent=1 // pred_fallthru
      _
    // Predicated region
    $region6: #{tpu_custom_call.1} parent=1 // pred_check
      _
    $region7: #{tpu_custom_call.1} parent=1 // pred_check_branch
      %24 = sbr.rel (0) target = $region9
    $region8: #{tpu_custom_call.1} parent=1 // pred_region
      _
    $region9: #{tpu_custom_call.1} parent=1 // pred_fallthru
      _
    // Predicated region
    $region10: #{tpu_custom_call.1} parent=1 // pred_check
      _
    $region11: #{tpu_custom_call.1} parent=1 // pred_check_branch
      %26 = sbr.rel (0) target = $region13
    $region12: #{tpu_custom_call.1} parent=1 // pred_region
      _
    $region13: #{tpu_custom_call.1} parent=1 // pred_fallthru
      _
    // Predicated region
    $region14: #{tpu_custom_call.1} parent=1 // pred_check
      _
    $region15: #{tpu_custom_call.1} parent=1 // pred_check_branch
      %28 = sbr.rel (0) target = $region17
    $region16: #{tpu_custom_call.1} parent=1 // pred_region
      _
    $region17: #{tpu_custom_call.1} parent=1 // pred_fallthru
      _
    // Predicated region
    $region18: #{tpu_custom_call.1} parent=1 // pred_check
      _
    $region19: #{tpu_custom_call.1} parent=1 // pred_check_branch
      %30 = sbr.rel (0) target = $region21
    $region20: #{tpu_custom_call.1} parent=1 // pred_region
      _
    $region21: #{tpu_custom_call.1} parent=1 // pred_fallthru
      _
    // Predicated region
    $region22: #{tpu_custom_call.1} parent=1 // pred_check
      _
    $region23: #{tpu_custom_call.1} parent=1 // pred_check_branch
      %32 = sbr.rel (0) target = $region25
    $region24: #{tpu_custom_call.1} parent=1 // pred_region
      _
    $region25: #{tpu_custom_call.1} parent=1 // pred_fallthru
      _
    // Predicated region
    $region26: #{tpu_custom_call.1} parent=1 // pred_check
      _
    $region27: #{tpu_custom_call.1} parent=1 // pred_check_branch
      %34 = sbr.rel (0) target = $region29
    $region28: #{tpu_custom_call.1} parent=1 // pred_region
      _
    $region29: #{tpu_custom_call.1} parent=1 // pred_fallthru
      _
    // Predicated region
    $region30: #{tpu_custom_call.1} parent=1 // pred_check
      _
    $region31: #{tpu_custom_call.1} parent=1 // pred_check_branch
      %36 = sbr.rel (0) target = $region33
    $region32: #{tpu_custom_call.1} parent=1 // pred_region
      _
    $region33: #{tpu_custom_call.1} parent=1 // pred_fallthru
      _
    // Predicated region
    $region34: #{tpu_custom_call.1} parent=1 // pred_check
      _
    $region35: #{tpu_custom_call.1} parent=1 // pred_check_branch
      %38 = sbr.rel (0) target = $region37
    $region36: #{tpu_custom_call.1} parent=1 // pred_region
      _
    $region37: #{tpu_custom_call.1} parent=1 // pred_fallthru
      _
    // Predicated region
    $region38: #{tpu_custom_call.1} parent=1 // pred_check
      _
    $region39: #{tpu_custom_call.1} parent=1 // pred_check_branch
      %40 = sbr.rel (0) target = $region41
    $region40: #{tpu_custom_call.1} parent=1 // pred_region
      _
    $region41: #{tpu_custom_call.1} parent=1 // pred_fallthru
      _
    // Predicated region
    $region42: #{tpu_custom_call.1} parent=1 // pred_check
      _
    $region43: #{tpu_custom_call.1} parent=1 // pred_check_branch
      %42 = sbr.rel (0) target = $region45
    $region44: #{tpu_custom_call.1} parent=1 // pred_region
      _
    $region45: #{tpu_custom_call.1} parent=1 // pred_fallthru
      _
    // Predicated region
    $region46: #{tpu_custom_call.1} parent=1 // pred_check
      _
    $region47: #{tpu_custom_call.1} parent=1 // pred_check_branch
      %44 = sbr.rel (0) target = $region49
    $region48: #{tpu_custom_call.1} parent=1 // pred_region
      _
    $region49: #{tpu_custom_call.1} parent=1 // pred_fallthru
      _
    %v45 = vld [vmem:[%s0] sm:$0xff]
    %v46 = vld [vmem:[%s0 + $0x8] sm:$0xff]
    %v47 = vld [vmem:[%s2] sm:$0xff]
    %v48 = vld [vmem:[%s2 + $0x8] sm:$0xff]
    %v49 = vld [vmem:[%s2 + $0x10] sm:$0xff]
    %v50 = vld [vmem:[%s2 + $0x18] sm:$0xff]
    %v51 = vld [vmem:[%s2 + $0x20] sm:$0xff]
    %v52 = vld [vmem:[%s2 + $0x28] sm:$0xff]
    %v53 = vld [vmem:[%s2 + $0x30] sm:$0xff]
    %v54 = vld [vmem:[%s2 + $0x38] sm:$0xff]
    %vm55 = vcmask 261120
    %v57 = vsel %vm55, %v45, 0
    %v60 = vsel %vm55, %v46, 0
    %62 = vmatprep.subr.mxu0 0.0
    %63 = vmatpush1.msra.mxu0 0.0
    %64 = vmatprep.subr.mxu0 0.0
    %65 = vmatpush1.msra.mxu0 0.0
    %66 = vmatprep.subr.mxu0 0.0
    %67 = vmatpush1.msra.mxu0 0.0
    %68 = vmatprep.subr.mxu0 0.0
    %69 = vmatpush1.msra.mxu0 0.0
    %70 = vmatprep.subr.mxu0 0.0
    %71 = vmatpush1.msra.mxu0 0.0
    %72 = vmatprep.subr.mxu0 0.0
    %73 = vmatpush1.msra.mxu0 0.0
    %74 = vmatprep.subr.mxu0 0.0
    %75 = vmatpush1.msra.mxu0 0.0
    %76 = vmatprep.subr.mxu0 0.0
    %77 = vmatpush1.msra.mxu0 0.0
    %78 = vmatprep.subr.mxu0 0.0
    %79 = vmatpush1.msra.mxu0 0.0
    %80 = vmatprep.subr.mxu0 0.0
    %81 = vmatpush1.msra.mxu0 0.0
    %82 = vmatprep.subr.mxu0 0.0
    %83 = vmatpush1.msra.mxu0 0.0
    %84 = vmatprep.subr.mxu0 0.0
    %85 = vmatpush1.msra.mxu0 0.0
    %86 = vmatprep.subr.mxu0 %v54
    %87 = vmatpush1.msra.mxu0 %v53
    %88 = vmatprep.subr.mxu0 %v52
    %89 = vmatpush1.msra.mxu0 %v51
    %90 = vmatprep.subr.mxu0 %v50
    %91 = vmatpush1.msra.mxu0 %v49
    %92 = vmatprep.subr.mxu0 %v48
    %93 = vmatpush1.msra.mxu0 %v47
    %94 = vmatprep.subr.mxu0 0.0
    %95 = vmatpush2.msra.mxu0 0.0
    %96 = vmatprep.subr.mxu0 0.0
    %97 = vmatpush2.msra.mxu0 0.0
    %98 = vmatprep.subr.mxu0 0.0
    %99 = vmatpush2.msra.mxu0 0.0
    %100 = vmatprep.subr.mxu0 0.0
    %101 = vmatpush2.msra.mxu0 0.0
    %102 = vmatprep.subr.mxu0 0.0
    %103 = vmatpush2.msra.mxu0 0.0
    %104 = vmatprep.subr.mxu0 0.0
    %105 = vmatpush2.msra.mxu0 0.0
    %106 = vmatprep.subr.mxu0 0.0
    %107 = vmatpush2.msra.mxu0 0.0
    %108 = vmatprep.subr.mxu0 0.0
    %109 = vmatpush2.msra.mxu0 0.0
    %110 = vmatprep.subr.mxu0 0.0
    %111 = vmatpush2.msra.mxu0 0.0
    %112 = vmatprep.subr.mxu0 0.0
    %113 = vmatpush2.msra.mxu0 0.0
    %114 = vmatprep.subr.mxu0 0.0
    %115 = vmatpush2.msra.mxu0 0.0
    %116 = vmatprep.subr.mxu0 0.0
    %117 = vmatpush2.msra.mxu0 0.0
    %118 = vmatprep.subr.mxu0 0.0
    %119 = vmatpush2.msra.mxu0 0.0
    %120 = vmatprep.subr.mxu0 0.0
    %121 = vmatpush2.msra.mxu0 0.0
    %122 = vmatprep.subr.mxu0 0.0
    %123 = vmatpush2.msra.mxu0 0.0
    %124 = vmatprep.subr.mxu0 0.0
    %125 = vmatpush2.msra.mxu0 0.0
    %126 = vmatprep.mubr.f32.mxu0 0.0
    %127 = vmatmul.mubr.f32.gmra.mxu0 %v57
    %v128 = vpop.f32.mrf.mxu0
    %v129 = vadd.f32 0.0, %v128
    %v130 = vpop.f32.mrf.mxu0
    %v131 = vadd.f32 0.0, %v130
    %132 = vmatprep.mubr.f32.mxu0 0.0
    %133 = vmatmul.mubr.f32.gmra.mxu0 %v60
    %v134 = vpop.f32.mrf.mxu0
    %v135 = vadd.f32 0.0, %v134
    %v136 = vpop.f32.mrf.mxu0
    %v137 = vadd.f32 0.0, %v136
    %138 = vdwg.mxu0
    %v139 = vld [vmem:[%s3] sm:$0xff]
    %v140 = vld [vmem:[%s3 + $0x8] sm:$0xff]
    %v141 = vld [vmem:[%s3 + $0x10] sm:$0xff]
    %v142 = vld [vmem:[%s3 + $0x18] sm:$0xff]
    %v143 = vld [vmem:[%s3 + $0x20] sm:$0xff]
    %v144 = vld [vmem:[%s3 + $0x28] sm:$0xff]
    %v145 = vld [vmem:[%s3 + $0x30] sm:$0xff]
    %v146 = vld [vmem:[%s3 + $0x38] sm:$0xff]
    %147 = vmatprep.subr.mxu0 0.0
    %148 = vmatpush1.msra.mxu0 0.0
    %149 = vmatprep.subr.mxu0 0.0
    %150 = vmatpush1.msra.mxu0 0.0
    %151 = vmatprep.subr.mxu0 0.0
    %152 = vmatpush1.msra.mxu0 0.0
    %153 = vmatprep.subr.mxu0 0.0
    %154 = vmatpush1.msra.mxu0 0.0
    %155 = vmatprep.subr.mxu0 0.0
    %156 = vmatpush1.msra.mxu0 0.0
    %157 = vmatprep.subr.mxu0 0.0
    %158 = vmatpush1.msra.mxu0 0.0
    %159 = vmatprep.subr.mxu0 0.0
    %160 = vmatpush1.msra.mxu0 0.0
    %161 = vmatprep.subr.mxu0 0.0
    %162 = vmatpush1.msra.mxu0 0.0
    %163 = vmatprep.subr.mxu0 0.0
    %164 = vmatpush1.msra.mxu0 0.0
    %165 = vmatprep.subr.mxu0 0.0
    %166 = vmatpush1.msra.mxu0 0.0
    %167 = vmatprep.subr.mxu0 0.0
    %168 = vmatpush1.msra.mxu0 0.0
    %169 = vmatprep.subr.mxu0 0.0
    %170 = vmatpush1.msra.mxu0 0.0
    %171 = vmatprep.subr.mxu0 %v146
    %172 = vmatpush1.msra.mxu0 %v145
    %173 = vmatprep.subr.mxu0 %v144
    %174 = vmatpush1.msra.mxu0 %v143
    %175 = vmatprep.subr.mxu0 %v142
    %176 = vmatpush1.msra.mxu0 %v141
    %177 = vmatprep.subr.mxu0 %v140
    %178 = vmatpush1.msra.mxu0 %v139
    %179 = vmatprep.subr.mxu0 0.0
    %180 = vmatpush2.msra.mxu0 0.0
    %181 = vmatprep.subr.mxu0 0.0
    %182 = vmatpush2.msra.mxu0 0.0
    %183 = vmatprep.subr.mxu0 0.0
    %184 = vmatpush2.msra.mxu0 0.0
    %185 = vmatprep.subr.mxu0 0.0
    %186 = vmatpush2.msra.mxu0 0.0
    %187 = vmatprep.subr.mxu0 0.0
    %188 = vmatpush2.msra.mxu0 0.0
    %189 = vmatprep.subr.mxu0 0.0
    %190 = vmatpush2.msra.mxu0 0.0
    %191 = vmatprep.subr.mxu0 0.0
    %192 = vmatpush2.msra.mxu0 0.0
    %193 = vmatprep.subr.mxu0 0.0
    %194 = vmatpush2.msra.mxu0 0.0
    %195 = vmatprep.subr.mxu0 0.0
    %196 = vmatpush2.msra.mxu0 0.0
    %197 = vmatprep.subr.mxu0 0.0
    %198 = vmatpush2.msra.mxu0 0.0
    %199 = vmatprep.subr.mxu0 0.0
    %200 = vmatpush2.msra.mxu0 0.0
    %201 = vmatprep.subr.mxu0 0.0
    %202 = vmatpush2.msra.mxu0 0.0
    %203 = vmatprep.subr.mxu0 0.0
    %204 = vmatpush2.msra.mxu0 0.0
    %205 = vmatprep.subr.mxu0 0.0
    %206 = vmatpush2.msra.mxu0 0.0
    %207 = vmatprep.subr.mxu0 0.0
    %208 = vmatpush2.msra.mxu0 0.0
    %209 = vmatprep.subr.mxu0 0.0
    %210 = vmatpush2.msra.mxu0 0.0
    %211 = vmatprep.mubr.f32.mxu0 0.0
    %212 = vmatmul.mubr.f32.gmra.mxu0 %v57
    %v213 = vpop.f32.mrf.mxu0
    %v214 = vadd.f32 0.0, %v213
    %v215 = vpop.f32.mrf.mxu0
    %v216 = vadd.f32 0.0, %v215
    %217 = vmatprep.mubr.f32.mxu0 0.0
    %218 = vmatmul.mubr.f32.gmra.mxu0 %v60
    %v219 = vpop.f32.mrf.mxu0
    %v220 = vadd.f32 0.0, %v219
    %v221 = vpop.f32.mrf.mxu0
    %v222 = vadd.f32 0.0, %v221
    %223 = vdwg.mxu0
    %v224 = vld [vmem:[%s4] sm:$0xff]
    %v225 = vld [vmem:[%s4 + $0x8] sm:$0xff]
    %v226 = vld [vmem:[%s4 + $0x10] sm:$0xff]
    %v227 = vld [vmem:[%s4 + $0x18] sm:$0xff]
    %v228 = vld [vmem:[%s4 + $0x20] sm:$0xff]
    %v229 = vld [vmem:[%s4 + $0x28] sm:$0xff]
    %v230 = vld [vmem:[%s4 + $0x30] sm:$0xff]
    %v231 = vld [vmem:[%s4 + $0x38] sm:$0xff]
    %232 = vmatprep.subr.mxu0 0.0
    %233 = vmatpush1.msra.mxu0 0.0
    %234 = vmatprep.subr.mxu0 0.0
    %235 = vmatpush1.msra.mxu0 0.0
    %236 = vmatprep.subr.mxu0 0.0
    %237 = vmatpush1.msra.mxu0 0.0
    %238 = vmatprep.subr.mxu0 0.0
    %239 = vmatpush1.msra.mxu0 0.0
    %240 = vmatprep.subr.mxu0 0.0
    %241 = vmatpush1.msra.mxu0 0.0
    %242 = vmatprep.subr.mxu0 0.0
    %243 = vmatpush1.msra.mxu0 0.0
    %244 = vmatprep.subr.mxu0 0.0
    %245 = vmatpush1.msra.mxu0 0.0
    %246 = vmatprep.subr.mxu0 0.0
    %247 = vmatpush1.msra.mxu0 0.0
    %248 = vmatprep.subr.mxu0 0.0
    %249 = vmatpush1.msra.mxu0 0.0
    %250 = vmatprep.subr.mxu0 0.0
    %251 = vmatpush1.msra.mxu0 0.0
    %252 = vmatprep.subr.mxu0 0.0
    %253 = vmatpush1.msra.mxu0 0.0
    %254 = vmatprep.subr.mxu0 0.0
    %255 = vmatpush1.msra.mxu0 0.0
    %256 = vmatprep.subr.mxu0 %v231
    %257 = vmatpush1.msra.mxu0 %v230
    %258 = vmatprep.subr.mxu0 %v229
    %259 = vmatpush1.msra.mxu0 %v228
    %260 = vmatprep.subr.mxu0 %v227
    %261 = vmatpush1.msra.mxu0 %v226
    %262 = vmatprep.subr.mxu0 %v225
    %263 = vmatpush1.msra.mxu0 %v224
    %264 = vmatprep.subr.mxu0 0.0
    %265 = vmatpush2.msra.mxu0 0.0
    %266 = vmatprep.subr.mxu0 0.0
    %267 = vmatpush2.msra.mxu0 0.0
    %268 = vmatprep.subr.mxu0 0.0
    %269 = vmatpush2.msra.mxu0 0.0
    %270 = vmatprep.subr.mxu0 0.0
    %271 = vmatpush2.msra.mxu0 0.0
    %272 = vmatprep.subr.mxu0 0.0
    %273 = vmatpush2.msra.mxu0 0.0
    %274 = vmatprep.subr.mxu0 0.0
    %275 = vmatpush2.msra.mxu0 0.0
    %276 = vmatprep.subr.mxu0 0.0
    %277 = vmatpush2.msra.mxu0 0.0
    %278 = vmatprep.subr.mxu0 0.0
    %279 = vmatpush2.msra.mxu0 0.0
    %280 = vmatprep.subr.mxu0 0.0
    %281 = vmatpush2.msra.mxu0 0.0
    %282 = vmatprep.subr.mxu0 0.0
    %283 = vmatpush2.msra.mxu0 0.0
    %284 = vmatprep.subr.mxu0 0.0
    %285 = vmatpush2.msra.mxu0 0.0
    %286 = vmatprep.subr.mxu0 0.0
    %287 = vmatpush2.msra.mxu0 0.0
    %288 = vmatprep.subr.mxu0 0.0
    %289 = vmatpush2.msra.mxu0 0.0
    %290 = vmatprep.subr.mxu0 0.0
    %291 = vmatpush2.msra.mxu0 0.0
    %292 = vmatprep.subr.mxu0 0.0
    %293 = vmatpush2.msra.mxu0 0.0
    %294 = vmatprep.subr.mxu0 0.0
    %295 = vmatpush2.msra.mxu0 0.0
    %296 = vmatprep.mubr.f32.mxu0 0.0
    %297 = vmatmul.mubr.f32.gmra.mxu0 %v57
    %v298 = vpop.f32.mrf.mxu0
    %v299 = vadd.f32 0.0, %v298
    %v300 = vpop.f32.mrf.mxu0
    %v301 = vadd.f32 0.0, %v300
    %302 = vmatprep.mubr.f32.mxu0 0.0
    %303 = vmatmul.mubr.f32.gmra.mxu0 %v60
    %v304 = vpop.f32.mrf.mxu0
    %v305 = vadd.f32 0.0, %v304
    %v306 = vpop.f32.mrf.mxu0
    %v307 = vadd.f32 0.0, %v306
    %308 = vdwg.mxu0
    %v309 = vmul.f32 %v129, 0.17677669
    %v310 = vmul.f32 %v131, 0.17677669
    %v311 = vmul.f32 %v135, 0.17677669
    %v312 = vmul.f32 %v137, 0.17677669
    %v313 = vld [vmem:[%s1] sm:$0xff]
    %v314 = vld [vmem:[%s1 + $0x8] sm:$0xff]
    %vm315 = vcmp.ne.s32.totalorder %v313, 0
    %vm316 = vcmp.ne.s32.totalorder %v314, 0
    %v318 = vsel %vm55, %v309, 0
    %v321 = vsel %vm55, %v214, 0
    %323 = vmatprep.subr.mxu0 0.0
    %324 = vmatpush1.xpose.msra.mxu0 0.0
    %325 = vmatprep.subr.mxu0 0.0
    %326 = vmatpush1.xpose.msra.mxu0 0.0
    %327 = vmatprep.subr.mxu0 0.0
    %328 = vmatpush1.xpose.msra.mxu0 0.0
    %329 = vmatprep.subr.mxu0 0.0
    %330 = vmatpush1.xpose.msra.mxu0 0.0
    %331 = vmatprep.subr.mxu0 0.0
    %332 = vmatpush1.xpose.msra.mxu0 0.0
    %333 = vmatprep.subr.mxu0 0.0
    %334 = vmatpush1.xpose.msra.mxu0 0.0
    %335 = vmatprep.subr.mxu0 0.0
    %336 = vmatpush1.xpose.msra.mxu0 0.0
    %337 = vmatprep.subr.mxu0 0.0
    %338 = vmatpush1.xpose.msra.mxu0 0.0
    %339 = vmatprep.subr.mxu0 0.0
    %340 = vmatpush1.xpose.msra.mxu0 0.0
    %341 = vmatprep.subr.mxu0 0.0
    %342 = vmatpush1.xpose.msra.mxu0 0.0
    %343 = vmatprep.subr.mxu0 0.0
    %344 = vmatpush1.xpose.msra.mxu0 0.0
    %345 = vmatprep.subr.mxu0 0.0
    %346 = vmatpush1.xpose.msra.mxu0 0.0
    %347 = vmatprep.subr.mxu0 0.0
    %348 = vmatpush1.xpose.msra.mxu0 0.0
    %349 = vmatprep.subr.mxu0 0.0
    %350 = vmatpush1.xpose.msra.mxu0 0.0
    %351 = vmatprep.subr.mxu0 0.0
    %352 = vmatpush1.xpose.msra.mxu0 0.0
    %353 = vmatprep.subr.mxu0 0.0
    %354 = vmatpush1.xpose.msra.mxu0 %v321
    %355 = vmatprep.subr.mxu0 0.0
    %356 = vmatpush2.xpose.msra.mxu0 0.0
    %357 = vmatprep.subr.mxu0 0.0
    %358 = vmatpush2.xpose.msra.mxu0 0.0
    %359 = vmatprep.subr.mxu0 0.0
    %360 = vmatpush2.xpose.msra.mxu0 0.0
    %361 = vmatprep.subr.mxu0 0.0
    %362 = vmatpush2.xpose.msra.mxu0 0.0
    %363 = vmatprep.subr.mxu0 0.0
    %364 = vmatpush2.xpose.msra.mxu0 0.0
    %365 = vmatprep.subr.mxu0 0.0
    %366 = vmatpush2.xpose.msra.mxu0 0.0
    %367 = vmatprep.subr.mxu0 0.0
    %368 = vmatpush2.xpose.msra.mxu0 0.0
    %369 = vmatprep.subr.mxu0 0.0
    %370 = vmatpush2.xpose.msra.mxu0 0.0
    %371 = vmatprep.subr.mxu0 0.0
    %372 = vmatpush2.xpose.msra.mxu0 0.0
    %373 = vmatprep.subr.mxu0 0.0
    %374 = vmatpush2.xpose.msra.mxu0 0.0
    %375 = vmatprep.subr.mxu0 0.0
    %376 = vmatpush2.xpose.msra.mxu0 0.0
    %377 = vmatprep.subr.mxu0 0.0
    %378 = vmatpush2.xpose.msra.mxu0 0.0
    %379 = vmatprep.subr.mxu0 0.0
    %380 = vmatpush2.xpose.msra.mxu0 0.0
    %381 = vmatprep.subr.mxu0 0.0
    %382 = vmatpush2.xpose.msra.mxu0 0.0
    %383 = vmatprep.subr.mxu0 0.0
    %384 = vmatpush2.xpose.msra.mxu0 0.0
    %385 = vmatprep.subr.mxu0 0.0
    %386 = vmatpush2.xpose.msra.mxu0 0.0
    %387 = vmatprep.mubr.f32.mxu0 0.0
    %388 = vmatmul.mubr.f32.gmra.mxu0 %v318
    %v389 = vpop.f32.mrf.mxu0
    %v390 = vadd.f32 0.0, %v389
    %v391 = vpop.f32.mrf.mxu0
    %392 = vdwg.mxu0
    %v394 = vsel %vm55, %v311, 0
    %v397 = vsel %vm55, %v220, 0
    %399 = vmatprep.subr.mxu0 0.0
    %400 = vmatpush1.xpose.msra.mxu0 0.0
    %401 = vmatprep.subr.mxu0 0.0
    %402 = vmatpush1.xpose.msra.mxu0 0.0
    %403 = vmatprep.subr.mxu0 0.0
    %404 = vmatpush1.xpose.msra.mxu0 0.0
    %405 = vmatprep.subr.mxu0 0.0
    %406 = vmatpush1.xpose.msra.mxu0 0.0
    %407 = vmatprep.subr.mxu0 0.0
    %408 = vmatpush1.xpose.msra.mxu0 0.0
    %409 = vmatprep.subr.mxu0 0.0
    %410 = vmatpush1.xpose.msra.mxu0 0.0
    %411 = vmatprep.subr.mxu0 0.0
    %412 = vmatpush1.xpose.msra.mxu0 0.0
    %413 = vmatprep.subr.mxu0 0.0
    %414 = vmatpush1.xpose.msra.mxu0 0.0
    %415 = vmatprep.subr.mxu0 0.0
    %416 = vmatpush1.xpose.msra.mxu0 0.0
    %417 = vmatprep.subr.mxu0 0.0
    %418 = vmatpush1.xpose.msra.mxu0 0.0
    %419 = vmatprep.subr.mxu0 0.0
    %420 = vmatpush1.xpose.msra.mxu0 0.0
    %421 = vmatprep.subr.mxu0 0.0
    %422 = vmatpush1.xpose.msra.mxu0 0.0
    %423 = vmatprep.subr.mxu0 0.0
    %424 = vmatpush1.xpose.msra.mxu0 0.0
    %425 = vmatprep.subr.mxu0 0.0
    %426 = vmatpush1.xpose.msra.mxu0 0.0
    %427 = vmatprep.subr.mxu0 0.0
    %428 = vmatpush1.xpose.msra.mxu0 0.0
    %429 = vmatprep.subr.mxu0 0.0
    %430 = vmatpush1.xpose.msra.mxu0 %v397
    %431 = vmatprep.subr.mxu0 0.0
    %432 = vmatpush2.xpose.msra.mxu0 0.0
    %433 = vmatprep.subr.mxu0 0.0
    %434 = vmatpush2.xpose.msra.mxu0 0.0
    %435 = vmatprep.subr.mxu0 0.0
    %436 = vmatpush2.xpose.msra.mxu0 0.0
    %437 = vmatprep.subr.mxu0 0.0
    %438 = vmatpush2.xpose.msra.mxu0 0.0
    %439 = vmatprep.subr.mxu0 0.0
    %440 = vmatpush2.xpose.msra.mxu0 0.0
    %441 = vmatprep.subr.mxu0 0.0
    %442 = vmatpush2.xpose.msra.mxu0 0.0
    %443 = vmatprep.subr.mxu0 0.0
    %444 = vmatpush2.xpose.msra.mxu0 0.0
    %445 = vmatprep.subr.mxu0 0.0
    %446 = vmatpush2.xpose.msra.mxu0 0.0
    %447 = vmatprep.subr.mxu0 0.0
    %448 = vmatpush2.xpose.msra.mxu0 0.0
    %449 = vmatprep.subr.mxu0 0.0
    %450 = vmatpush2.xpose.msra.mxu0 0.0
    %451 = vmatprep.subr.mxu0 0.0
    %452 = vmatpush2.xpose.msra.mxu0 0.0
    %453 = vmatprep.subr.mxu0 0.0
    %454 = vmatpush2.xpose.msra.mxu0 0.0
    %455 = vmatprep.subr.mxu0 0.0
    %456 = vmatpush2.xpose.msra.mxu0 0.0
    %457 = vmatprep.subr.mxu0 0.0
    %458 = vmatpush2.xpose.msra.mxu0 0.0
    %459 = vmatprep.subr.mxu0 0.0
    %460 = vmatpush2.xpose.msra.mxu0 0.0
    %461 = vmatprep.subr.mxu0 0.0
    %462 = vmatpush2.xpose.msra.mxu0 0.0
    %463 = vmatprep.mubr.f32.mxu0 0.0
    %464 = vmatmul.mubr.f32.gmra.mxu0 %v394
    %v465 = vpop.f32.mrf.mxu0
    %v466 = vadd.f32 0.0, %v465
    %v467 = vpop.f32.mrf.mxu0
    %468 = vdwg.mxu0
    %v469 = vsel %vm315, -1e+09, %v390
    %v470 = vsel %vm316, -1e+09, %v466
    %vm471 = vcmask 64512
    %v472 = vsel %vm471, %v469, -inf
    %473 = vmax.xlane.f32.xlu0 %v472
    %v474 = vpop.xlane.xlu0 %473
    %v475 = vsel %vm471, %v470, -inf
    %476 = vmax.xlane.f32.xlu0 %v475
    %v477 = vpop.xlane.xlu0 %476
    %v478 = vsub.f32 %v469, %v474
    %v479 = vsub.f32 %v470, %v477
    %v480 = vmul.f32 %v478, 1.442695
    %v481 = vpow.pop %v480
    %v482 = vmul.f32 %v479, 1.442695
    %v483 = vpow.pop %v482
    %v484 = vsel %vm471, %v481, 0.0
    %485 = vadd.xlane.f32.xlu0 %v484
    %v486 = vpop.xlane.xlu0 %485
    %v487 = vsel %vm471, %v483, 0.0
    %488 = vadd.xlane.f32.xlu0 %v487
    %v489 = vpop.xlane.xlu0 %488
    %v490 = vrcp.pop %v486
    %v491 = vrcp.pop %v489
    %v492 = vmul.f32 %v481, %v490
    %v493 = vmul.f32 %v483, %v491
    %v495 = vsel %vm471, %v492, 0
    %497 = vmatprep.subr.mxu0 0.0
    %498 = vmatpush1.msra.mxu0 0.0
    %499 = vmatprep.subr.mxu0 0.0
    %500 = vmatpush1.msra.mxu0 0.0
    %501 = vmatprep.subr.mxu0 0.0
    %502 = vmatpush1.msra.mxu0 0.0
    %503 = vmatprep.subr.mxu0 0.0
    %504 = vmatpush1.msra.mxu0 0.0
    %505 = vmatprep.subr.mxu0 0.0
    %506 = vmatpush1.msra.mxu0 0.0
    %507 = vmatprep.subr.mxu0 0.0
    %508 = vmatpush1.msra.mxu0 0.0
    %509 = vmatprep.subr.mxu0 0.0
    %510 = vmatpush1.msra.mxu0 0.0
    %511 = vmatprep.subr.mxu0 0.0
    %512 = vmatpush1.msra.mxu0 0.0
    %513 = vmatprep.subr.mxu0 0.0
    %514 = vmatpush1.msra.mxu0 0.0
    %515 = vmatprep.subr.mxu0 0.0
    %516 = vmatpush1.msra.mxu0 0.0
    %517 = vmatprep.subr.mxu0 0.0
    %518 = vmatpush1.msra.mxu0 0.0
    %519 = vmatprep.subr.mxu0 0.0
    %520 = vmatpush1.msra.mxu0 0.0
    %521 = vmatprep.subr.mxu0 0.0
    %522 = vmatpush1.msra.mxu0 0.0
    %523 = vmatprep.subr.mxu0 0.0
    %524 = vmatpush1.msra.mxu0 0.0
    %525 = vmatprep.subr.mxu0 0.0
    %526 = vmatpush1.msra.mxu0 0.0
    %527 = vmatprep.subr.mxu0 0.0
    %528 = vmatpush1.msra.mxu0 %v299
    %529 = vmatprep.subr.mxu0 0.0
    %530 = vmatpush2.msra.mxu0 0.0
    %531 = vmatprep.subr.mxu0 0.0
    %532 = vmatpush2.msra.mxu0 0.0
    %533 = vmatprep.subr.mxu0 0.0
    %534 = vmatpush2.msra.mxu0 0.0
    %535 = vmatprep.subr.mxu0 0.0
    %536 = vmatpush2.msra.mxu0 0.0
    %537 = vmatprep.subr.mxu0 0.0
    %538 = vmatpush2.msra.mxu0 0.0
    %539 = vmatprep.subr.mxu0 0.0
    %540 = vmatpush2.msra.mxu0 0.0
    %541 = vmatprep.subr.mxu0 0.0
    %542 = vmatpush2.msra.mxu0 0.0
    %543 = vmatprep.subr.mxu0 0.0
    %544 = vmatpush2.msra.mxu0 0.0
    %545 = vmatprep.subr.mxu0 0.0
    %546 = vmatpush2.msra.mxu0 0.0
    %547 = vmatprep.subr.mxu0 0.0
    %548 = vmatpush2.msra.mxu0 0.0
    %549 = vmatprep.subr.mxu0 0.0
    %550 = vmatpush2.msra.mxu0 0.0
    %551 = vmatprep.subr.mxu0 0.0
    %552 = vmatpush2.msra.mxu0 0.0
    %553 = vmatprep.subr.mxu0 0.0
    %554 = vmatpush2.msra.mxu0 0.0
    %555 = vmatprep.subr.mxu0 0.0
    %556 = vmatpush2.msra.mxu0 0.0
    %557 = vmatprep.subr.mxu0 0.0
    %558 = vmatpush2.msra.mxu0 0.0
    %559 = vmatprep.subr.mxu0 0.0
    %560 = vmatpush2.msra.mxu0 0.0
    %561 = vmatprep.mubr.f32.mxu0 0.0
    %562 = vmatmul.mubr.f32.gmra.mxu0 %v495
    %v563 = vpop.f32.mrf.mxu0
    %v564 = vadd.f32 0.0, %v563
    %v565 = vpop.f32.mrf.mxu0
    %566 = vdwg.mxu0
    %v568 = vsel %vm471, %v493, 0
    %570 = vmatprep.subr.mxu0 0.0
    %571 = vmatpush1.msra.mxu0 0.0
    %572 = vmatprep.subr.mxu0 0.0
    %573 = vmatpush1.msra.mxu0 0.0
    %574 = vmatprep.subr.mxu0 0.0
    %575 = vmatpush1.msra.mxu0 0.0
    %576 = vmatprep.subr.mxu0 0.0
    %577 = vmatpush1.msra.mxu0 0.0
    %578 = vmatprep.subr.mxu0 0.0
    %579 = vmatpush1.msra.mxu0 0.0
    %580 = vmatprep.subr.mxu0 0.0
    %581 = vmatpush1.msra.mxu0 0.0
    %582 = vmatprep.subr.mxu0 0.0
    %583 = vmatpush1.msra.mxu0 0.0
    %584 = vmatprep.subr.mxu0 0.0
    %585 = vmatpush1.msra.mxu0 0.0
    %586 = vmatprep.subr.mxu0 0.0
    %587 = vmatpush1.msra.mxu0 0.0
    %588 = vmatprep.subr.mxu0 0.0
    %589 = vmatpush1.msra.mxu0 0.0
    %590 = vmatprep.subr.mxu0 0.0
    %591 = vmatpush1.msra.mxu0 0.0
    %592 = vmatprep.subr.mxu0 0.0
    %593 = vmatpush1.msra.mxu0 0.0
    %594 = vmatprep.subr.mxu0 0.0
    %595 = vmatpush1.msra.mxu0 0.0
    %596 = vmatprep.subr.mxu0 0.0
    %597 = vmatpush1.msra.mxu0 0.0
    %598 = vmatprep.subr.mxu0 0.0
    %599 = vmatpush1.msra.mxu0 0.0
    %600 = vmatprep.subr.mxu0 0.0
    %601 = vmatpush1.msra.mxu0 %v305
    %602 = vmatprep.subr.mxu0 0.0
    %603 = vmatpush2.msra.mxu0 0.0
    %604 = vmatprep.subr.mxu0 0.0
    %605 = vmatpush2.msra.mxu0 0.0
    %606 = vmatprep.subr.mxu0 0.0
    %607 = vmatpush2.msra.mxu0 0.0
    %608 = vmatprep.subr.mxu0 0.0
    %609 = vmatpush2.msra.mxu0 0.0
    %610 = vmatprep.subr.mxu0 0.0
    %611 = vmatpush2.msra.mxu0 0.0
    %612 = vmatprep.subr.mxu0 0.0
    %613 = vmatpush2.msra.mxu0 0.0
    %614 = vmatprep.subr.mxu0 0.0
    %615 = vmatpush2.msra.mxu0 0.0
    %616 = vmatprep.subr.mxu0 0.0
    %617 = vmatpush2.msra.mxu0 0.0
    %618 = vmatprep.subr.mxu0 0.0
    %619 = vmatpush2.msra.mxu0 0.0
    %620 = vmatprep.subr.mxu0 0.0
    %621 = vmatpush2.msra.mxu0 0.0
    %622 = vmatprep.subr.mxu0 0.0
    %623 = vmatpush2.msra.mxu0 0.0
    %624 = vmatprep.subr.mxu0 0.0
    %625 = vmatpush2.msra.mxu0 0.0
    %626 = vmatprep.subr.mxu0 0.0
    %627 = vmatpush2.msra.mxu0 0.0
    %628 = vmatprep.subr.mxu0 0.0
    %629 = vmatpush2.msra.mxu0 0.0
    %630 = vmatprep.subr.mxu0 0.0
    %631 = vmatpush2.msra.mxu0 0.0
    %632 = vmatprep.subr.mxu0 0.0
    %633 = vmatpush2.msra.mxu0 0.0
    %634 = vmatprep.mubr.f32.mxu0 0.0
    %635 = vmatmul.mubr.f32.gmra.mxu0 %v568
    %v636 = vpop.f32.mrf.mxu0
    %v637 = vadd.f32 0.0, %v636
    %v638 = vpop.f32.mrf.mxu0
    %639 = vdwg.mxu0
    %640 = vrot.lane.b32.xlu0 %v309, 96
    %v641 = vpop.permute.xlu0 %640
    %642 = vrot.lane.b32.xlu0 %v214, 96
    %v643 = vpop.permute.xlu0 %642
    %v644 = vsel %vm55, %v641, 0
    %v646 = vsel %vm55, %v643, 0
    %648 = vmatprep.subr.mxu0 0.0
    %649 = vmatpush1.xpose.msra.mxu0 0.0
    %650 = vmatprep.subr.mxu0 0.0
    %651 = vmatpush1.xpose.msra.mxu0 0.0
    %652 = vmatprep.subr.mxu0 0.0
    %653 = vmatpush1.xpose.msra.mxu0 0.0
    %654 = vmatprep.subr.mxu0 0.0
    %655 = vmatpush1.xpose.msra.mxu0 0.0
    %656 = vmatprep.subr.mxu0 0.0
    %657 = vmatpush1.xpose.msra.mxu0 0.0
    %658 = vmatprep.subr.mxu0 0.0
    %659 = vmatpush1.xpose.msra.mxu0 0.0
    %660 = vmatprep.subr.mxu0 0.0
    %661 = vmatpush1.xpose.msra.mxu0 0.0
    %662 = vmatprep.subr.mxu0 0.0
    %663 = vmatpush1.xpose.msra.mxu0 0.0
    %664 = vmatprep.subr.mxu0 0.0
    %665 = vmatpush1.xpose.msra.mxu0 0.0
    %666 = vmatprep.subr.mxu0 0.0
    %667 = vmatpush1.xpose.msra.mxu0 0.0
    %668 = vmatprep.subr.mxu0 0.0
    %669 = vmatpush1.xpose.msra.mxu0 0.0
    %670 = vmatprep.subr.mxu0 0.0
    %671 = vmatpush1.xpose.msra.mxu0 0.0
    %672 = vmatprep.subr.mxu0 0.0
    %673 = vmatpush1.xpose.msra.mxu0 0.0
    %674 = vmatprep.subr.mxu0 0.0
    %675 = vmatpush1.xpose.msra.mxu0 0.0
    %676 = vmatprep.subr.mxu0 0.0
    %677 = vmatpush1.xpose.msra.mxu0 0.0
    %678 = vmatprep.subr.mxu0 0.0
    %679 = vmatpush1.xpose.msra.mxu0 %v646
    %680 = vmatprep.subr.mxu0 0.0
    %681 = vmatpush2.xpose.msra.mxu0 0.0
    %682 = vmatprep.subr.mxu0 0.0
    %683 = vmatpush2.xpose.msra.mxu0 0.0
    %684 = vmatprep.subr.mxu0 0.0
    %685 = vmatpush2.xpose.msra.mxu0 0.0
    %686 = vmatprep.subr.mxu0 0.0
    %687 = vmatpush2.xpose.msra.mxu0 0.0
    %688 = vmatprep.subr.mxu0 0.0
    %689 = vmatpush2.xpose.msra.mxu0 0.0
    %690 = vmatprep.subr.mxu0 0.0
    %691 = vmatpush2.xpose.msra.mxu0 0.0
    %692 = vmatprep.subr.mxu0 0.0
    %693 = vmatpush2.xpose.msra.mxu0 0.0
    %694 = vmatprep.subr.mxu0 0.0
    %695 = vmatpush2.xpose.msra.mxu0 0.0
    %696 = vmatprep.subr.mxu0 0.0
    %697 = vmatpush2.xpose.msra.mxu0 0.0
    %698 = vmatprep.subr.mxu0 0.0
    %699 = vmatpush2.xpose.msra.mxu0 0.0
    %700 = vmatprep.subr.mxu0 0.0
    %701 = vmatpush2.xpose.msra.mxu0 0.0
    %702 = vmatprep.subr.mxu0 0.0
    %703 = vmatpush2.xpose.msra.mxu0 0.0
    %704 = vmatprep.subr.mxu0 0.0
    %705 = vmatpush2.xpose.msra.mxu0 0.0
    %706 = vmatprep.subr.mxu0 0.0
    %707 = vmatpush2.xpose.msra.mxu0 0.0
    %708 = vmatprep.subr.mxu0 0.0
    %709 = vmatpush2.xpose.msra.mxu0 0.0
    %710 = vmatprep.subr.mxu0 0.0
    %711 = vmatpush2.xpose.msra.mxu0 0.0
    %712 = vmatprep.mubr.f32.mxu0 0.0
    %713 = vmatmul.mubr.f32.gmra.mxu0 %v644
    %v714 = vpop.f32.mrf.mxu0
    %v715 = vadd.f32 0.0, %v714
    %v716 = vpop.f32.mrf.mxu0
    %717 = vdwg.mxu0
    %718 = vrot.lane.b32.xlu0 %v311, 96
    %v719 = vpop.permute.xlu0 %718
    %720 = vrot.lane.b32.xlu0 %v220, 96
    %v721 = vpop.permute.xlu0 %720
    %v722 = vsel %vm55, %v719, 0
    %v724 = vsel %vm55, %v721, 0
    %726 = vmatprep.subr.mxu0 0.0
    %727 = vmatpush1.xpose.msra.mxu0 0.0
    %728 = vmatprep.subr.mxu0 0.0
    %729 = vmatpush1.xpose.msra.mxu0 0.0
    %730 = vmatprep.subr.mxu0 0.0
    %731 = vmatpush1.xpose.msra.mxu0 0.0
    %732 = vmatprep.subr.mxu0 0.0
    %733 = vmatpush1.xpose.msra.mxu0 0.0
    %734 = vmatprep.subr.mxu0 0.0
    %735 = vmatpush1.xpose.msra.mxu0 0.0
    %736 = vmatprep.subr.mxu0 0.0
    %737 = vmatpush1.xpose.msra.mxu0 0.0
    %738 = vmatprep.subr.mxu0 0.0
    %739 = vmatpush1.xpose.msra.mxu0 0.0
    %740 = vmatprep.subr.mxu0 0.0
    %741 = vmatpush1.xpose.msra.mxu0 0.0
    %742 = vmatprep.subr.mxu0 0.0
    %743 = vmatpush1.xpose.msra.mxu0 0.0
    %744 = vmatprep.subr.mxu0 0.0
    %745 = vmatpush1.xpose.msra.mxu0 0.0
    %746 = vmatprep.subr.mxu0 0.0
    %747 = vmatpush1.xpose.msra.mxu0 0.0
    %748 = vmatprep.subr.mxu0 0.0
    %749 = vmatpush1.xpose.msra.mxu0 0.0
    %750 = vmatprep.subr.mxu0 0.0
    %751 = vmatpush1.xpose.msra.mxu0 0.0
    %752 = vmatprep.subr.mxu0 0.0
    %753 = vmatpush1.xpose.msra.mxu0 0.0
    %754 = vmatprep.subr.mxu0 0.0
    %755 = vmatpush1.xpose.msra.mxu0 0.0
    %756 = vmatprep.subr.mxu0 0.0
    %757 = vmatpush1.xpose.msra.mxu0 %v724
    %758 = vmatprep.subr.mxu0 0.0
    %759 = vmatpush2.xpose.msra.mxu0 0.0
    %760 = vmatprep.subr.mxu0 0.0
    %761 = vmatpush2.xpose.msra.mxu0 0.0
    %762 = vmatprep.subr.mxu0 0.0
    %763 = vmatpush2.xpose.msra.mxu0 0.0
    %764 = vmatprep.subr.mxu0 0.0
    %765 = vmatpush2.xpose.msra.mxu0 0.0
    %766 = vmatprep.subr.mxu0 0.0
    %767 = vmatpush2.xpose.msra.mxu0 0.0
    %768 = vmatprep.subr.mxu0 0.0
    %769 = vmatpush2.xpose.msra.mxu0 0.0
    %770 = vmatprep.subr.mxu0 0.0
    %771 = vmatpush2.xpose.msra.mxu0 0.0
    %772 = vmatprep.subr.mxu0 0.0
    %773 = vmatpush2.xpose.msra.mxu0 0.0
    %774 = vmatprep.subr.mxu0 0.0
    %775 = vmatpush2.xpose.msra.mxu0 0.0
    %776 = vmatprep.subr.mxu0 0.0
    %777 = vmatpush2.xpose.msra.mxu0 0.0
    %778 = vmatprep.subr.mxu0 0.0
    %779 = vmatpush2.xpose.msra.mxu0 0.0
    %780 = vmatprep.subr.mxu0 0.0
    %781 = vmatpush2.xpose.msra.mxu0 0.0
    %782 = vmatprep.subr.mxu0 0.0
    %783 = vmatpush2.xpose.msra.mxu0 0.0
    %784 = vmatprep.subr.mxu0 0.0
    %785 = vmatpush2.xpose.msra.mxu0 0.0
    %786 = vmatprep.subr.mxu0 0.0
    %787 = vmatpush2.xpose.msra.mxu0 0.0
    %788 = vmatprep.subr.mxu0 0.0
    %789 = vmatpush2.xpose.msra.mxu0 0.0
    %790 = vmatprep.mubr.f32.mxu0 0.0
    %791 = vmatmul.mubr.f32.gmra.mxu0 %v722
    %v792 = vpop.f32.mrf.mxu0
    %v793 = vadd.f32 0.0, %v792
    %v794 = vpop.f32.mrf.mxu0
    %795 = vdwg.mxu0
    %v796 = vsel %vm315, -1e+09, %v715
    %v797 = vsel %vm316, -1e+09, %v793
    %v798 = vsel %vm471, %v796, -inf
    %799 = vmax.xlane.f32.xlu0 %v798
    %v800 = vpop.xlane.xlu0 %799
    %v801 = vsel %vm471, %v797, -inf
    %802 = vmax.xlane.f32.xlu0 %v801
    %v803 = vpop.xlane.xlu0 %802
    %v804 = vsub.f32 %v796, %v800
    %v805 = vsub.f32 %v797, %v803
    %v806 = vmul.f32 %v804, 1.442695
    %v807 = vpow.pop %v806
    %v808 = vmul.f32 %v805, 1.442695
    %v809 = vpow.pop %v808
    %v810 = vsel %vm471, %v807, 0.0
    %811 = vadd.xlane.f32.xlu0 %v810
    %v812 = vpop.xlane.xlu0 %811
    %v813 = vsel %vm471, %v809, 0.0
    %814 = vadd.xlane.f32.xlu0 %v813
    %v815 = vpop.xlane.xlu0 %814
    %v816 = vrcp.pop %v812
    %v817 = vrcp.pop %v815
    %v818 = vmul.f32 %v807, %v816
    %v819 = vmul.f32 %v809, %v817
    %821 = vrot.lane.b32.xlu0 %v299, 96
    %v822 = vpop.permute.xlu0 %821
    %v825 = vsel %vm471, %v818, 0
    %827 = vmatprep.subr.mxu0 0.0
    %828 = vmatpush1.msra.mxu0 0.0
    %829 = vmatprep.subr.mxu0 0.0
    %830 = vmatpush1.msra.mxu0 0.0
    %831 = vmatprep.subr.mxu0 0.0
    %832 = vmatpush1.msra.mxu0 0.0
    %833 = vmatprep.subr.mxu0 0.0
    %834 = vmatpush1.msra.mxu0 0.0
    %835 = vmatprep.subr.mxu0 0.0
    %836 = vmatpush1.msra.mxu0 0.0
    %837 = vmatprep.subr.mxu0 0.0
    %838 = vmatpush1.msra.mxu0 0.0
    %839 = vmatprep.subr.mxu0 0.0
    %840 = vmatpush1.msra.mxu0 0.0
    %841 = vmatprep.subr.mxu0 0.0
    %842 = vmatpush1.msra.mxu0 0.0
    %843 = vmatprep.subr.mxu0 0.0
    %844 = vmatpush1.msra.mxu0 0.0
    %845 = vmatprep.subr.mxu0 0.0
    %846 = vmatpush1.msra.mxu0 0.0
    %847 = vmatprep.subr.mxu0 0.0
    %848 = vmatpush1.msra.mxu0 0.0
    %849 = vmatprep.subr.mxu0 0.0
    %850 = vmatpush1.msra.mxu0 0.0
    %851 = vmatprep.subr.mxu0 0.0
    %852 = vmatpush1.msra.mxu0 0.0
    %853 = vmatprep.subr.mxu0 0.0
    %854 = vmatpush1.msra.mxu0 0.0
    %855 = vmatprep.subr.mxu0 0.0
    %856 = vmatpush1.msra.mxu0 0.0
    %857 = vmatprep.subr.mxu0 0.0
    %858 = vmatpush1.msra.mxu0 %v822
    %859 = vmatprep.subr.mxu0 0.0
    %860 = vmatpush2.msra.mxu0 0.0
    %861 = vmatprep.subr.mxu0 0.0
    %862 = vmatpush2.msra.mxu0 0.0
    %863 = vmatprep.subr.mxu0 0.0
    %864 = vmatpush2.msra.mxu0 0.0
    %865 = vmatprep.subr.mxu0 0.0
    %866 = vmatpush2.msra.mxu0 0.0
    %867 = vmatprep.subr.mxu0 0.0
    %868 = vmatpush2.msra.mxu0 0.0
    %869 = vmatprep.subr.mxu0 0.0
    %870 = vmatpush2.msra.mxu0 0.0
    %871 = vmatprep.subr.mxu0 0.0
    %872 = vmatpush2.msra.mxu0 0.0
    %873 = vmatprep.subr.mxu0 0.0
    %874 = vmatpush2.msra.mxu0 0.0
    %875 = vmatprep.subr.mxu0 0.0
    %876 = vmatpush2.msra.mxu0 0.0
    %877 = vmatprep.subr.mxu0 0.0
    %878 = vmatpush2.msra.mxu0 0.0
    %879 = vmatprep.subr.mxu0 0.0
    %880 = vmatpush2.msra.mxu0 0.0
    %881 = vmatprep.subr.mxu0 0.0
    %882 = vmatpush2.msra.mxu0 0.0
    %883 = vmatprep.subr.mxu0 0.0
    %884 = vmatpush2.msra.mxu0 0.0
    %885 = vmatprep.subr.mxu0 0.0
    %886 = vmatpush2.msra.mxu0 0.0
    %887 = vmatprep.subr.mxu0 0.0
    %888 = vmatpush2.msra.mxu0 0.0
    %889 = vmatprep.subr.mxu0 0.0
    %890 = vmatpush2.msra.mxu0 0.0
    %891 = vmatprep.mubr.f32.mxu0 0.0
    %892 = vmatmul.mubr.f32.gmra.mxu0 %v825
    %v893 = vpop.f32.mrf.mxu0
    %v894 = vadd.f32 0.0, %v893
    %v895 = vpop.f32.mrf.mxu0
    %896 = vdwg.mxu0
    %898 = vrot.lane.b32.xlu0 %v305, 96
    %v899 = vpop.permute.xlu0 %898
    %v902 = vsel %vm471, %v819, 0
    %904 = vmatprep.subr.mxu0 0.0
    %905 = vmatpush1.msra.mxu0 0.0
    %906 = vmatprep.subr.mxu0 0.0
    %907 = vmatpush1.msra.mxu0 0.0
    %908 = vmatprep.subr.mxu0 0.0
    %909 = vmatpush1.msra.mxu0 0.0
    %910 = vmatprep.subr.mxu0 0.0
    %911 = vmatpush1.msra.mxu0 0.0
    %912 = vmatprep.subr.mxu0 0.0
    %913 = vmatpush1.msra.mxu0 0.0
    %914 = vmatprep.subr.mxu0 0.0
    %915 = vmatpush1.msra.mxu0 0.0
    %916 = vmatprep.subr.mxu0 0.0
    %917 = vmatpush1.msra.mxu0 0.0
    %918 = vmatprep.subr.mxu0 0.0
    %919 = vmatpush1.msra.mxu0 0.0
    %920 = vmatprep.subr.mxu0 0.0
    %921 = vmatpush1.msra.mxu0 0.0
    %922 = vmatprep.subr.mxu0 0.0
    %923 = vmatpush1.msra.mxu0 0.0
    %924 = vmatprep.subr.mxu0 0.0
    %925 = vmatpush1.msra.mxu0 0.0
    %926 = vmatprep.subr.mxu0 0.0
    %927 = vmatpush1.msra.mxu0 0.0
    %928 = vmatprep.subr.mxu0 0.0
    %929 = vmatpush1.msra.mxu0 0.0
    %930 = vmatprep.subr.mxu0 0.0
    %931 = vmatpush1.msra.mxu0 0.0
    %932 = vmatprep.subr.mxu0 0.0
    %933 = vmatpush1.msra.mxu0 0.0
    %934 = vmatprep.subr.mxu0 0.0
    %935 = vmatpush1.msra.mxu0 %v899
    %936 = vmatprep.subr.mxu0 0.0
    %937 = vmatpush2.msra.mxu0 0.0
    %938 = vmatprep.subr.mxu0 0.0
    %939 = vmatpush2.msra.mxu0 0.0
    %940 = vmatprep.subr.mxu0 0.0
    %941 = vmatpush2.msra.mxu0 0.0
    %942 = vmatprep.subr.mxu0 0.0
    %943 = vmatpush2.msra.mxu0 0.0
    %944 = vmatprep.subr.mxu0 0.0
    %945 = vmatpush2.msra.mxu0 0.0
    %946 = vmatprep.subr.mxu0 0.0
    %947 = vmatpush2.msra.mxu0 0.0
    %948 = vmatprep.subr.mxu0 0.0
    %949 = vmatpush2.msra.mxu0 0.0
    %950 = vmatprep.subr.mxu0 0.0
    %951 = vmatpush2.msra.mxu0 0.0
    %952 = vmatprep.subr.mxu0 0.0
    %953 = vmatpush2.msra.mxu0 0.0
    %954 = vmatprep.subr.mxu0 0.0
    %955 = vmatpush2.msra.mxu0 0.0
    %956 = vmatprep.subr.mxu0 0.0
    %957 = vmatpush2.msra.mxu0 0.0
    %958 = vmatprep.subr.mxu0 0.0
    %959 = vmatpush2.msra.mxu0 0.0
    %960 = vmatprep.subr.mxu0 0.0
    %961 = vmatpush2.msra.mxu0 0.0
    %962 = vmatprep.subr.mxu0 0.0
    %963 = vmatpush2.msra.mxu0 0.0
    %964 = vmatprep.subr.mxu0 0.0
    %965 = vmatpush2.msra.mxu0 0.0
    %966 = vmatprep.subr.mxu0 0.0
    %967 = vmatpush2.msra.mxu0 0.0
    %968 = vmatprep.mubr.f32.mxu0 0.0
    %969 = vmatmul.mubr.f32.gmra.mxu0 %v902
    %v970 = vpop.f32.mrf.mxu0
    %v971 = vadd.f32 0.0, %v970
    %v972 = vpop.f32.mrf.mxu0
    %973 = vdwg.mxu0
    %974 = vrot.lane.b32.xlu0 %v309, 64
    %v975 = vpop.permute.xlu0 %974
    %976 = vrot.lane.b32.xlu0 %v214, 64
    %v977 = vpop.permute.xlu0 %976
    %v978 = vsel %vm55, %v975, 0
    %v980 = vsel %vm55, %v977, 0
    %982 = vmatprep.subr.mxu0 0.0
    %983 = vmatpush1.xpose.msra.mxu0 0.0
    %984 = vmatprep.subr.mxu0 0.0
    %985 = vmatpush1.xpose.msra.mxu0 0.0
    %986 = vmatprep.subr.mxu0 0.0
    %987 = vmatpush1.xpose.msra.mxu0 0.0
    %988 = vmatprep.subr.mxu0 0.0
    %989 = vmatpush1.xpose.msra.mxu0 0.0
    %990 = vmatprep.subr.mxu0 0.0
    %991 = vmatpush1.xpose.msra.mxu0 0.0
    %992 = vmatprep.subr.mxu0 0.0
    %993 = vmatpush1.xpose.msra.mxu0 0.0
    %994 = vmatprep.subr.mxu0 0.0
    %995 = vmatpush1.xpose.msra.mxu0 0.0
    %996 = vmatprep.subr.mxu0 0.0
    %997 = vmatpush1.xpose.msra.mxu0 0.0
    %998 = vmatprep.subr.mxu0 0.0
    %999 = vmatpush1.xpose.msra.mxu0 0.0
    %1000 = vmatprep.subr.mxu0 0.0
    %1001 = vmatpush1.xpose.msra.mxu0 0.0
    %1002 = vmatprep.subr.mxu0 0.0
    %1003 = vmatpush1.xpose.msra.mxu0 0.0
    %1004 = vmatprep.subr.mxu0 0.0
    %1005 = vmatpush1.xpose.msra.mxu0 0.0
    %1006 = vmatprep.subr.mxu0 0.0
    %1007 = vmatpush1.xpose.msra.mxu0 0.0
    %1008 = vmatprep.subr.mxu0 0.0
    %1009 = vmatpush1.xpose.msra.mxu0 0.0
    %1010 = vmatprep.subr.mxu0 0.0
    %1011 = vmatpush1.xpose.msra.mxu0 0.0
    %1012 = vmatprep.subr.mxu0 0.0
    %1013 = vmatpush1.xpose.msra.mxu0 %v980
    %1014 = vmatprep.subr.mxu0 0.0
    %1015 = vmatpush2.xpose.msra.mxu0 0.0
    %1016 = vmatprep.subr.mxu0 0.0
    %1017 = vmatpush2.xpose.msra.mxu0 0.0
    %1018 = vmatprep.subr.mxu0 0.0
    %1019 = vmatpush2.xpose.msra.mxu0 0.0
    %1020 = vmatprep.subr.mxu0 0.0
    %1021 = vmatpush2.xpose.msra.mxu0 0.0
    %1022 = vmatprep.subr.mxu0 0.0
    %1023 = vmatpush2.xpose.msra.mxu0 0.0
    %1024 = vmatprep.subr.mxu0 0.0
    %1025 = vmatpush2.xpose.msra.mxu0 0.0
    %1026 = vmatprep.subr.mxu0 0.0
    %1027 = vmatpush2.xpose.msra.mxu0 0.0
    %1028 = vmatprep.subr.mxu0 0.0
    %1029 = vmatpush2.xpose.msra.mxu0 0.0
    %1030 = vmatprep.subr.mxu0 0.0
    %1031 = vmatpush2.xpose.msra.mxu0 0.0
    %1032 = vmatprep.subr.mxu0 0.0
    %1033 = vmatpush2.xpose.msra.mxu0 0.0
    %1034 = vmatprep.subr.mxu0 0.0
    %1035 = vmatpush2.xpose.msra.mxu0 0.0
    %1036 = vmatprep.subr.mxu0 0.0
    %1037 = vmatpush2.xpose.msra.mxu0 0.0
    %1038 = vmatprep.subr.mxu0 0.0
    %1039 = vmatpush2.xpose.msra.mxu0 0.0
    %1040 = vmatprep.subr.mxu0 0.0
    %1041 = vmatpush2.xpose.msra.mxu0 0.0
    %1042 = vmatprep.subr.mxu0 0.0
    %1043 = vmatpush2.xpose.msra.mxu0 0.0
    %1044 = vmatprep.subr.mxu0 0.0
    %1045 = vmatpush2.xpose.msra.mxu0 0.0
    %1046 = vmatprep.mubr.f32.mxu0 0.0
    %1047 = vmatmul.mubr.f32.gmra.mxu0 %v978
    %v1048 = vpop.f32.mrf.mxu0
    %v1049 = vadd.f32 0.0, %v1048
    %v1050 = vpop.f32.mrf.mxu0
    %1051 = vdwg.mxu0
    %1052 = vrot.lane.b32.xlu0 %v311, 64
    %v1053 = vpop.permute.xlu0 %1052
    %1054 = vrot.lane.b32.xlu0 %v220, 64
    %v1055 = vpop.permute.xlu0 %1054
    %v1056 = vsel %vm55, %v1053, 0
    %v1058 = vsel %vm55, %v1055, 0
    %1060 = vmatprep.subr.mxu0 0.0
    %1061 = vmatpush1.xpose.msra.mxu0 0.0
    %1062 = vmatprep.subr.mxu0 0.0
    %1063 = vmatpush1.xpose.msra.mxu0 0.0
    %1064 = vmatprep.subr.mxu0 0.0
    %1065 = vmatpush1.xpose.msra.mxu0 0.0
    %1066 = vmatprep.subr.mxu0 0.0
    %1067 = vmatpush1.xpose.msra.mxu0 0.0
    %1068 = vmatprep.subr.mxu0 0.0
    %1069 = vmatpush1.xpose.msra.mxu0 0.0
    %1070 = vmatprep.subr.mxu0 0.0
    %1071 = vmatpush1.xpose.msra.mxu0 0.0
    %1072 = vmatprep.subr.mxu0 0.0
    %1073 = vmatpush1.xpose.msra.mxu0 0.0
    %1074 = vmatprep.subr.mxu0 0.0
    %1075 = vmatpush1.xpose.msra.mxu0 0.0
    %1076 = vmatprep.subr.mxu0 0.0
    %1077 = vmatpush1.xpose.msra.mxu0 0.0
    %1078 = vmatprep.subr.mxu0 0.0
    %1079 = vmatpush1.xpose.msra.mxu0 0.0
    %1080 = vmatprep.subr.mxu0 0.0
    %1081 = vmatpush1.xpose.msra.mxu0 0.0
    %1082 = vmatprep.subr.mxu0 0.0
    %1083 = vmatpush1.xpose.msra.mxu0 0.0
    %1084 = vmatprep.subr.mxu0 0.0
    %1085 = vmatpush1.xpose.msra.mxu0 0.0
    %1086 = vmatprep.subr.mxu0 0.0
    %1087 = vmatpush1.xpose.msra.mxu0 0.0
    %1088 = vmatprep.subr.mxu0 0.0
    %1089 = vmatpush1.xpose.msra.mxu0 0.0
    %1090 = vmatprep.subr.mxu0 0.0
    %1091 = vmatpush1.xpose.msra.mxu0 %v1058
    %1092 = vmatprep.subr.mxu0 0.0
    %1093 = vmatpush2.xpose.msra.mxu0 0.0
    %1094 = vmatprep.subr.mxu0 0.0
    %1095 = vmatpush2.xpose.msra.mxu0 0.0
    %1096 = vmatprep.subr.mxu0 0.0
    %1097 = vmatpush2.xpose.msra.mxu0 0.0
    %1098 = vmatprep.subr.mxu0 0.0
    %1099 = vmatpush2.xpose.msra.mxu0 0.0
    %1100 = vmatprep.subr.mxu0 0.0
    %1101 = vmatpush2.xpose.msra.mxu0 0.0
    %1102 = vmatprep.subr.mxu0 0.0
    %1103 = vmatpush2.xpose.msra.mxu0 0.0
    %1104 = vmatprep.subr.mxu0 0.0
    %1105 = vmatpush2.xpose.msra.mxu0 0.0
    %1106 = vmatprep.subr.mxu0 0.0
    %1107 = vmatpush2.xpose.msra.mxu0 0.0
    %1108 = vmatprep.subr.mxu0 0.0
    %1109 = vmatpush2.xpose.msra.mxu0 0.0
    %1110 = vmatprep.subr.mxu0 0.0
    %1111 = vmatpush2.xpose.msra.mxu0 0.0
    %1112 = vmatprep.subr.mxu0 0.0
    %1113 = vmatpush2.xpose.msra.mxu0 0.0
    %1114 = vmatprep.subr.mxu0 0.0
    %1115 = vmatpush2.xpose.msra.mxu0 0.0
    %1116 = vmatprep.subr.mxu0 0.0
    %1117 = vmatpush2.xpose.msra.mxu0 0.0
    %1118 = vmatprep.subr.mxu0 0.0
    %1119 = vmatpush2.xpose.msra.mxu0 0.0
    %1120 = vmatprep.subr.mxu0 0.0
    %1121 = vmatpush2.xpose.msra.mxu0 0.0
    %1122 = vmatprep.subr.mxu0 0.0
    %1123 = vmatpush2.xpose.msra.mxu0 0.0
    %1124 = vmatprep.mubr.f32.mxu0 0.0
    %1125 = vmatmul.mubr.f32.gmra.mxu0 %v1056
    %v1126 = vpop.f32.mrf.mxu0
    %v1127 = vadd.f32 0.0, %v1126
    %v1128 = vpop.f32.mrf.mxu0
    %1129 = vdwg.mxu0
    %v1130 = vsel %vm315, -1e+09, %v1049
    %v1131 = vsel %vm316, -1e+09, %v1127
    %v1132 = vsel %vm471, %v1130, -inf
    %1133 = vmax.xlane.f32.xlu0 %v1132
    %v1134 = vpop.xlane.xlu0 %1133
    %v1135 = vsel %vm471, %v1131, -inf
    %1136 = vmax.xlane.f32.xlu0 %v1135
    %v1137 = vpop.xlane.xlu0 %1136
    %v1138 = vsub.f32 %v1130, %v1134
    %v1139 = vsub.f32 %v1131, %v1137
    %v1140 = vmul.f32 %v1138, 1.442695
    %v1141 = vpow.pop %v1140
    %v1142 = vmul.f32 %v1139, 1.442695
    %v1143 = vpow.pop %v1142
    %v1144 = vsel %vm471, %v1141, 0.0
    %1145 = vadd.xlane.f32.xlu0 %v1144
    %v1146 = vpop.xlane.xlu0 %1145
    %v1147 = vsel %vm471, %v1143, 0.0
    %1148 = vadd.xlane.f32.xlu0 %v1147
    %v1149 = vpop.xlane.xlu0 %1148
    %v1150 = vrcp.pop %v1146
    %v1151 = vrcp.pop %v1149
    %v1152 = vmul.f32 %v1141, %v1150
    %v1153 = vmul.f32 %v1143, %v1151
    %1154 = vrot.lane.b32.xlu0 %v299, 64
    %v1155 = vpop.permute.xlu0 %1154
    %v1158 = vsel %vm471, %v1152, 0
    %1160 = vmatprep.subr.mxu0 0.0
    %1161 = vmatpush1.msra.mxu0 0.0
    %1162 = vmatprep.subr.mxu0 0.0
    %1163 = vmatpush1.msra.mxu0 0.0
    %1164 = vmatprep.subr.mxu0 0.0
    %1165 = vmatpush1.msra.mxu0 0.0
    %1166 = vmatprep.subr.mxu0 0.0
    %1167 = vmatpush1.msra.mxu0 0.0
    %1168 = vmatprep.subr.mxu0 0.0
    %1169 = vmatpush1.msra.mxu0 0.0
    %1170 = vmatprep.subr.mxu0 0.0
    %1171 = vmatpush1.msra.mxu0 0.0
    %1172 = vmatprep.subr.mxu0 0.0
    %1173 = vmatpush1.msra.mxu0 0.0
    %1174 = vmatprep.subr.mxu0 0.0
    %1175 = vmatpush1.msra.mxu0 0.0
    %1176 = vmatprep.subr.mxu0 0.0
    %1177 = vmatpush1.msra.mxu0 0.0
    %1178 = vmatprep.subr.mxu0 0.0
    %1179 = vmatpush1.msra.mxu0 0.0
    %1180 = vmatprep.subr.mxu0 0.0
    %1181 = vmatpush1.msra.mxu0 0.0
    %1182 = vmatprep.subr.mxu0 0.0
    %1183 = vmatpush1.msra.mxu0 0.0
    %1184 = vmatprep.subr.mxu0 0.0
    %1185 = vmatpush1.msra.mxu0 0.0
    %1186 = vmatprep.subr.mxu0 0.0
    %1187 = vmatpush1.msra.mxu0 0.0
    %1188 = vmatprep.subr.mxu0 0.0
    %1189 = vmatpush1.msra.mxu0 0.0
    %1190 = vmatprep.subr.mxu0 0.0
    %1191 = vmatpush1.msra.mxu0 %v1155
    %1192 = vmatprep.subr.mxu0 0.0
    %1193 = vmatpush2.msra.mxu0 0.0
    %1194 = vmatprep.subr.mxu0 0.0
    %1195 = vmatpush2.msra.mxu0 0.0
    %1196 = vmatprep.subr.mxu0 0.0
    %1197 = vmatpush2.msra.mxu0 0.0
    %1198 = vmatprep.subr.mxu0 0.0
    %1199 = vmatpush2.msra.mxu0 0.0
    %1200 = vmatprep.subr.mxu0 0.0
    %1201 = vmatpush2.msra.mxu0 0.0
    %1202 = vmatprep.subr.mxu0 0.0
    %1203 = vmatpush2.msra.mxu0 0.0
    %1204 = vmatprep.subr.mxu0 0.0
    %1205 = vmatpush2.msra.mxu0 0.0
    %1206 = vmatprep.subr.mxu0 0.0
    %1207 = vmatpush2.msra.mxu0 0.0
    %1208 = vmatprep.subr.mxu0 0.0
    %1209 = vmatpush2.msra.mxu0 0.0
    %1210 = vmatprep.subr.mxu0 0.0
    %1211 = vmatpush2.msra.mxu0 0.0
    %1212 = vmatprep.subr.mxu0 0.0
    %1213 = vmatpush2.msra.mxu0 0.0
    %1214 = vmatprep.subr.mxu0 0.0
    %1215 = vmatpush2.msra.mxu0 0.0
    %1216 = vmatprep.subr.mxu0 0.0
    %1217 = vmatpush2.msra.mxu0 0.0
    %1218 = vmatprep.subr.mxu0 0.0
    %1219 = vmatpush2.msra.mxu0 0.0
    %1220 = vmatprep.subr.mxu0 0.0
    %1221 = vmatpush2.msra.mxu0 0.0
    %1222 = vmatprep.subr.mxu0 0.0
    %1223 = vmatpush2.msra.mxu0 0.0
    %1224 = vmatprep.mubr.f32.mxu0 0.0
    %1225 = vmatmul.mubr.f32.gmra.mxu0 %v1158
    %v1226 = vpop.f32.mrf.mxu0
    %v1227 = vadd.f32 0.0, %v1226
    %v1228 = vpop.f32.mrf.mxu0
    %1229 = vdwg.mxu0
    %1230 = vrot.lane.b32.xlu0 %v305, 64
    %v1231 = vpop.permute.xlu0 %1230
    %v1234 = vsel %vm471, %v1153, 0
    %1236 = vmatprep.subr.mxu0 0.0
    %1237 = vmatpush1.msra.mxu0 0.0
    %1238 = vmatprep.subr.mxu0 0.0
    %1239 = vmatpush1.msra.mxu0 0.0
    %1240 = vmatprep.subr.mxu0 0.0
    %1241 = vmatpush1.msra.mxu0 0.0
    %1242 = vmatprep.subr.mxu0 0.0
    %1243 = vmatpush1.msra.mxu0 0.0
    %1244 = vmatprep.subr.mxu0 0.0
    %1245 = vmatpush1.msra.mxu0 0.0
    %1246 = vmatprep.subr.mxu0 0.0
    %1247 = vmatpush1.msra.mxu0 0.0
    %1248 = vmatprep.subr.mxu0 0.0
    %1249 = vmatpush1.msra.mxu0 0.0
    %1250 = vmatprep.subr.mxu0 0.0
    %1251 = vmatpush1.msra.mxu0 0.0
    %1252 = vmatprep.subr.mxu0 0.0
    %1253 = vmatpush1.msra.mxu0 0.0
    %1254 = vmatprep.subr.mxu0 0.0
    %1255 = vmatpush1.msra.mxu0 0.0
    %1256 = vmatprep.subr.mxu0 0.0
    %1257 = vmatpush1.msra.mxu0 0.0
    %1258 = vmatprep.subr.mxu0 0.0
    %1259 = vmatpush1.msra.mxu0 0.0
    %1260 = vmatprep.subr.mxu0 0.0
    %1261 = vmatpush1.msra.mxu0 0.0
    %1262 = vmatprep.subr.mxu0 0.0
    %1263 = vmatpush1.msra.mxu0 0.0
    %1264 = vmatprep.subr.mxu0 0.0
    %1265 = vmatpush1.msra.mxu0 0.0
    %1266 = vmatprep.subr.mxu0 0.0
    %1267 = vmatpush1.msra.mxu0 %v1231
    %1268 = vmatprep.subr.mxu0 0.0
    %1269 = vmatpush2.msra.mxu0 0.0
    %1270 = vmatprep.subr.mxu0 0.0
    %1271 = vmatpush2.msra.mxu0 0.0
    %1272 = vmatprep.subr.mxu0 0.0
    %1273 = vmatpush2.msra.mxu0 0.0
    %1274 = vmatprep.subr.mxu0 0.0
    %1275 = vmatpush2.msra.mxu0 0.0
    %1276 = vmatprep.subr.mxu0 0.0
    %1277 = vmatpush2.msra.mxu0 0.0
    %1278 = vmatprep.subr.mxu0 0.0
    %1279 = vmatpush2.msra.mxu0 0.0
    %1280 = vmatprep.subr.mxu0 0.0
    %1281 = vmatpush2.msra.mxu0 0.0
    %1282 = vmatprep.subr.mxu0 0.0
    %1283 = vmatpush2.msra.mxu0 0.0
    %1284 = vmatprep.subr.mxu0 0.0
    %1285 = vmatpush2.msra.mxu0 0.0
    %1286 = vmatprep.subr.mxu0 0.0
    %1287 = vmatpush2.msra.mxu0 0.0
    %1288 = vmatprep.subr.mxu0 0.0
    %1289 = vmatpush2.msra.mxu0 0.0
    %1290 = vmatprep.subr.mxu0 0.0
    %1291 = vmatpush2.msra.mxu0 0.0
    %1292 = vmatprep.subr.mxu0 0.0
    %1293 = vmatpush2.msra.mxu0 0.0
    %1294 = vmatprep.subr.mxu0 0.0
    %1295 = vmatpush2.msra.mxu0 0.0
    %1296 = vmatprep.subr.mxu0 0.0
    %1297 = vmatpush2.msra.mxu0 0.0
    %1298 = vmatprep.subr.mxu0 0.0
    %1299 = vmatpush2.msra.mxu0 0.0
    %1300 = vmatprep.mubr.f32.mxu0 0.0
    %1301 = vmatmul.mubr.f32.gmra.mxu0 %v1234
    %v1302 = vpop.f32.mrf.mxu0
    %v1303 = vadd.f32 0.0, %v1302
    %v1304 = vpop.f32.mrf.mxu0
    %1305 = vdwg.mxu0
    %1306 = vrot.lane.b32.xlu0 %v309, 32
    %v1307 = vpop.permute.xlu0 %1306
    %1308 = vrot.lane.b32.xlu0 %v214, 32
    %v1309 = vpop.permute.xlu0 %1308
    %v1310 = vsel %vm55, %v1307, 0
    %v1312 = vsel %vm55, %v1309, 0
    %1314 = vmatprep.subr.mxu0 0.0
    %1315 = vmatpush1.xpose.msra.mxu0 0.0
    %1316 = vmatprep.subr.mxu0 0.0
    %1317 = vmatpush1.xpose.msra.mxu0 0.0
    %1318 = vmatprep.subr.mxu0 0.0
    %1319 = vmatpush1.xpose.msra.mxu0 0.0
    %1320 = vmatprep.subr.mxu0 0.0
    %1321 = vmatpush1.xpose.msra.mxu0 0.0
    %1322 = vmatprep.subr.mxu0 0.0
    %1323 = vmatpush1.xpose.msra.mxu0 0.0
    %1324 = vmatprep.subr.mxu0 0.0
    %1325 = vmatpush1.xpose.msra.mxu0 0.0
    %1326 = vmatprep.subr.mxu0 0.0
    %1327 = vmatpush1.xpose.msra.mxu0 0.0
    %1328 = vmatprep.subr.mxu0 0.0
    %1329 = vmatpush1.xpose.msra.mxu0 0.0
    %1330 = vmatprep.subr.mxu0 0.0
    %1331 = vmatpush1.xpose.msra.mxu0 0.0
    %1332 = vmatprep.subr.mxu0 0.0
    %1333 = vmatpush1.xpose.msra.mxu0 0.0
    %1334 = vmatprep.subr.mxu0 0.0
    %1335 = vmatpush1.xpose.msra.mxu0 0.0
    %1336 = vmatprep.subr.mxu0 0.0
    %1337 = vmatpush1.xpose.msra.mxu0 0.0
    %1338 = vmatprep.subr.mxu0 0.0
    %1339 = vmatpush1.xpose.msra.mxu0 0.0
    %1340 = vmatprep.subr.mxu0 0.0
    %1341 = vmatpush1.xpose.msra.mxu0 0.0
    %1342 = vmatprep.subr.mxu0 0.0
    %1343 = vmatpush1.xpose.msra.mxu0 0.0
    %1344 = vmatprep.subr.mxu0 0.0
    %1345 = vmatpush1.xpose.msra.mxu0 %v1312
    %1346 = vmatprep.subr.mxu0 0.0
    %1347 = vmatpush2.xpose.msra.mxu0 0.0
    %1348 = vmatprep.subr.mxu0 0.0
    %1349 = vmatpush2.xpose.msra.mxu0 0.0
    %1350 = vmatprep.subr.mxu0 0.0
    %1351 = vmatpush2.xpose.msra.mxu0 0.0
    %1352 = vmatprep.subr.mxu0 0.0
    %1353 = vmatpush2.xpose.msra.mxu0 0.0
    %1354 = vmatprep.subr.mxu0 0.0
    %1355 = vmatpush2.xpose.msra.mxu0 0.0
    %1356 = vmatprep.subr.mxu0 0.0
    %1357 = vmatpush2.xpose.msra.mxu0 0.0
    %1358 = vmatprep.subr.mxu0 0.0
    %1359 = vmatpush2.xpose.msra.mxu0 0.0
    %1360 = vmatprep.subr.mxu0 0.0
    %1361 = vmatpush2.xpose.msra.mxu0 0.0
    %1362 = vmatprep.subr.mxu0 0.0
    %1363 = vmatpush2.xpose.msra.mxu0 0.0
    %1364 = vmatprep.subr.mxu0 0.0
    %1365 = vmatpush2.xpose.msra.mxu0 0.0
    %1366 = vmatprep.subr.mxu0 0.0
    %1367 = vmatpush2.xpose.msra.mxu0 0.0
    %1368 = vmatprep.subr.mxu0 0.0
    %1369 = vmatpush2.xpose.msra.mxu0 0.0
    %1370 = vmatprep.subr.mxu0 0.0
    %1371 = vmatpush2.xpose.msra.mxu0 0.0
    %1372 = vmatprep.subr.mxu0 0.0
    %1373 = vmatpush2.xpose.msra.mxu0 0.0
    %1374 = vmatprep.subr.mxu0 0.0
    %1375 = vmatpush2.xpose.msra.mxu0 0.0
    %1376 = vmatprep.subr.mxu0 0.0
    %1377 = vmatpush2.xpose.msra.mxu0 0.0
    %1378 = vmatprep.mubr.f32.mxu0 0.0
    %1379 = vmatmul.mubr.f32.gmra.mxu0 %v1310
    %v1380 = vpop.f32.mrf.mxu0
    %v1381 = vadd.f32 0.0, %v1380
    %v1382 = vpop.f32.mrf.mxu0
    %1383 = vdwg.mxu0
    %1384 = vrot.lane.b32.xlu0 %v311, 32
    %v1385 = vpop.permute.xlu0 %1384
    %1386 = vrot.lane.b32.xlu0 %v220, 32
    %v1387 = vpop.permute.xlu0 %1386
    %v1388 = vsel %vm55, %v1385, 0
    %v1390 = vsel %vm55, %v1387, 0
    %1392 = vmatprep.subr.mxu0 0.0
    %1393 = vmatpush1.xpose.msra.mxu0 0.0
    %1394 = vmatprep.subr.mxu0 0.0
    %1395 = vmatpush1.xpose.msra.mxu0 0.0
    %1396 = vmatprep.subr.mxu0 0.0
    %1397 = vmatpush1.xpose.msra.mxu0 0.0
    %1398 = vmatprep.subr.mxu0 0.0
    %1399 = vmatpush1.xpose.msra.mxu0 0.0
    %1400 = vmatprep.subr.mxu0 0.0
    %1401 = vmatpush1.xpose.msra.mxu0 0.0
    %1402 = vmatprep.subr.mxu0 0.0
    %1403 = vmatpush1.xpose.msra.mxu0 0.0
    %1404 = vmatprep.subr.mxu0 0.0
    %1405 = vmatpush1.xpose.msra.mxu0 0.0
    %1406 = vmatprep.subr.mxu0 0.0
    %1407 = vmatpush1.xpose.msra.mxu0 0.0
    %1408 = vmatprep.subr.mxu0 0.0
    %1409 = vmatpush1.xpose.msra.mxu0 0.0
    %1410 = vmatprep.subr.mxu0 0.0
    %1411 = vmatpush1.xpose.msra.mxu0 0.0
    %1412 = vmatprep.subr.mxu0 0.0
    %1413 = vmatpush1.xpose.msra.mxu0 0.0
    %1414 = vmatprep.subr.mxu0 0.0
    %1415 = vmatpush1.xpose.msra.mxu0 0.0
    %1416 = vmatprep.subr.mxu0 0.0
    %1417 = vmatpush1.xpose.msra.mxu0 0.0
    %1418 = vmatprep.subr.mxu0 0.0
    %1419 = vmatpush1.xpose.msra.mxu0 0.0
    %1420 = vmatprep.subr.mxu0 0.0
    %1421 = vmatpush1.xpose.msra.mxu0 0.0
    %1422 = vmatprep.subr.mxu0 0.0
    %1423 = vmatpush1.xpose.msra.mxu0 %v1390
    %1424 = vmatprep.subr.mxu0 0.0
    %1425 = vmatpush2.xpose.msra.mxu0 0.0
    %1426 = vmatprep.subr.mxu0 0.0
    %1427 = vmatpush2.xpose.msra.mxu0 0.0
    %1428 = vmatprep.subr.mxu0 0.0
    %1429 = vmatpush2.xpose.msra.mxu0 0.0
    %1430 = vmatprep.subr.mxu0 0.0
    %1431 = vmatpush2.xpose.msra.mxu0 0.0
    %1432 = vmatprep.subr.mxu0 0.0
    %1433 = vmatpush2.xpose.msra.mxu0 0.0
    %1434 = vmatprep.subr.mxu0 0.0
    %1435 = vmatpush2.xpose.msra.mxu0 0.0
    %1436 = vmatprep.subr.mxu0 0.0
    %1437 = vmatpush2.xpose.msra.mxu0 0.0
    %1438 = vmatprep.subr.mxu0 0.0
    %1439 = vmatpush2.xpose.msra.mxu0 0.0
    %1440 = vmatprep.subr.mxu0 0.0
    %1441 = vmatpush2.xpose.msra.mxu0 0.0
    %1442 = vmatprep.subr.mxu0 0.0
    %1443 = vmatpush2.xpose.msra.mxu0 0.0
    %1444 = vmatprep.subr.mxu0 0.0
    %1445 = vmatpush2.xpose.msra.mxu0 0.0
    %1446 = vmatprep.subr.mxu0 0.0
    %1447 = vmatpush2.xpose.msra.mxu0 0.0
    %1448 = vmatprep.subr.mxu0 0.0
    %1449 = vmatpush2.xpose.msra.mxu0 0.0
    %1450 = vmatprep.subr.mxu0 0.0
    %1451 = vmatpush2.xpose.msra.mxu0 0.0
    %1452 = vmatprep.subr.mxu0 0.0
    %1453 = vmatpush2.xpose.msra.mxu0 0.0
    %1454 = vmatprep.subr.mxu0 0.0
    %1455 = vmatpush2.xpose.msra.mxu0 0.0
    %1456 = vmatprep.mubr.f32.mxu0 0.0
    %1457 = vmatmul.mubr.f32.gmra.mxu0 %v1388
    %v1458 = vpop.f32.mrf.mxu0
    %v1459 = vadd.f32 0.0, %v1458
    %v1460 = vpop.f32.mrf.mxu0
    %1461 = vdwg.mxu0
    %v1462 = vsel %vm315, -1e+09, %v1381
    %v1463 = vsel %vm316, -1e+09, %v1459
    %v1464 = vsel %vm471, %v1462, -inf
    %1465 = vmax.xlane.f32.xlu0 %v1464
    %v1466 = vpop.xlane.xlu0 %1465
    %v1467 = vsel %vm471, %v1463, -inf
    %1468 = vmax.xlane.f32.xlu0 %v1467
    %v1469 = vpop.xlane.xlu0 %1468
    %v1470 = vsub.f32 %v1462, %v1466
    %v1471 = vsub.f32 %v1463, %v1469
    %v1472 = vmul.f32 %v1470, 1.442695
    %v1473 = vpow.pop %v1472
    %v1474 = vmul.f32 %v1471, 1.442695
    %v1475 = vpow.pop %v1474
    %v1476 = vsel %vm471, %v1473, 0.0
    %1477 = vadd.xlane.f32.xlu0 %v1476
    %v1478 = vpop.xlane.xlu0 %1477
    %v1479 = vsel %vm471, %v1475, 0.0
    %1480 = vadd.xlane.f32.xlu0 %v1479
    %v1481 = vpop.xlane.xlu0 %1480
    %v1482 = vrcp.pop %v1478
    %v1483 = vrcp.pop %v1481
    %v1484 = vmul.f32 %v1473, %v1482
    %v1485 = vmul.f32 %v1475, %v1483
    %1486 = vrot.lane.b32.xlu0 %v299, 32
    %v1487 = vpop.permute.xlu0 %1486
    %v1490 = vsel %vm471, %v1484, 0
    %1492 = vmatprep.subr.mxu0 0.0
    %1493 = vmatpush1.msra.mxu0 0.0
    %1494 = vmatprep.subr.mxu0 0.0
    %1495 = vmatpush1.msra.mxu0 0.0
    %1496 = vmatprep.subr.mxu0 0.0
    %1497 = vmatpush1.msra.mxu0 0.0
    %1498 = vmatprep.subr.mxu0 0.0
    %1499 = vmatpush1.msra.mxu0 0.0
    %1500 = vmatprep.subr.mxu0 0.0
    %1501 = vmatpush1.msra.mxu0 0.0
    %1502 = vmatprep.subr.mxu0 0.0
    %1503 = vmatpush1.msra.mxu0 0.0
    %1504 = vmatprep.subr.mxu0 0.0
    %1505 = vmatpush1.msra.mxu0 0.0
    %1506 = vmatprep.subr.mxu0 0.0
    %1507 = vmatpush1.msra.mxu0 0.0
    %1508 = vmatprep.subr.mxu0 0.0
    %1509 = vmatpush1.msra.mxu0 0.0
    %1510 = vmatprep.subr.mxu0 0.0
    %1511 = vmatpush1.msra.mxu0 0.0
    %1512 = vmatprep.subr.mxu0 0.0
    %1513 = vmatpush1.msra.mxu0 0.0
    %1514 = vmatprep.subr.mxu0 0.0
    %1515 = vmatpush1.msra.mxu0 0.0
    %1516 = vmatprep.subr.mxu0 0.0
    %1517 = vmatpush1.msra.mxu0 0.0
    %1518 = vmatprep.subr.mxu0 0.0
    %1519 = vmatpush1.msra.mxu0 0.0
    %1520 = vmatprep.subr.mxu0 0.0
    %1521 = vmatpush1.msra.mxu0 0.0
    %1522 = vmatprep.subr.mxu0 0.0
    %1523 = vmatpush1.msra.mxu0 %v1487
    %1524 = vmatprep.subr.mxu0 0.0
    %1525 = vmatpush2.msra.mxu0 0.0
    %1526 = vmatprep.subr.mxu0 0.0
    %1527 = vmatpush2.msra.mxu0 0.0
    %1528 = vmatprep.subr.mxu0 0.0
    %1529 = vmatpush2.msra.mxu0 0.0
    %1530 = vmatprep.subr.mxu0 0.0
    %1531 = vmatpush2.msra.mxu0 0.0
    %1532 = vmatprep.subr.mxu0 0.0
    %1533 = vmatpush2.msra.mxu0 0.0
    %1534 = vmatprep.subr.mxu0 0.0
    %1535 = vmatpush2.msra.mxu0 0.0
    %1536 = vmatprep.subr.mxu0 0.0
    %1537 = vmatpush2.msra.mxu0 0.0
    %1538 = vmatprep.subr.mxu0 0.0
    %1539 = vmatpush2.msra.mxu0 0.0
    %1540 = vmatprep.subr.mxu0 0.0
    %1541 = vmatpush2.msra.mxu0 0.0
    %1542 = vmatprep.subr.mxu0 0.0
    %1543 = vmatpush2.msra.mxu0 0.0
    %1544 = vmatprep.subr.mxu0 0.0
    %1545 = vmatpush2.msra.mxu0 0.0
    %1546 = vmatprep.subr.mxu0 0.0
    %1547 = vmatpush2.msra.mxu0 0.0
    %1548 = vmatprep.subr.mxu0 0.0
    %1549 = vmatpush2.msra.mxu0 0.0
    %1550 = vmatprep.subr.mxu0 0.0
    %1551 = vmatpush2.msra.mxu0 0.0
    %1552 = vmatprep.subr.mxu0 0.0
    %1553 = vmatpush2.msra.mxu0 0.0
    %1554 = vmatprep.subr.mxu0 0.0
    %1555 = vmatpush2.msra.mxu0 0.0
    %1556 = vmatprep.mubr.f32.mxu0 0.0
    %1557 = vmatmul.mubr.f32.gmra.mxu0 %v1490
    %v1558 = vpop.f32.mrf.mxu0
    %v1559 = vadd.f32 0.0, %v1558
    %v1560 = vpop.f32.mrf.mxu0
    %1561 = vdwg.mxu0
    %1562 = vrot.lane.b32.xlu0 %v305, 32
    %v1563 = vpop.permute.xlu0 %1562
    %v1566 = vsel %vm471, %v1485, 0
    %1568 = vmatprep.subr.mxu0 0.0
    %1569 = vmatpush1.msra.mxu0 0.0
    %1570 = vmatprep.subr.mxu0 0.0
    %1571 = vmatpush1.msra.mxu0 0.0
    %1572 = vmatprep.subr.mxu0 0.0
    %1573 = vmatpush1.msra.mxu0 0.0
    %1574 = vmatprep.subr.mxu0 0.0
    %1575 = vmatpush1.msra.mxu0 0.0
    %1576 = vmatprep.subr.mxu0 0.0
    %1577 = vmatpush1.msra.mxu0 0.0
    %1578 = vmatprep.subr.mxu0 0.0
    %1579 = vmatpush1.msra.mxu0 0.0
    %1580 = vmatprep.subr.mxu0 0.0
    %1581 = vmatpush1.msra.mxu0 0.0
    %1582 = vmatprep.subr.mxu0 0.0
    %1583 = vmatpush1.msra.mxu0 0.0
    %1584 = vmatprep.subr.mxu0 0.0
    %1585 = vmatpush1.msra.mxu0 0.0
    %1586 = vmatprep.subr.mxu0 0.0
    %1587 = vmatpush1.msra.mxu0 0.0
    %1588 = vmatprep.subr.mxu0 0.0
    %1589 = vmatpush1.msra.mxu0 0.0
    %1590 = vmatprep.subr.mxu0 0.0
    %1591 = vmatpush1.msra.mxu0 0.0
    %1592 = vmatprep.subr.mxu0 0.0
    %1593 = vmatpush1.msra.mxu0 0.0
    %1594 = vmatprep.subr.mxu0 0.0
    %1595 = vmatpush1.msra.mxu0 0.0
    %1596 = vmatprep.subr.mxu0 0.0
    %1597 = vmatpush1.msra.mxu0 0.0
    %1598 = vmatprep.subr.mxu0 0.0
    %1599 = vmatpush1.msra.mxu0 %v1563
    %1600 = vmatprep.subr.mxu0 0.0
    %1601 = vmatpush2.msra.mxu0 0.0
    %1602 = vmatprep.subr.mxu0 0.0
    %1603 = vmatpush2.msra.mxu0 0.0
    %1604 = vmatprep.subr.mxu0 0.0
    %1605 = vmatpush2.msra.mxu0 0.0
    %1606 = vmatprep.subr.mxu0 0.0
    %1607 = vmatpush2.msra.mxu0 0.0
    %1608 = vmatprep.subr.mxu0 0.0
    %1609 = vmatpush2.msra.mxu0 0.0
    %1610 = vmatprep.subr.mxu0 0.0
    %1611 = vmatpush2.msra.mxu0 0.0
    %1612 = vmatprep.subr.mxu0 0.0
    %1613 = vmatpush2.msra.mxu0 0.0
    %1614 = vmatprep.subr.mxu0 0.0
    %1615 = vmatpush2.msra.mxu0 0.0
    %1616 = vmatprep.subr.mxu0 0.0
    %1617 = vmatpush2.msra.mxu0 0.0
    %1618 = vmatprep.subr.mxu0 0.0
    %1619 = vmatpush2.msra.mxu0 0.0
    %1620 = vmatprep.subr.mxu0 0.0
    %1621 = vmatpush2.msra.mxu0 0.0
    %1622 = vmatprep.subr.mxu0 0.0
    %1623 = vmatpush2.msra.mxu0 0.0
    %1624 = vmatprep.subr.mxu0 0.0
    %1625 = vmatpush2.msra.mxu0 0.0
    %1626 = vmatprep.subr.mxu0 0.0
    %1627 = vmatpush2.msra.mxu0 0.0
    %1628 = vmatprep.subr.mxu0 0.0
    %1629 = vmatpush2.msra.mxu0 0.0
    %1630 = vmatprep.subr.mxu0 0.0
    %1631 = vmatpush2.msra.mxu0 0.0
    %1632 = vmatprep.mubr.f32.mxu0 0.0
    %1633 = vmatmul.mubr.f32.gmra.mxu0 %v1566
    %v1634 = vpop.f32.mrf.mxu0
    %v1635 = vadd.f32 0.0, %v1634
    %v1636 = vpop.f32.mrf.mxu0
    %1637 = vdwg.mxu0
    %v1639 = vsel %vm55, %v310, 0
    %v1642 = vsel %vm55, %v216, 0
    %1644 = vmatprep.subr.mxu0 0.0
    %1645 = vmatpush1.xpose.msra.mxu0 0.0
    %1646 = vmatprep.subr.mxu0 0.0
    %1647 = vmatpush1.xpose.msra.mxu0 0.0
    %1648 = vmatprep.subr.mxu0 0.0
    %1649 = vmatpush1.xpose.msra.mxu0 0.0
    %1650 = vmatprep.subr.mxu0 0.0
    %1651 = vmatpush1.xpose.msra.mxu0 0.0
    %1652 = vmatprep.subr.mxu0 0.0
    %1653 = vmatpush1.xpose.msra.mxu0 0.0
    %1654 = vmatprep.subr.mxu0 0.0
    %1655 = vmatpush1.xpose.msra.mxu0 0.0
    %1656 = vmatprep.subr.mxu0 0.0
    %1657 = vmatpush1.xpose.msra.mxu0 0.0
    %1658 = vmatprep.subr.mxu0 0.0
    %1659 = vmatpush1.xpose.msra.mxu0 0.0
    %1660 = vmatprep.subr.mxu0 0.0
    %1661 = vmatpush1.xpose.msra.mxu0 0.0
    %1662 = vmatprep.subr.mxu0 0.0
    %1663 = vmatpush1.xpose.msra.mxu0 0.0
    %1664 = vmatprep.subr.mxu0 0.0
    %1665 = vmatpush1.xpose.msra.mxu0 0.0
    %1666 = vmatprep.subr.mxu0 0.0
    %1667 = vmatpush1.xpose.msra.mxu0 0.0
    %1668 = vmatprep.subr.mxu0 0.0
    %1669 = vmatpush1.xpose.msra.mxu0 0.0
    %1670 = vmatprep.subr.mxu0 0.0
    %1671 = vmatpush1.xpose.msra.mxu0 0.0
    %1672 = vmatprep.subr.mxu0 0.0
    %1673 = vmatpush1.xpose.msra.mxu0 0.0
    %1674 = vmatprep.subr.mxu0 0.0
    %1675 = vmatpush1.xpose.msra.mxu0 %v1642
    %1676 = vmatprep.subr.mxu0 0.0
    %1677 = vmatpush2.xpose.msra.mxu0 0.0
    %1678 = vmatprep.subr.mxu0 0.0
    %1679 = vmatpush2.xpose.msra.mxu0 0.0
    %1680 = vmatprep.subr.mxu0 0.0
    %1681 = vmatpush2.xpose.msra.mxu0 0.0
    %1682 = vmatprep.subr.mxu0 0.0
    %1683 = vmatpush2.xpose.msra.mxu0 0.0
    %1684 = vmatprep.subr.mxu0 0.0
    %1685 = vmatpush2.xpose.msra.mxu0 0.0
    %1686 = vmatprep.subr.mxu0 0.0
    %1687 = vmatpush2.xpose.msra.mxu0 0.0
    %1688 = vmatprep.subr.mxu0 0.0
    %1689 = vmatpush2.xpose.msra.mxu0 0.0
    %1690 = vmatprep.subr.mxu0 0.0
    %1691 = vmatpush2.xpose.msra.mxu0 0.0
    %1692 = vmatprep.subr.mxu0 0.0
    %1693 = vmatpush2.xpose.msra.mxu0 0.0
    %1694 = vmatprep.subr.mxu0 0.0
    %1695 = vmatpush2.xpose.msra.mxu0 0.0
    %1696 = vmatprep.subr.mxu0 0.0
    %1697 = vmatpush2.xpose.msra.mxu0 0.0
    %1698 = vmatprep.subr.mxu0 0.0
    %1699 = vmatpush2.xpose.msra.mxu0 0.0
    %1700 = vmatprep.subr.mxu0 0.0
    %1701 = vmatpush2.xpose.msra.mxu0 0.0
    %1702 = vmatprep.subr.mxu0 0.0
    %1703 = vmatpush2.xpose.msra.mxu0 0.0
    %1704 = vmatprep.subr.mxu0 0.0
    %1705 = vmatpush2.xpose.msra.mxu0 0.0
    %1706 = vmatprep.subr.mxu0 0.0
    %1707 = vmatpush2.xpose.msra.mxu0 0.0
    %1708 = vmatprep.mubr.f32.mxu0 0.0
    %1709 = vmatmul.mubr.f32.gmra.mxu0 %v1639
    %v1710 = vpop.f32.mrf.mxu0
    %v1711 = vadd.f32 0.0, %v1710
    %v1712 = vpop.f32.mrf.mxu0
    %1713 = vdwg.mxu0
    %v1715 = vsel %vm55, %v312, 0
    %v1718 = vsel %vm55, %v222, 0
    %1720 = vmatprep.subr.mxu0 0.0
    %1721 = vmatpush1.xpose.msra.mxu0 0.0
    %1722 = vmatprep.subr.mxu0 0.0
    %1723 = vmatpush1.xpose.msra.mxu0 0.0
    %1724 = vmatprep.subr.mxu0 0.0
    %1725 = vmatpush1.xpose.msra.mxu0 0.0
    %1726 = vmatprep.subr.mxu0 0.0
    %1727 = vmatpush1.xpose.msra.mxu0 0.0
    %1728 = vmatprep.subr.mxu0 0.0
    %1729 = vmatpush1.xpose.msra.mxu0 0.0
    %1730 = vmatprep.subr.mxu0 0.0
    %1731 = vmatpush1.xpose.msra.mxu0 0.0
    %1732 = vmatprep.subr.mxu0 0.0
    %1733 = vmatpush1.xpose.msra.mxu0 0.0
    %1734 = vmatprep.subr.mxu0 0.0
    %1735 = vmatpush1.xpose.msra.mxu0 0.0
    %1736 = vmatprep.subr.mxu0 0.0
    %1737 = vmatpush1.xpose.msra.mxu0 0.0
    %1738 = vmatprep.subr.mxu0 0.0
    %1739 = vmatpush1.xpose.msra.mxu0 0.0
    %1740 = vmatprep.subr.mxu0 0.0
    %1741 = vmatpush1.xpose.msra.mxu0 0.0
    %1742 = vmatprep.subr.mxu0 0.0
    %1743 = vmatpush1.xpose.msra.mxu0 0.0
    %1744 = vmatprep.subr.mxu0 0.0
    %1745 = vmatpush1.xpose.msra.mxu0 0.0
    %1746 = vmatprep.subr.mxu0 0.0
    %1747 = vmatpush1.xpose.msra.mxu0 0.0
    %1748 = vmatprep.subr.mxu0 0.0
    %1749 = vmatpush1.xpose.msra.mxu0 0.0
    %1750 = vmatprep.subr.mxu0 0.0
    %1751 = vmatpush1.xpose.msra.mxu0 %v1718
    %1752 = vmatprep.subr.mxu0 0.0
    %1753 = vmatpush2.xpose.msra.mxu0 0.0
    %1754 = vmatprep.subr.mxu0 0.0
    %1755 = vmatpush2.xpose.msra.mxu0 0.0
    %1756 = vmatprep.subr.mxu0 0.0
    %1757 = vmatpush2.xpose.msra.mxu0 0.0
    %1758 = vmatprep.subr.mxu0 0.0
    %1759 = vmatpush2.xpose.msra.mxu0 0.0
    %1760 = vmatprep.subr.mxu0 0.0
    %1761 = vmatpush2.xpose.msra.mxu0 0.0
    %1762 = vmatprep.subr.mxu0 0.0
    %1763 = vmatpush2.xpose.msra.mxu0 0.0
    %1764 = vmatprep.subr.mxu0 0.0
    %1765 = vmatpush2.xpose.msra.mxu0 0.0
    %1766 = vmatprep.subr.mxu0 0.0
    %1767 = vmatpush2.xpose.msra.mxu0 0.0
    %1768 = vmatprep.subr.mxu0 0.0
    %1769 = vmatpush2.xpose.msra.mxu0 0.0
    %1770 = vmatprep.subr.mxu0 0.0
    %1771 = vmatpush2.xpose.msra.mxu0 0.0
    %1772 = vmatprep.subr.mxu0 0.0
    %1773 = vmatpush2.xpose.msra.mxu0 0.0
    %1774 = vmatprep.subr.mxu0 0.0
    %1775 = vmatpush2.xpose.msra.mxu0 0.0
    %1776 = vmatprep.subr.mxu0 0.0
    %1777 = vmatpush2.xpose.msra.mxu0 0.0
    %1778 = vmatprep.subr.mxu0 0.0
    %1779 = vmatpush2.xpose.msra.mxu0 0.0
    %1780 = vmatprep.subr.mxu0 0.0
    %1781 = vmatpush2.xpose.msra.mxu0 0.0
    %1782 = vmatprep.subr.mxu0 0.0
    %1783 = vmatpush2.xpose.msra.mxu0 0.0
    %1784 = vmatprep.mubr.f32.mxu0 0.0
    %1785 = vmatmul.mubr.f32.gmra.mxu0 %v1715
    %v1786 = vpop.f32.mrf.mxu0
    %v1787 = vadd.f32 0.0, %v1786
    %v1788 = vpop.f32.mrf.mxu0
    %1789 = vdwg.mxu0
    %v1790 = vsel %vm315, -1e+09, %v1711
    %v1791 = vsel %vm316, -1e+09, %v1787
    %v1792 = vsel %vm471, %v1790, -inf
    %1793 = vmax.xlane.f32.xlu0 %v1792
    %v1794 = vpop.xlane.xlu0 %1793
    %v1795 = vsel %vm471, %v1791, -inf
    %1796 = vmax.xlane.f32.xlu0 %v1795
    %v1797 = vpop.xlane.xlu0 %1796
    %v1798 = vsub.f32 %v1790, %v1794
    %v1799 = vsub.f32 %v1791, %v1797
    %v1800 = vmul.f32 %v1798, 1.442695
    %v1801 = vpow.pop %v1800
    %v1802 = vmul.f32 %v1799, 1.442695
    %v1803 = vpow.pop %v1802
    %v1804 = vsel %vm471, %v1801, 0.0
    %1805 = vadd.xlane.f32.xlu0 %v1804
    %v1806 = vpop.xlane.xlu0 %1805
    %v1807 = vsel %vm471, %v1803, 0.0
    %1808 = vadd.xlane.f32.xlu0 %v1807
    %v1809 = vpop.xlane.xlu0 %1808
    %v1810 = vrcp.pop %v1806
    %v1811 = vrcp.pop %v1809
    %v1812 = vmul.f32 %v1801, %v1810
    %v1813 = vmul.f32 %v1803, %v1811
    %v1815 = vsel %vm471, %v1812, 0
    %1817 = vmatprep.subr.mxu0 0.0
    %1818 = vmatpush1.msra.mxu0 0.0
    %1819 = vmatprep.subr.mxu0 0.0
    %1820 = vmatpush1.msra.mxu0 0.0
    %1821 = vmatprep.subr.mxu0 0.0
    %1822 = vmatpush1.msra.mxu0 0.0
    %1823 = vmatprep.subr.mxu0 0.0
    %1824 = vmatpush1.msra.mxu0 0.0
    %1825 = vmatprep.subr.mxu0 0.0
    %1826 = vmatpush1.msra.mxu0 0.0
    %1827 = vmatprep.subr.mxu0 0.0
    %1828 = vmatpush1.msra.mxu0 0.0
    %1829 = vmatprep.subr.mxu0 0.0
    %1830 = vmatpush1.msra.mxu0 0.0
    %1831 = vmatprep.subr.mxu0 0.0
    %1832 = vmatpush1.msra.mxu0 0.0
    %1833 = vmatprep.subr.mxu0 0.0
    %1834 = vmatpush1.msra.mxu0 0.0
    %1835 = vmatprep.subr.mxu0 0.0
    %1836 = vmatpush1.msra.mxu0 0.0
    %1837 = vmatprep.subr.mxu0 0.0
    %1838 = vmatpush1.msra.mxu0 0.0
    %1839 = vmatprep.subr.mxu0 0.0
    %1840 = vmatpush1.msra.mxu0 0.0
    %1841 = vmatprep.subr.mxu0 0.0
    %1842 = vmatpush1.msra.mxu0 0.0
    %1843 = vmatprep.subr.mxu0 0.0
    %1844 = vmatpush1.msra.mxu0 0.0
    %1845 = vmatprep.subr.mxu0 0.0
    %1846 = vmatpush1.msra.mxu0 0.0
    %1847 = vmatprep.subr.mxu0 0.0
    %1848 = vmatpush1.msra.mxu0 %v301
    %1849 = vmatprep.subr.mxu0 0.0
    %1850 = vmatpush2.msra.mxu0 0.0
    %1851 = vmatprep.subr.mxu0 0.0
    %1852 = vmatpush2.msra.mxu0 0.0
    %1853 = vmatprep.subr.mxu0 0.0
    %1854 = vmatpush2.msra.mxu0 0.0
    %1855 = vmatprep.subr.mxu0 0.0
    %1856 = vmatpush2.msra.mxu0 0.0
    %1857 = vmatprep.subr.mxu0 0.0
    %1858 = vmatpush2.msra.mxu0 0.0
    %1859 = vmatprep.subr.mxu0 0.0
    %1860 = vmatpush2.msra.mxu0 0.0
    %1861 = vmatprep.subr.mxu0 0.0
    %1862 = vmatpush2.msra.mxu0 0.0
    %1863 = vmatprep.subr.mxu0 0.0
    %1864 = vmatpush2.msra.mxu0 0.0
    %1865 = vmatprep.subr.mxu0 0.0
    %1866 = vmatpush2.msra.mxu0 0.0
    %1867 = vmatprep.subr.mxu0 0.0
    %1868 = vmatpush2.msra.mxu0 0.0
    %1869 = vmatprep.subr.mxu0 0.0
    %1870 = vmatpush2.msra.mxu0 0.0
    %1871 = vmatprep.subr.mxu0 0.0
    %1872 = vmatpush2.msra.mxu0 0.0
    %1873 = vmatprep.subr.mxu0 0.0
    %1874 = vmatpush2.msra.mxu0 0.0
    %1875 = vmatprep.subr.mxu0 0.0
    %1876 = vmatpush2.msra.mxu0 0.0
    %1877 = vmatprep.subr.mxu0 0.0
    %1878 = vmatpush2.msra.mxu0 0.0
    %1879 = vmatprep.subr.mxu0 0.0
    %1880 = vmatpush2.msra.mxu0 0.0
    %1881 = vmatprep.mubr.f32.mxu0 0.0
    %1882 = vmatmul.mubr.f32.gmra.mxu0 %v1815
    %v1883 = vpop.f32.mrf.mxu0
    %v1884 = vadd.f32 0.0, %v1883
    %v1885 = vpop.f32.mrf.mxu0
    %1886 = vdwg.mxu0
    %v1888 = vsel %vm471, %v1813, 0
    %1890 = vmatprep.subr.mxu0 0.0
    %1891 = vmatpush1.msra.mxu0 0.0
    %1892 = vmatprep.subr.mxu0 0.0
    %1893 = vmatpush1.msra.mxu0 0.0
    %1894 = vmatprep.subr.mxu0 0.0
    %1895 = vmatpush1.msra.mxu0 0.0
    %1896 = vmatprep.subr.mxu0 0.0
    %1897 = vmatpush1.msra.mxu0 0.0
    %1898 = vmatprep.subr.mxu0 0.0
    %1899 = vmatpush1.msra.mxu0 0.0
    %1900 = vmatprep.subr.mxu0 0.0
    %1901 = vmatpush1.msra.mxu0 0.0
    %1902 = vmatprep.subr.mxu0 0.0
    %1903 = vmatpush1.msra.mxu0 0.0
    %1904 = vmatprep.subr.mxu0 0.0
    %1905 = vmatpush1.msra.mxu0 0.0
    %1906 = vmatprep.subr.mxu0 0.0
    %1907 = vmatpush1.msra.mxu0 0.0
    %1908 = vmatprep.subr.mxu0 0.0
    %1909 = vmatpush1.msra.mxu0 0.0
    %1910 = vmatprep.subr.mxu0 0.0
    %1911 = vmatpush1.msra.mxu0 0.0
    %1912 = vmatprep.subr.mxu0 0.0
    %1913 = vmatpush1.msra.mxu0 0.0
    %1914 = vmatprep.subr.mxu0 0.0
    %1915 = vmatpush1.msra.mxu0 0.0
    %1916 = vmatprep.subr.mxu0 0.0
    %1917 = vmatpush1.msra.mxu0 0.0
    %1918 = vmatprep.subr.mxu0 0.0
    %1919 = vmatpush1.msra.mxu0 0.0
    %1920 = vmatprep.subr.mxu0 0.0
    %1921 = vmatpush1.msra.mxu0 %v307
    %1922 = vmatprep.subr.mxu0 0.0
    %1923 = vmatpush2.msra.mxu0 0.0
    %1924 = vmatprep.subr.mxu0 0.0
    %1925 = vmatpush2.msra.mxu0 0.0
    %1926 = vmatprep.subr.mxu0 0.0
    %1927 = vmatpush2.msra.mxu0 0.0
    %1928 = vmatprep.subr.mxu0 0.0
    %1929 = vmatpush2.msra.mxu0 0.0
    %1930 = vmatprep.subr.mxu0 0.0
    %1931 = vmatpush2.msra.mxu0 0.0
    %1932 = vmatprep.subr.mxu0 0.0
    %1933 = vmatpush2.msra.mxu0 0.0
    %1934 = vmatprep.subr.mxu0 0.0
    %1935 = vmatpush2.msra.mxu0 0.0
    %1936 = vmatprep.subr.mxu0 0.0
    %1937 = vmatpush2.msra.mxu0 0.0
    %1938 = vmatprep.subr.mxu0 0.0
    %1939 = vmatpush2.msra.mxu0 0.0
    %1940 = vmatprep.subr.mxu0 0.0
    %1941 = vmatpush2.msra.mxu0 0.0
    %1942 = vmatprep.subr.mxu0 0.0
    %1943 = vmatpush2.msra.mxu0 0.0
    %1944 = vmatprep.subr.mxu0 0.0
    %1945 = vmatpush2.msra.mxu0 0.0
    %1946 = vmatprep.subr.mxu0 0.0
    %1947 = vmatpush2.msra.mxu0 0.0
    %1948 = vmatprep.subr.mxu0 0.0
    %1949 = vmatpush2.msra.mxu0 0.0
    %1950 = vmatprep.subr.mxu0 0.0
    %1951 = vmatpush2.msra.mxu0 0.0
    %1952 = vmatprep.subr.mxu0 0.0
    %1953 = vmatpush2.msra.mxu0 0.0
    %1954 = vmatprep.mubr.f32.mxu0 0.0
    %1955 = vmatmul.mubr.f32.gmra.mxu0 %v1888
    %v1956 = vpop.f32.mrf.mxu0
    %v1957 = vadd.f32 0.0, %v1956
    %v1958 = vpop.f32.mrf.mxu0
    %1959 = vdwg.mxu0
    %1960 = vrot.lane.b32.xlu0 %v310, 96
    %v1961 = vpop.permute.xlu0 %1960
    %1962 = vrot.lane.b32.xlu0 %v216, 96
    %v1963 = vpop.permute.xlu0 %1962
    %v1964 = vsel %vm55, %v1961, 0
    %v1966 = vsel %vm55, %v1963, 0
    %1968 = vmatprep.subr.mxu0 0.0
    %1969 = vmatpush1.xpose.msra.mxu0 0.0
    %1970 = vmatprep.subr.mxu0 0.0
    %1971 = vmatpush1.xpose.msra.mxu0 0.0
    %1972 = vmatprep.subr.mxu0 0.0
    %1973 = vmatpush1.xpose.msra.mxu0 0.0
    %1974 = vmatprep.subr.mxu0 0.0
    %1975 = vmatpush1.xpose.msra.mxu0 0.0
    %1976 = vmatprep.subr.mxu0 0.0
    %1977 = vmatpush1.xpose.msra.mxu0 0.0
    %1978 = vmatprep.subr.mxu0 0.0
    %1979 = vmatpush1.xpose.msra.mxu0 0.0
    %1980 = vmatprep.subr.mxu0 0.0
    %1981 = vmatpush1.xpose.msra.mxu0 0.0
    %1982 = vmatprep.subr.mxu0 0.0
    %1983 = vmatpush1.xpose.msra.mxu0 0.0
    %1984 = vmatprep.subr.mxu0 0.0
    %1985 = vmatpush1.xpose.msra.mxu0 0.0
    %1986 = vmatprep.subr.mxu0 0.0
    %1987 = vmatpush1.xpose.msra.mxu0 0.0
    %1988 = vmatprep.subr.mxu0 0.0
    %1989 = vmatpush1.xpose.msra.mxu0 0.0
    %1990 = vmatprep.subr.mxu0 0.0
    %1991 = vmatpush1.xpose.msra.mxu0 0.0
    %1992 = vmatprep.subr.mxu0 0.0
    %1993 = vmatpush1.xpose.msra.mxu0 0.0
    %1994 = vmatprep.subr.mxu0 0.0
    %1995 = vmatpush1.xpose.msra.mxu0 0.0
    %1996 = vmatprep.subr.mxu0 0.0
    %1997 = vmatpush1.xpose.msra.mxu0 0.0
    %1998 = vmatprep.subr.mxu0 0.0
    %1999 = vmatpush1.xpose.msra.mxu0 %v1966
    %2000 = vmatprep.subr.mxu0 0.0
    %2001 = vmatpush2.xpose.msra.mxu0 0.0
    %2002 = vmatprep.subr.mxu0 0.0
    %2003 = vmatpush2.xpose.msra.mxu0 0.0
    %2004 = vmatprep.subr.mxu0 0.0
    %2005 = vmatpush2.xpose.msra.mxu0 0.0
    %2006 = vmatprep.subr.mxu0 0.0
    %2007 = vmatpush2.xpose.msra.mxu0 0.0
    %2008 = vmatprep.subr.mxu0 0.0
    %2009 = vmatpush2.xpose.msra.mxu0 0.0
    %2010 = vmatprep.subr.mxu0 0.0
    %2011 = vmatpush2.xpose.msra.mxu0 0.0
    %2012 = vmatprep.subr.mxu0 0.0
    %2013 = vmatpush2.xpose.msra.mxu0 0.0
    %2014 = vmatprep.subr.mxu0 0.0
    %2015 = vmatpush2.xpose.msra.mxu0 0.0
    %2016 = vmatprep.subr.mxu0 0.0
    %2017 = vmatpush2.xpose.msra.mxu0 0.0
    %2018 = vmatprep.subr.mxu0 0.0
    %2019 = vmatpush2.xpose.msra.mxu0 0.0
    %2020 = vmatprep.subr.mxu0 0.0
    %2021 = vmatpush2.xpose.msra.mxu0 0.0
    %2022 = vmatprep.subr.mxu0 0.0
    %2023 = vmatpush2.xpose.msra.mxu0 0.0
    %2024 = vmatprep.subr.mxu0 0.0
    %2025 = vmatpush2.xpose.msra.mxu0 0.0
    %2026 = vmatprep.subr.mxu0 0.0
    %2027 = vmatpush2.xpose.msra.mxu0 0.0
    %2028 = vmatprep.subr.mxu0 0.0
    %2029 = vmatpush2.xpose.msra.mxu0 0.0
    %2030 = vmatprep.subr.mxu0 0.0
    %2031 = vmatpush2.xpose.msra.mxu0 0.0
    %2032 = vmatprep.mubr.f32.mxu0 0.0
    %2033 = vmatmul.mubr.f32.gmra.mxu0 %v1964
    %v2034 = vpop.f32.mrf.mxu0
    %v2035 = vadd.f32 0.0, %v2034
    %v2036 = vpop.f32.mrf.mxu0
    %2037 = vdwg.mxu0
    %2038 = vrot.lane.b32.xlu0 %v312, 96
    %v2039 = vpop.permute.xlu0 %2038
    %2040 = vrot.lane.b32.xlu0 %v222, 96
    %v2041 = vpop.permute.xlu0 %2040
    %v2042 = vsel %vm55, %v2039, 0
    %v2044 = vsel %vm55, %v2041, 0
    %2046 = vmatprep.subr.mxu0 0.0
    %2047 = vmatpush1.xpose.msra.mxu0 0.0
    %2048 = vmatprep.subr.mxu0 0.0
    %2049 = vmatpush1.xpose.msra.mxu0 0.0
    %2050 = vmatprep.subr.mxu0 0.0
    %2051 = vmatpush1.xpose.msra.mxu0 0.0
    %2052 = vmatprep.subr.mxu0 0.0
    %2053 = vmatpush1.xpose.msra.mxu0 0.0
    %2054 = vmatprep.subr.mxu0 0.0
    %2055 = vmatpush1.xpose.msra.mxu0 0.0
    %2056 = vmatprep.subr.mxu0 0.0
    %2057 = vmatpush1.xpose.msra.mxu0 0.0
    %2058 = vmatprep.subr.mxu0 0.0
    %2059 = vmatpush1.xpose.msra.mxu0 0.0
    %2060 = vmatprep.subr.mxu0 0.0
    %2061 = vmatpush1.xpose.msra.mxu0 0.0
    %2062 = vmatprep.subr.mxu0 0.0
    %2063 = vmatpush1.xpose.msra.mxu0 0.0
    %2064 = vmatprep.subr.mxu0 0.0
    %2065 = vmatpush1.xpose.msra.mxu0 0.0
    %2066 = vmatprep.subr.mxu0 0.0
    %2067 = vmatpush1.xpose.msra.mxu0 0.0
    %2068 = vmatprep.subr.mxu0 0.0
    %2069 = vmatpush1.xpose.msra.mxu0 0.0
    %2070 = vmatprep.subr.mxu0 0.0
    %2071 = vmatpush1.xpose.msra.mxu0 0.0
    %2072 = vmatprep.subr.mxu0 0.0
    %2073 = vmatpush1.xpose.msra.mxu0 0.0
    %2074 = vmatprep.subr.mxu0 0.0
    %2075 = vmatpush1.xpose.msra.mxu0 0.0
    %2076 = vmatprep.subr.mxu0 0.0
    %2077 = vmatpush1.xpose.msra.mxu0 %v2044
    %2078 = vmatprep.subr.mxu0 0.0
    %2079 = vmatpush2.xpose.msra.mxu0 0.0
    %2080 = vmatprep.subr.mxu0 0.0
    %2081 = vmatpush2.xpose.msra.mxu0 0.0
    %2082 = vmatprep.subr.mxu0 0.0
    %2083 = vmatpush2.xpose.msra.mxu0 0.0
    %2084 = vmatprep.subr.mxu0 0.0
    %2085 = vmatpush2.xpose.msra.mxu0 0.0
    %2086 = vmatprep.subr.mxu0 0.0
    %2087 = vmatpush2.xpose.msra.mxu0 0.0
    %2088 = vmatprep.subr.mxu0 0.0
    %2089 = vmatpush2.xpose.msra.mxu0 0.0
    %2090 = vmatprep.subr.mxu0 0.0
    %2091 = vmatpush2.xpose.msra.mxu0 0.0
    %2092 = vmatprep.subr.mxu0 0.0
    %2093 = vmatpush2.xpose.msra.mxu0 0.0
    %2094 = vmatprep.subr.mxu0 0.0
    %2095 = vmatpush2.xpose.msra.mxu0 0.0
    %2096 = vmatprep.subr.mxu0 0.0
    %2097 = vmatpush2.xpose.msra.mxu0 0.0
    %2098 = vmatprep.subr.mxu0 0.0
    %2099 = vmatpush2.xpose.msra.mxu0 0.0
    %2100 = vmatprep.subr.mxu0 0.0
    %2101 = vmatpush2.xpose.msra.mxu0 0.0
    %2102 = vmatprep.subr.mxu0 0.0
    %2103 = vmatpush2.xpose.msra.mxu0 0.0
    %2104 = vmatprep.subr.mxu0 0.0
    %2105 = vmatpush2.xpose.msra.mxu0 0.0
    %2106 = vmatprep.subr.mxu0 0.0
    %2107 = vmatpush2.xpose.msra.mxu0 0.0
    %2108 = vmatprep.subr.mxu0 0.0
    %2109 = vmatpush2.xpose.msra.mxu0 0.0
    %2110 = vmatprep.mubr.f32.mxu0 0.0
    %2111 = vmatmul.mubr.f32.gmra.mxu0 %v2042
    %v2112 = vpop.f32.mrf.mxu0
    %v2113 = vadd.f32 0.0, %v2112
    %v2114 = vpop.f32.mrf.mxu0
    %2115 = vdwg.mxu0
    %v2116 = vsel %vm315, -1e+09, %v2035
    %v2117 = vsel %vm316, -1e+09, %v2113
    %v2118 = vsel %vm471, %v2116, -inf
    %2119 = vmax.xlane.f32.xlu0 %v2118
    %v2120 = vpop.xlane.xlu0 %2119
    %v2121 = vsel %vm471, %v2117, -inf
    %2122 = vmax.xlane.f32.xlu0 %v2121
    %v2123 = vpop.xlane.xlu0 %2122
    %v2124 = vsub.f32 %v2116, %v2120
    %v2125 = vsub.f32 %v2117, %v2123
    %v2126 = vmul.f32 %v2124, 1.442695
    %v2127 = vpow.pop %v2126
    %v2128 = vmul.f32 %v2125, 1.442695
    %v2129 = vpow.pop %v2128
    %v2130 = vsel %vm471, %v2127, 0.0
    %2131 = vadd.xlane.f32.xlu0 %v2130
    %v2132 = vpop.xlane.xlu0 %2131
    %v2133 = vsel %vm471, %v2129, 0.0
    %2134 = vadd.xlane.f32.xlu0 %v2133
    %v2135 = vpop.xlane.xlu0 %2134
    %v2136 = vrcp.pop %v2132
    %v2137 = vrcp.pop %v2135
    %v2138 = vmul.f32 %v2127, %v2136
    %v2139 = vmul.f32 %v2129, %v2137
    %2141 = vrot.lane.b32.xlu0 %v301, 96
    %v2142 = vpop.permute.xlu0 %2141
    %v2145 = vsel %vm471, %v2138, 0
    %2147 = vmatprep.subr.mxu0 0.0
    %2148 = vmatpush1.msra.mxu0 0.0
    %2149 = vmatprep.subr.mxu0 0.0
    %2150 = vmatpush1.msra.mxu0 0.0
    %2151 = vmatprep.subr.mxu0 0.0
    %2152 = vmatpush1.msra.mxu0 0.0
    %2153 = vmatprep.subr.mxu0 0.0
    %2154 = vmatpush1.msra.mxu0 0.0
    %2155 = vmatprep.subr.mxu0 0.0
    %2156 = vmatpush1.msra.mxu0 0.0
    %2157 = vmatprep.subr.mxu0 0.0
    %2158 = vmatpush1.msra.mxu0 0.0
    %2159 = vmatprep.subr.mxu0 0.0
    %2160 = vmatpush1.msra.mxu0 0.0
    %2161 = vmatprep.subr.mxu0 0.0
    %2162 = vmatpush1.msra.mxu0 0.0
    %2163 = vmatprep.subr.mxu0 0.0
    %2164 = vmatpush1.msra.mxu0 0.0
    %2165 = vmatprep.subr.mxu0 0.0
    %2166 = vmatpush1.msra.mxu0 0.0
    %2167 = vmatprep.subr.mxu0 0.0
    %2168 = vmatpush1.msra.mxu0 0.0
    %2169 = vmatprep.subr.mxu0 0.0
    %2170 = vmatpush1.msra.mxu0 0.0
    %2171 = vmatprep.subr.mxu0 0.0
    %2172 = vmatpush1.msra.mxu0 0.0
    %2173 = vmatprep.subr.mxu0 0.0
    %2174 = vmatpush1.msra.mxu0 0.0
    %2175 = vmatprep.subr.mxu0 0.0
    %2176 = vmatpush1.msra.mxu0 0.0
    %2177 = vmatprep.subr.mxu0 0.0
    %2178 = vmatpush1.msra.mxu0 %v2142
    %2179 = vmatprep.subr.mxu0 0.0
    %2180 = vmatpush2.msra.mxu0 0.0
    %2181 = vmatprep.subr.mxu0 0.0
    %2182 = vmatpush2.msra.mxu0 0.0
    %2183 = vmatprep.subr.mxu0 0.0
    %2184 = vmatpush2.msra.mxu0 0.0
    %2185 = vmatprep.subr.mxu0 0.0
    %2186 = vmatpush2.msra.mxu0 0.0
    %2187 = vmatprep.subr.mxu0 0.0
    %2188 = vmatpush2.msra.mxu0 0.0
    %2189 = vmatprep.subr.mxu0 0.0
    %2190 = vmatpush2.msra.mxu0 0.0
    %2191 = vmatprep.subr.mxu0 0.0
    %2192 = vmatpush2.msra.mxu0 0.0
    %2193 = vmatprep.subr.mxu0 0.0
    %2194 = vmatpush2.msra.mxu0 0.0
    %2195 = vmatprep.subr.mxu0 0.0
    %2196 = vmatpush2.msra.mxu0 0.0
    %2197 = vmatprep.subr.mxu0 0.0
    %2198 = vmatpush2.msra.mxu0 0.0
    %2199 = vmatprep.subr.mxu0 0.0
    %2200 = vmatpush2.msra.mxu0 0.0
    %2201 = vmatprep.subr.mxu0 0.0
    %2202 = vmatpush2.msra.mxu0 0.0
    %2203 = vmatprep.subr.mxu0 0.0
    %2204 = vmatpush2.msra.mxu0 0.0
    %2205 = vmatprep.subr.mxu0 0.0
    %2206 = vmatpush2.msra.mxu0 0.0
    %2207 = vmatprep.subr.mxu0 0.0
    %2208 = vmatpush2.msra.mxu0 0.0
    %2209 = vmatprep.subr.mxu0 0.0
    %2210 = vmatpush2.msra.mxu0 0.0
    %2211 = vmatprep.mubr.f32.mxu0 0.0
    %2212 = vmatmul.mubr.f32.gmra.mxu0 %v2145
    %v2213 = vpop.f32.mrf.mxu0
    %v2214 = vadd.f32 0.0, %v2213
    %v2215 = vpop.f32.mrf.mxu0
    %2216 = vdwg.mxu0
    %2218 = vrot.lane.b32.xlu0 %v307, 96
    %v2219 = vpop.permute.xlu0 %2218
    %v2222 = vsel %vm471, %v2139, 0
    %2224 = vmatprep.subr.mxu0 0.0
    %2225 = vmatpush1.msra.mxu0 0.0
    %2226 = vmatprep.subr.mxu0 0.0
    %2227 = vmatpush1.msra.mxu0 0.0
    %2228 = vmatprep.subr.mxu0 0.0
    %2229 = vmatpush1.msra.mxu0 0.0
    %2230 = vmatprep.subr.mxu0 0.0
    %2231 = vmatpush1.msra.mxu0 0.0
    %2232 = vmatprep.subr.mxu0 0.0
    %2233 = vmatpush1.msra.mxu0 0.0
    %2234 = vmatprep.subr.mxu0 0.0
    %2235 = vmatpush1.msra.mxu0 0.0
    %2236 = vmatprep.subr.mxu0 0.0
    %2237 = vmatpush1.msra.mxu0 0.0
    %2238 = vmatprep.subr.mxu0 0.0
    %2239 = vmatpush1.msra.mxu0 0.0
    %2240 = vmatprep.subr.mxu0 0.0
    %2241 = vmatpush1.msra.mxu0 0.0
    %2242 = vmatprep.subr.mxu0 0.0
    %2243 = vmatpush1.msra.mxu0 0.0
    %2244 = vmatprep.subr.mxu0 0.0
    %2245 = vmatpush1.msra.mxu0 0.0
    %2246 = vmatprep.subr.mxu0 0.0
    %2247 = vmatpush1.msra.mxu0 0.0
    %2248 = vmatprep.subr.mxu0 0.0
    %2249 = vmatpush1.msra.mxu0 0.0
    %2250 = vmatprep.subr.mxu0 0.0
    %2251 = vmatpush1.msra.mxu0 0.0
    %2252 = vmatprep.subr.mxu0 0.0
    %2253 = vmatpush1.msra.mxu0 0.0
    %2254 = vmatprep.subr.mxu0 0.0
    %2255 = vmatpush1.msra.mxu0 %v2219
    %2256 = vmatprep.subr.mxu0 0.0
    %2257 = vmatpush2.msra.mxu0 0.0
    %2258 = vmatprep.subr.mxu0 0.0
    %2259 = vmatpush2.msra.mxu0 0.0
    %2260 = vmatprep.subr.mxu0 0.0
    %2261 = vmatpush2.msra.mxu0 0.0
    %2262 = vmatprep.subr.mxu0 0.0
    %2263 = vmatpush2.msra.mxu0 0.0
    %2264 = vmatprep.subr.mxu0 0.0
    %2265 = vmatpush2.msra.mxu0 0.0
    %2266 = vmatprep.subr.mxu0 0.0
    %2267 = vmatpush2.msra.mxu0 0.0
    %2268 = vmatprep.subr.mxu0 0.0
    %2269 = vmatpush2.msra.mxu0 0.0
    %2270 = vmatprep.subr.mxu0 0.0
    %2271 = vmatpush2.msra.mxu0 0.0
    %2272 = vmatprep.subr.mxu0 0.0
    %2273 = vmatpush2.msra.mxu0 0.0
    %2274 = vmatprep.subr.mxu0 0.0
    %2275 = vmatpush2.msra.mxu0 0.0
    %2276 = vmatprep.subr.mxu0 0.0
    %2277 = vmatpush2.msra.mxu0 0.0
    %2278 = vmatprep.subr.mxu0 0.0
    %2279 = vmatpush2.msra.mxu0 0.0
    %2280 = vmatprep.subr.mxu0 0.0
    %2281 = vmatpush2.msra.mxu0 0.0
    %2282 = vmatprep.subr.mxu0 0.0
    %2283 = vmatpush2.msra.mxu0 0.0
    %2284 = vmatprep.subr.mxu0 0.0
    %2285 = vmatpush2.msra.mxu0 0.0
    %2286 = vmatprep.subr.mxu0 0.0
    %2287 = vmatpush2.msra.mxu0 0.0
    %2288 = vmatprep.mubr.f32.mxu0 0.0
    %2289 = vmatmul.mubr.f32.gmra.mxu0 %v2222
    %v2290 = vpop.f32.mrf.mxu0
    %v2291 = vadd.f32 0.0, %v2290
    %v2292 = vpop.f32.mrf.mxu0
    %2293 = vdwg.mxu0
    %2294 = vrot.lane.b32.xlu0 %v310, 64
    %v2295 = vpop.permute.xlu0 %2294
    %2296 = vrot.lane.b32.xlu0 %v216, 64
    %v2297 = vpop.permute.xlu0 %2296
    %v2298 = vsel %vm55, %v2295, 0
    %v2300 = vsel %vm55, %v2297, 0
    %2302 = vmatprep.subr.mxu0 0.0
    %2303 = vmatpush1.xpose.msra.mxu0 0.0
    %2304 = vmatprep.subr.mxu0 0.0
    %2305 = vmatpush1.xpose.msra.mxu0 0.0
    %2306 = vmatprep.subr.mxu0 0.0
    %2307 = vmatpush1.xpose.msra.mxu0 0.0
    %2308 = vmatprep.subr.mxu0 0.0
    %2309 = vmatpush1.xpose.msra.mxu0 0.0
    %2310 = vmatprep.subr.mxu0 0.0
    %2311 = vmatpush1.xpose.msra.mxu0 0.0
    %2312 = vmatprep.subr.mxu0 0.0
    %2313 = vmatpush1.xpose.msra.mxu0 0.0
    %2314 = vmatprep.subr.mxu0 0.0
    %2315 = vmatpush1.xpose.msra.mxu0 0.0
    %2316 = vmatprep.subr.mxu0 0.0
    %2317 = vmatpush1.xpose.msra.mxu0 0.0
    %2318 = vmatprep.subr.mxu0 0.0
    %2319 = vmatpush1.xpose.msra.mxu0 0.0
    %2320 = vmatprep.subr.mxu0 0.0
    %2321 = vmatpush1.xpose.msra.mxu0 0.0
    %2322 = vmatprep.subr.mxu0 0.0
    %2323 = vmatpush1.xpose.msra.mxu0 0.0
    %2324 = vmatprep.subr.mxu0 0.0
    %2325 = vmatpush1.xpose.msra.mxu0 0.0
    %2326 = vmatprep.subr.mxu0 0.0
    %2327 = vmatpush1.xpose.msra.mxu0 0.0
    %2328 = vmatprep.subr.mxu0 0.0
    %2329 = vmatpush1.xpose.msra.mxu0 0.0
    %2330 = vmatprep.subr.mxu0 0.0
    %2331 = vmatpush1.xpose.msra.mxu0 0.0
    %2332 = vmatprep.subr.mxu0 0.0
    %2333 = vmatpush1.xpose.msra.mxu0 %v2300
    %2334 = vmatprep.subr.mxu0 0.0
    %2335 = vmatpush2.xpose.msra.mxu0 0.0
    %2336 = vmatprep.subr.mxu0 0.0
    %2337 = vmatpush2.xpose.msra.mxu0 0.0
    %2338 = vmatprep.subr.mxu0 0.0
    %2339 = vmatpush2.xpose.msra.mxu0 0.0
    %2340 = vmatprep.subr.mxu0 0.0
    %2341 = vmatpush2.xpose.msra.mxu0 0.0
    %2342 = vmatprep.subr.mxu0 0.0
    %2343 = vmatpush2.xpose.msra.mxu0 0.0
    %2344 = vmatprep.subr.mxu0 0.0
    %2345 = vmatpush2.xpose.msra.mxu0 0.0
    %2346 = vmatprep.subr.mxu0 0.0
    %2347 = vmatpush2.xpose.msra.mxu0 0.0
    %2348 = vmatprep.subr.mxu0 0.0
    %2349 = vmatpush2.xpose.msra.mxu0 0.0
    %2350 = vmatprep.subr.mxu0 0.0
    %2351 = vmatpush2.xpose.msra.mxu0 0.0
    %2352 = vmatprep.subr.mxu0 0.0
    %2353 = vmatpush2.xpose.msra.mxu0 0.0
    %2354 = vmatprep.subr.mxu0 0.0
    %2355 = vmatpush2.xpose.msra.mxu0 0.0
    %2356 = vmatprep.subr.mxu0 0.0
    %2357 = vmatpush2.xpose.msra.mxu0 0.0
    %2358 = vmatprep.subr.mxu0 0.0
    %2359 = vmatpush2.xpose.msra.mxu0 0.0
    %2360 = vmatprep.subr.mxu0 0.0
    %2361 = vmatpush2.xpose.msra.mxu0 0.0
    %2362 = vmatprep.subr.mxu0 0.0
    %2363 = vmatpush2.xpose.msra.mxu0 0.0
    %2364 = vmatprep.subr.mxu0 0.0
    %2365 = vmatpush2.xpose.msra.mxu0 0.0
    %2366 = vmatprep.mubr.f32.mxu0 0.0
    %2367 = vmatmul.mubr.f32.gmra.mxu0 %v2298
    %v2368 = vpop.f32.mrf.mxu0
    %v2369 = vadd.f32 0.0, %v2368
    %v2370 = vpop.f32.mrf.mxu0
    %2371 = vdwg.mxu0
    %2372 = vrot.lane.b32.xlu0 %v312, 64
    %v2373 = vpop.permute.xlu0 %2372
    %2374 = vrot.lane.b32.xlu0 %v222, 64
    %v2375 = vpop.permute.xlu0 %2374
    %v2376 = vsel %vm55, %v2373, 0
    %v2378 = vsel %vm55, %v2375, 0
    %2380 = vmatprep.subr.mxu0 0.0
    %2381 = vmatpush1.xpose.msra.mxu0 0.0
    %2382 = vmatprep.subr.mxu0 0.0
    %2383 = vmatpush1.xpose.msra.mxu0 0.0
    %2384 = vmatprep.subr.mxu0 0.0
    %2385 = vmatpush1.xpose.msra.mxu0 0.0
    %2386 = vmatprep.subr.mxu0 0.0
    %2387 = vmatpush1.xpose.msra.mxu0 0.0
    %2388 = vmatprep.subr.mxu0 0.0
    %2389 = vmatpush1.xpose.msra.mxu0 0.0
    %2390 = vmatprep.subr.mxu0 0.0
    %2391 = vmatpush1.xpose.msra.mxu0 0.0
    %2392 = vmatprep.subr.mxu0 0.0
    %2393 = vmatpush1.xpose.msra.mxu0 0.0
    %2394 = vmatprep.subr.mxu0 0.0
    %2395 = vmatpush1.xpose.msra.mxu0 0.0
    %2396 = vmatprep.subr.mxu0 0.0
    %2397 = vmatpush1.xpose.msra.mxu0 0.0
    %2398 = vmatprep.subr.mxu0 0.0
    %2399 = vmatpush1.xpose.msra.mxu0 0.0
    %2400 = vmatprep.subr.mxu0 0.0
    %2401 = vmatpush1.xpose.msra.mxu0 0.0
    %2402 = vmatprep.subr.mxu0 0.0
    %2403 = vmatpush1.xpose.msra.mxu0 0.0
    %2404 = vmatprep.subr.mxu0 0.0
    %2405 = vmatpush1.xpose.msra.mxu0 0.0
    %2406 = vmatprep.subr.mxu0 0.0
    %2407 = vmatpush1.xpose.msra.mxu0 0.0
    %2408 = vmatprep.subr.mxu0 0.0
    %2409 = vmatpush1.xpose.msra.mxu0 0.0
    %2410 = vmatprep.subr.mxu0 0.0
    %2411 = vmatpush1.xpose.msra.mxu0 %v2378
    %2412 = vmatprep.subr.mxu0 0.0
    %2413 = vmatpush2.xpose.msra.mxu0 0.0
    %2414 = vmatprep.subr.mxu0 0.0
    %2415 = vmatpush2.xpose.msra.mxu0 0.0
    %2416 = vmatprep.subr.mxu0 0.0
    %2417 = vmatpush2.xpose.msra.mxu0 0.0
    %2418 = vmatprep.subr.mxu0 0.0
    %2419 = vmatpush2.xpose.msra.mxu0 0.0
    %2420 = vmatprep.subr.mxu0 0.0
    %2421 = vmatpush2.xpose.msra.mxu0 0.0
    %2422 = vmatprep.subr.mxu0 0.0
    %2423 = vmatpush2.xpose.msra.mxu0 0.0
    %2424 = vmatprep.subr.mxu0 0.0
    %2425 = vmatpush2.xpose.msra.mxu0 0.0
    %2426 = vmatprep.subr.mxu0 0.0
    %2427 = vmatpush2.xpose.msra.mxu0 0.0
    %2428 = vmatprep.subr.mxu0 0.0
    %2429 = vmatpush2.xpose.msra.mxu0 0.0
    %2430 = vmatprep.subr.mxu0 0.0
    %2431 = vmatpush2.xpose.msra.mxu0 0.0
    %2432 = vmatprep.subr.mxu0 0.0
    %2433 = vmatpush2.xpose.msra.mxu0 0.0
    %2434 = vmatprep.subr.mxu0 0.0
    %2435 = vmatpush2.xpose.msra.mxu0 0.0
    %2436 = vmatprep.subr.mxu0 0.0
    %2437 = vmatpush2.xpose.msra.mxu0 0.0
    %2438 = vmatprep.subr.mxu0 0.0
    %2439 = vmatpush2.xpose.msra.mxu0 0.0
    %2440 = vmatprep.subr.mxu0 0.0
    %2441 = vmatpush2.xpose.msra.mxu0 0.0
    %2442 = vmatprep.subr.mxu0 0.0
    %2443 = vmatpush2.xpose.msra.mxu0 0.0
    %2444 = vmatprep.mubr.f32.mxu0 0.0
    %2445 = vmatmul.mubr.f32.gmra.mxu0 %v2376
    %v2446 = vpop.f32.mrf.mxu0
    %v2447 = vadd.f32 0.0, %v2446
    %v2448 = vpop.f32.mrf.mxu0
    %2449 = vdwg.mxu0
    %v2450 = vsel %vm315, -1e+09, %v2369
    %v2451 = vsel %vm316, -1e+09, %v2447
    %v2452 = vsel %vm471, %v2450, -inf
    %2453 = vmax.xlane.f32.xlu0 %v2452
    %v2454 = vpop.xlane.xlu0 %2453
    %v2455 = vsel %vm471, %v2451, -inf
    %2456 = vmax.xlane.f32.xlu0 %v2455
    %v2457 = vpop.xlane.xlu0 %2456
    %v2458 = vsub.f32 %v2450, %v2454
    %v2459 = vsub.f32 %v2451, %v2457
    %v2460 = vmul.f32 %v2458, 1.442695
    %v2461 = vpow.pop %v2460
    %v2462 = vmul.f32 %v2459, 1.442695
    %v2463 = vpow.pop %v2462
    %v2464 = vsel %vm471, %v2461, 0.0
    %2465 = vadd.xlane.f32.xlu0 %v2464
    %v2466 = vpop.xlane.xlu0 %2465
    %v2467 = vsel %vm471, %v2463, 0.0
    %2468 = vadd.xlane.f32.xlu0 %v2467
    %v2469 = vpop.xlane.xlu0 %2468
    %v2470 = vrcp.pop %v2466
    %v2471 = vrcp.pop %v2469
    %v2472 = vmul.f32 %v2461, %v2470
    %v2473 = vmul.f32 %v2463, %v2471
    %2474 = vrot.lane.b32.xlu0 %v301, 64
    %v2475 = vpop.permute.xlu0 %2474
    %v2478 = vsel %vm471, %v2472, 0
    %2480 = vmatprep.subr.mxu0 0.0
    %2481 = vmatpush1.msra.mxu0 0.0
    %2482 = vmatprep.subr.mxu0 0.0
    %2483 = vmatpush1.msra.mxu0 0.0
    %2484 = vmatprep.subr.mxu0 0.0
    %2485 = vmatpush1.msra.mxu0 0.0
    %2486 = vmatprep.subr.mxu0 0.0
    %2487 = vmatpush1.msra.mxu0 0.0
    %2488 = vmatprep.subr.mxu0 0.0
    %2489 = vmatpush1.msra.mxu0 0.0
    %2490 = vmatprep.subr.mxu0 0.0
    %2491 = vmatpush1.msra.mxu0 0.0
    %2492 = vmatprep.subr.mxu0 0.0
    %2493 = vmatpush1.msra.mxu0 0.0
    %2494 = vmatprep.subr.mxu0 0.0
    %2495 = vmatpush1.msra.mxu0 0.0
    %2496 = vmatprep.subr.mxu0 0.0
    %2497 = vmatpush1.msra.mxu0 0.0
    %2498 = vmatprep.subr.mxu0 0.0
    %2499 = vmatpush1.msra.mxu0 0.0
    %2500 = vmatprep.subr.mxu0 0.0
    %2501 = vmatpush1.msra.mxu0 0.0
    %2502 = vmatprep.subr.mxu0 0.0
    %2503 = vmatpush1.msra.mxu0 0.0
    %2504 = vmatprep.subr.mxu0 0.0
    %2505 = vmatpush1.msra.mxu0 0.0
    %2506 = vmatprep.subr.mxu0 0.0
    %2507 = vmatpush1.msra.mxu0 0.0
    %2508 = vmatprep.subr.mxu0 0.0
    %2509 = vmatpush1.msra.mxu0 0.0
    %2510 = vmatprep.subr.mxu0 0.0
    %2511 = vmatpush1.msra.mxu0 %v2475
    %2512 = vmatprep.subr.mxu0 0.0
    %2513 = vmatpush2.msra.mxu0 0.0
    %2514 = vmatprep.subr.mxu0 0.0
    %2515 = vmatpush2.msra.mxu0 0.0
    %2516 = vmatprep.subr.mxu0 0.0
    %2517 = vmatpush2.msra.mxu0 0.0
    %2518 = vmatprep.subr.mxu0 0.0
    %2519 = vmatpush2.msra.mxu0 0.0
    %2520 = vmatprep.subr.mxu0 0.0
    %2521 = vmatpush2.msra.mxu0 0.0
    %2522 = vmatprep.subr.mxu0 0.0
    %2523 = vmatpush2.msra.mxu0 0.0
    %2524 = vmatprep.subr.mxu0 0.0
    %2525 = vmatpush2.msra.mxu0 0.0
    %2526 = vmatprep.subr.mxu0 0.0
    %2527 = vmatpush2.msra.mxu0 0.0
    %2528 = vmatprep.subr.mxu0 0.0
    %2529 = vmatpush2.msra.mxu0 0.0
    %2530 = vmatprep.subr.mxu0 0.0
    %2531 = vmatpush2.msra.mxu0 0.0
    %2532 = vmatprep.subr.mxu0 0.0
    %2533 = vmatpush2.msra.mxu0 0.0
    %2534 = vmatprep.subr.mxu0 0.0
    %2535 = vmatpush2.msra.mxu0 0.0
    %2536 = vmatprep.subr.mxu0 0.0
    %2537 = vmatpush2.msra.mxu0 0.0
    %2538 = vmatprep.subr.mxu0 0.0
    %2539 = vmatpush2.msra.mxu0 0.0
    %2540 = vmatprep.subr.mxu0 0.0
    %2541 = vmatpush2.msra.mxu0 0.0
    %2542 = vmatprep.subr.mxu0 0.0
    %2543 = vmatpush2.msra.mxu0 0.0
    %2544 = vmatprep.mubr.f32.mxu0 0.0
    %2545 = vmatmul.mubr.f32.gmra.mxu0 %v2478
    %v2546 = vpop.f32.mrf.mxu0
    %v2547 = vadd.f32 0.0, %v2546
    %v2548 = vpop.f32.mrf.mxu0
    %2549 = vdwg.mxu0
    %2550 = vrot.lane.b32.xlu0 %v307, 64
    %v2551 = vpop.permute.xlu0 %2550
    %v2554 = vsel %vm471, %v2473, 0
    %2556 = vmatprep.subr.mxu0 0.0
    %2557 = vmatpush1.msra.mxu0 0.0
    %2558 = vmatprep.subr.mxu0 0.0
    %2559 = vmatpush1.msra.mxu0 0.0
    %2560 = vmatprep.subr.mxu0 0.0
    %2561 = vmatpush1.msra.mxu0 0.0
    %2562 = vmatprep.subr.mxu0 0.0
    %2563 = vmatpush1.msra.mxu0 0.0
    %2564 = vmatprep.subr.mxu0 0.0
    %2565 = vmatpush1.msra.mxu0 0.0
    %2566 = vmatprep.subr.mxu0 0.0
    %2567 = vmatpush1.msra.mxu0 0.0
    %2568 = vmatprep.subr.mxu0 0.0
    %2569 = vmatpush1.msra.mxu0 0.0
    %2570 = vmatprep.subr.mxu0 0.0
    %2571 = vmatpush1.msra.mxu0 0.0
    %2572 = vmatprep.subr.mxu0 0.0
    %2573 = vmatpush1.msra.mxu0 0.0
    %2574 = vmatprep.subr.mxu0 0.0
    %2575 = vmatpush1.msra.mxu0 0.0
    %2576 = vmatprep.subr.mxu0 0.0
    %2577 = vmatpush1.msra.mxu0 0.0
    %2578 = vmatprep.subr.mxu0 0.0
    %2579 = vmatpush1.msra.mxu0 0.0
    %2580 = vmatprep.subr.mxu0 0.0
    %2581 = vmatpush1.msra.mxu0 0.0
    %2582 = vmatprep.subr.mxu0 0.0
    %2583 = vmatpush1.msra.mxu0 0.0
    %2584 = vmatprep.subr.mxu0 0.0
    %2585 = vmatpush1.msra.mxu0 0.0
    %2586 = vmatprep.subr.mxu0 0.0
    %2587 = vmatpush1.msra.mxu0 %v2551
    %2588 = vmatprep.subr.mxu0 0.0
    %2589 = vmatpush2.msra.mxu0 0.0
    %2590 = vmatprep.subr.mxu0 0.0
    %2591 = vmatpush2.msra.mxu0 0.0
    %2592 = vmatprep.subr.mxu0 0.0
    %2593 = vmatpush2.msra.mxu0 0.0
    %2594 = vmatprep.subr.mxu0 0.0
    %2595 = vmatpush2.msra.mxu0 0.0
    %2596 = vmatprep.subr.mxu0 0.0
    %2597 = vmatpush2.msra.mxu0 0.0
    %2598 = vmatprep.subr.mxu0 0.0
    %2599 = vmatpush2.msra.mxu0 0.0
    %2600 = vmatprep.subr.mxu0 0.0
    %2601 = vmatpush2.msra.mxu0 0.0
    %2602 = vmatprep.subr.mxu0 0.0
    %2603 = vmatpush2.msra.mxu0 0.0
    %2604 = vmatprep.subr.mxu0 0.0
    %2605 = vmatpush2.msra.mxu0 0.0
    %2606 = vmatprep.subr.mxu0 0.0
    %2607 = vmatpush2.msra.mxu0 0.0
    %2608 = vmatprep.subr.mxu0 0.0
    %2609 = vmatpush2.msra.mxu0 0.0
    %2610 = vmatprep.subr.mxu0 0.0
    %2611 = vmatpush2.msra.mxu0 0.0
    %2612 = vmatprep.subr.mxu0 0.0
    %2613 = vmatpush2.msra.mxu0 0.0
    %2614 = vmatprep.subr.mxu0 0.0
    %2615 = vmatpush2.msra.mxu0 0.0
    %2616 = vmatprep.subr.mxu0 0.0
    %2617 = vmatpush2.msra.mxu0 0.0
    %2618 = vmatprep.subr.mxu0 0.0
    %2619 = vmatpush2.msra.mxu0 0.0
    %2620 = vmatprep.mubr.f32.mxu0 0.0
    %2621 = vmatmul.mubr.f32.gmra.mxu0 %v2554
    %v2622 = vpop.f32.mrf.mxu0
    %v2623 = vadd.f32 0.0, %v2622
    %v2624 = vpop.f32.mrf.mxu0
    %2625 = vdwg.mxu0
    %2626 = vrot.lane.b32.xlu0 %v310, 32
    %v2627 = vpop.permute.xlu0 %2626
    %2628 = vrot.lane.b32.xlu0 %v216, 32
    %v2629 = vpop.permute.xlu0 %2628
    %v2630 = vsel %vm55, %v2627, 0
    %v2632 = vsel %vm55, %v2629, 0
    %2634 = vmatprep.subr.mxu0 0.0
    %2635 = vmatpush1.xpose.msra.mxu0 0.0
    %2636 = vmatprep.subr.mxu0 0.0
    %2637 = vmatpush1.xpose.msra.mxu0 0.0
    %2638 = vmatprep.subr.mxu0 0.0
    %2639 = vmatpush1.xpose.msra.mxu0 0.0
    %2640 = vmatprep.subr.mxu0 0.0
    %2641 = vmatpush1.xpose.msra.mxu0 0.0
    %2642 = vmatprep.subr.mxu0 0.0
    %2643 = vmatpush1.xpose.msra.mxu0 0.0
    %2644 = vmatprep.subr.mxu0 0.0
    %2645 = vmatpush1.xpose.msra.mxu0 0.0
    %2646 = vmatprep.subr.mxu0 0.0
    %2647 = vmatpush1.xpose.msra.mxu0 0.0
    %2648 = vmatprep.subr.mxu0 0.0
    %2649 = vmatpush1.xpose.msra.mxu0 0.0
    %2650 = vmatprep.subr.mxu0 0.0
    %2651 = vmatpush1.xpose.msra.mxu0 0.0
    %2652 = vmatprep.subr.mxu0 0.0
    %2653 = vmatpush1.xpose.msra.mxu0 0.0
    %2654 = vmatprep.subr.mxu0 0.0
    %2655 = vmatpush1.xpose.msra.mxu0 0.0
    %2656 = vmatprep.subr.mxu0 0.0
    %2657 = vmatpush1.xpose.msra.mxu0 0.0
    %2658 = vmatprep.subr.mxu0 0.0
    %2659 = vmatpush1.xpose.msra.mxu0 0.0
    %2660 = vmatprep.subr.mxu0 0.0
    %2661 = vmatpush1.xpose.msra.mxu0 0.0
    %2662 = vmatprep.subr.mxu0 0.0
    %2663 = vmatpush1.xpose.msra.mxu0 0.0
    %2664 = vmatprep.subr.mxu0 0.0
    %2665 = vmatpush1.xpose.msra.mxu0 %v2632
    %2666 = vmatprep.subr.mxu0 0.0
    %2667 = vmatpush2.xpose.msra.mxu0 0.0
    %2668 = vmatprep.subr.mxu0 0.0
    %2669 = vmatpush2.xpose.msra.mxu0 0.0
    %2670 = vmatprep.subr.mxu0 0.0
    %2671 = vmatpush2.xpose.msra.mxu0 0.0
    %2672 = vmatprep.subr.mxu0 0.0
    %2673 = vmatpush2.xpose.msra.mxu0 0.0
    %2674 = vmatprep.subr.mxu0 0.0
    %2675 = vmatpush2.xpose.msra.mxu0 0.0
    %2676 = vmatprep.subr.mxu0 0.0
    %2677 = vmatpush2.xpose.msra.mxu0 0.0
    %2678 = vmatprep.subr.mxu0 0.0
    %2679 = vmatpush2.xpose.msra.mxu0 0.0
    %2680 = vmatprep.subr.mxu0 0.0
    %2681 = vmatpush2.xpose.msra.mxu0 0.0
    %2682 = vmatprep.subr.mxu0 0.0
    %2683 = vmatpush2.xpose.msra.mxu0 0.0
    %2684 = vmatprep.subr.mxu0 0.0
    %2685 = vmatpush2.xpose.msra.mxu0 0.0
    %2686 = vmatprep.subr.mxu0 0.0
    %2687 = vmatpush2.xpose.msra.mxu0 0.0
    %2688 = vmatprep.subr.mxu0 0.0
    %2689 = vmatpush2.xpose.msra.mxu0 0.0
    %2690 = vmatprep.subr.mxu0 0.0
    %2691 = vmatpush2.xpose.msra.mxu0 0.0
    %2692 = vmatprep.subr.mxu0 0.0
    %2693 = vmatpush2.xpose.msra.mxu0 0.0
    %2694 = vmatprep.subr.mxu0 0.0
    %2695 = vmatpush2.xpose.msra.mxu0 0.0
    %2696 = vmatprep.subr.mxu0 0.0
    %2697 = vmatpush2.xpose.msra.mxu0 0.0
    %2698 = vmatprep.mubr.f32.mxu0 0.0
    %2699 = vmatmul.mubr.f32.gmra.mxu0 %v2630
    %v2700 = vpop.f32.mrf.mxu0
    %v2701 = vadd.f32 0.0, %v2700
    %v2702 = vpop.f32.mrf.mxu0
    %2703 = vdwg.mxu0
    %2704 = vrot.lane.b32.xlu0 %v312, 32
    %v2705 = vpop.permute.xlu0 %2704
    %2706 = vrot.lane.b32.xlu0 %v222, 32
    %v2707 = vpop.permute.xlu0 %2706
    %v2708 = vsel %vm55, %v2705, 0
    %v2710 = vsel %vm55, %v2707, 0
    %2712 = vmatprep.subr.mxu0 0.0
    %2713 = vmatpush1.xpose.msra.mxu0 0.0
    %2714 = vmatprep.subr.mxu0 0.0
    %2715 = vmatpush1.xpose.msra.mxu0 0.0
    %2716 = vmatprep.subr.mxu0 0.0
    %2717 = vmatpush1.xpose.msra.mxu0 0.0
    %2718 = vmatprep.subr.mxu0 0.0
    %2719 = vmatpush1.xpose.msra.mxu0 0.0
    %2720 = vmatprep.subr.mxu0 0.0
    %2721 = vmatpush1.xpose.msra.mxu0 0.0
    %2722 = vmatprep.subr.mxu0 0.0
    %2723 = vmatpush1.xpose.msra.mxu0 0.0
    %2724 = vmatprep.subr.mxu0 0.0
    %2725 = vmatpush1.xpose.msra.mxu0 0.0
    %2726 = vmatprep.subr.mxu0 0.0
    %2727 = vmatpush1.xpose.msra.mxu0 0.0
    %2728 = vmatprep.subr.mxu0 0.0
    %2729 = vmatpush1.xpose.msra.mxu0 0.0
    %2730 = vmatprep.subr.mxu0 0.0
    %2731 = vmatpush1.xpose.msra.mxu0 0.0
    %2732 = vmatprep.subr.mxu0 0.0
    %2733 = vmatpush1.xpose.msra.mxu0 0.0
    %2734 = vmatprep.subr.mxu0 0.0
    %2735 = vmatpush1.xpose.msra.mxu0 0.0
    %2736 = vmatprep.subr.mxu0 0.0
    %2737 = vmatpush1.xpose.msra.mxu0 0.0
    %2738 = vmatprep.subr.mxu0 0.0
    %2739 = vmatpush1.xpose.msra.mxu0 0.0
    %2740 = vmatprep.subr.mxu0 0.0
    %2741 = vmatpush1.xpose.msra.mxu0 0.0
    %2742 = vmatprep.subr.mxu0 0.0
    %2743 = vmatpush1.xpose.msra.mxu0 %v2710
    %2744 = vmatprep.subr.mxu0 0.0
    %2745 = vmatpush2.xpose.msra.mxu0 0.0
    %2746 = vmatprep.subr.mxu0 0.0
    %2747 = vmatpush2.xpose.msra.mxu0 0.0
    %2748 = vmatprep.subr.mxu0 0.0
    %2749 = vmatpush2.xpose.msra.mxu0 0.0
    %2750 = vmatprep.subr.mxu0 0.0
    %2751 = vmatpush2.xpose.msra.mxu0 0.0
    %2752 = vmatprep.subr.mxu0 0.0
    %2753 = vmatpush2.xpose.msra.mxu0 0.0
    %2754 = vmatprep.subr.mxu0 0.0
    %2755 = vmatpush2.xpose.msra.mxu0 0.0
    %2756 = vmatprep.subr.mxu0 0.0
    %2757 = vmatpush2.xpose.msra.mxu0 0.0
    %2758 = vmatprep.subr.mxu0 0.0
    %2759 = vmatpush2.xpose.msra.mxu0 0.0
    %2760 = vmatprep.subr.mxu0 0.0
    %2761 = vmatpush2.xpose.msra.mxu0 0.0
    %2762 = vmatprep.subr.mxu0 0.0
    %2763 = vmatpush2.xpose.msra.mxu0 0.0
    %2764 = vmatprep.subr.mxu0 0.0
    %2765 = vmatpush2.xpose.msra.mxu0 0.0
    %2766 = vmatprep.subr.mxu0 0.0
    %2767 = vmatpush2.xpose.msra.mxu0 0.0
    %2768 = vmatprep.subr.mxu0 0.0
    %2769 = vmatpush2.xpose.msra.mxu0 0.0
    %2770 = vmatprep.subr.mxu0 0.0
    %2771 = vmatpush2.xpose.msra.mxu0 0.0
    %2772 = vmatprep.subr.mxu0 0.0
    %2773 = vmatpush2.xpose.msra.mxu0 0.0
    %2774 = vmatprep.subr.mxu0 0.0
    %2775 = vmatpush2.xpose.msra.mxu0 0.0
    %2776 = vmatprep.mubr.f32.mxu0 0.0
    %2777 = vmatmul.mubr.f32.gmra.mxu0 %v2708
    %v2778 = vpop.f32.mrf.mxu0
    %v2779 = vadd.f32 0.0, %v2778
    %v2780 = vpop.f32.mrf.mxu0
    %2781 = vdwg.mxu0
    %v2782 = vsel %vm315, -1e+09, %v2701
    %v2783 = vsel %vm316, -1e+09, %v2779
    %v2784 = vsel %vm471, %v2782, -inf
    %2785 = vmax.xlane.f32.xlu0 %v2784
    %v2786 = vpop.xlane.xlu0 %2785
    %v2787 = vsel %vm471, %v2783, -inf
    %2788 = vmax.xlane.f32.xlu0 %v2787
    %v2789 = vpop.xlane.xlu0 %2788
    %v2790 = vsub.f32 %v2782, %v2786
    %v2791 = vsub.f32 %v2783, %v2789
    %v2792 = vmul.f32 %v2790, 1.442695
    %v2793 = vpow.pop %v2792
    %v2794 = vmul.f32 %v2791, 1.442695
    %v2795 = vpow.pop %v2794
    %v2796 = vsel %vm471, %v2793, 0.0
    %2797 = vadd.xlane.f32.xlu0 %v2796
    %v2798 = vpop.xlane.xlu0 %2797
    %v2799 = vsel %vm471, %v2795, 0.0
    %2800 = vadd.xlane.f32.xlu0 %v2799
    %v2801 = vpop.xlane.xlu0 %2800
    %v2802 = vrcp.pop %v2798
    %v2803 = vrcp.pop %v2801
    %v2804 = vmul.f32 %v2793, %v2802
    %v2805 = vmul.f32 %v2795, %v2803
    %2806 = vrot.lane.b32.xlu0 %v301, 32
    %v2807 = vpop.permute.xlu0 %2806
    %v2810 = vsel %vm471, %v2804, 0
    %2812 = vmatprep.subr.mxu0 0.0
    %2813 = vmatpush1.msra.mxu0 0.0
    %2814 = vmatprep.subr.mxu0 0.0
    %2815 = vmatpush1.msra.mxu0 0.0
    %2816 = vmatprep.subr.mxu0 0.0
    %2817 = vmatpush1.msra.mxu0 0.0
    %2818 = vmatprep.subr.mxu0 0.0
    %2819 = vmatpush1.msra.mxu0 0.0
    %2820 = vmatprep.subr.mxu0 0.0
    %2821 = vmatpush1.msra.mxu0 0.0
    %2822 = vmatprep.subr.mxu0 0.0
    %2823 = vmatpush1.msra.mxu0 0.0
    %2824 = vmatprep.subr.mxu0 0.0
    %2825 = vmatpush1.msra.mxu0 0.0
    %2826 = vmatprep.subr.mxu0 0.0
    %2827 = vmatpush1.msra.mxu0 0.0
    %2828 = vmatprep.subr.mxu0 0.0
    %2829 = vmatpush1.msra.mxu0 0.0
    %2830 = vmatprep.subr.mxu0 0.0
    %2831 = vmatpush1.msra.mxu0 0.0
    %2832 = vmatprep.subr.mxu0 0.0
    %2833 = vmatpush1.msra.mxu0 0.0
    %2834 = vmatprep.subr.mxu0 0.0
    %2835 = vmatpush1.msra.mxu0 0.0
    %2836 = vmatprep.subr.mxu0 0.0
    %2837 = vmatpush1.msra.mxu0 0.0
    %2838 = vmatprep.subr.mxu0 0.0
    %2839 = vmatpush1.msra.mxu0 0.0
    %2840 = vmatprep.subr.mxu0 0.0
    %2841 = vmatpush1.msra.mxu0 0.0
    %2842 = vmatprep.subr.mxu0 0.0
    %2843 = vmatpush1.msra.mxu0 %v2807
    %2844 = vmatprep.subr.mxu0 0.0
    %2845 = vmatpush2.msra.mxu0 0.0
    %2846 = vmatprep.subr.mxu0 0.0
    %2847 = vmatpush2.msra.mxu0 0.0
    %2848 = vmatprep.subr.mxu0 0.0
    %2849 = vmatpush2.msra.mxu0 0.0
    %2850 = vmatprep.subr.mxu0 0.0
    %2851 = vmatpush2.msra.mxu0 0.0
    %2852 = vmatprep.subr.mxu0 0.0
    %2853 = vmatpush2.msra.mxu0 0.0
    %2854 = vmatprep.subr.mxu0 0.0
    %2855 = vmatpush2.msra.mxu0 0.0
    %2856 = vmatprep.subr.mxu0 0.0
    %2857 = vmatpush2.msra.mxu0 0.0
    %2858 = vmatprep.subr.mxu0 0.0
    %2859 = vmatpush2.msra.mxu0 0.0
    %2860 = vmatprep.subr.mxu0 0.0
    %2861 = vmatpush2.msra.mxu0 0.0
    %2862 = vmatprep.subr.mxu0 0.0
    %2863 = vmatpush2.msra.mxu0 0.0
    %2864 = vmatprep.subr.mxu0 0.0
    %2865 = vmatpush2.msra.mxu0 0.0
    %2866 = vmatprep.subr.mxu0 0.0
    %2867 = vmatpush2.msra.mxu0 0.0
    %2868 = vmatprep.subr.mxu0 0.0
    %2869 = vmatpush2.msra.mxu0 0.0
    %2870 = vmatprep.subr.mxu0 0.0
    %2871 = vmatpush2.msra.mxu0 0.0
    %2872 = vmatprep.subr.mxu0 0.0
    %2873 = vmatpush2.msra.mxu0 0.0
    %2874 = vmatprep.subr.mxu0 0.0
    %2875 = vmatpush2.msra.mxu0 0.0
    %2876 = vmatprep.mubr.f32.mxu0 0.0
    %2877 = vmatmul.mubr.f32.gmra.mxu0 %v2810
    %v2878 = vpop.f32.mrf.mxu0
    %v2879 = vadd.f32 0.0, %v2878
    %v2880 = vpop.f32.mrf.mxu0
    %2881 = vdwg.mxu0
    %2882 = vrot.lane.b32.xlu0 %v307, 32
    %v2883 = vpop.permute.xlu0 %2882
    %v2886 = vsel %vm471, %v2805, 0
    %2888 = vmatprep.subr.mxu0 0.0
    %2889 = vmatpush1.msra.mxu0 0.0
    %2890 = vmatprep.subr.mxu0 0.0
    %2891 = vmatpush1.msra.mxu0 0.0
    %2892 = vmatprep.subr.mxu0 0.0
    %2893 = vmatpush1.msra.mxu0 0.0
    %2894 = vmatprep.subr.mxu0 0.0
    %2895 = vmatpush1.msra.mxu0 0.0
    %2896 = vmatprep.subr.mxu0 0.0
    %2897 = vmatpush1.msra.mxu0 0.0
    %2898 = vmatprep.subr.mxu0 0.0
    %2899 = vmatpush1.msra.mxu0 0.0
    %2900 = vmatprep.subr.mxu0 0.0
    %2901 = vmatpush1.msra.mxu0 0.0
    %2902 = vmatprep.subr.mxu0 0.0
    %2903 = vmatpush1.msra.mxu0 0.0
    %2904 = vmatprep.subr.mxu0 0.0
    %2905 = vmatpush1.msra.mxu0 0.0
    %2906 = vmatprep.subr.mxu0 0.0
    %2907 = vmatpush1.msra.mxu0 0.0
    %2908 = vmatprep.subr.mxu0 0.0
    %2909 = vmatpush1.msra.mxu0 0.0
    %2910 = vmatprep.subr.mxu0 0.0
    %2911 = vmatpush1.msra.mxu0 0.0
    %2912 = vmatprep.subr.mxu0 0.0
    %2913 = vmatpush1.msra.mxu0 0.0
    %2914 = vmatprep.subr.mxu0 0.0
    %2915 = vmatpush1.msra.mxu0 0.0
    %2916 = vmatprep.subr.mxu0 0.0
    %2917 = vmatpush1.msra.mxu0 0.0
    %2918 = vmatprep.subr.mxu0 0.0
    %2919 = vmatpush1.msra.mxu0 %v2883
    %2920 = vmatprep.subr.mxu0 0.0
    %2921 = vmatpush2.msra.mxu0 0.0
    %2922 = vmatprep.subr.mxu0 0.0
    %2923 = vmatpush2.msra.mxu0 0.0
    %2924 = vmatprep.subr.mxu0 0.0
    %2925 = vmatpush2.msra.mxu0 0.0
    %2926 = vmatprep.subr.mxu0 0.0
    %2927 = vmatpush2.msra.mxu0 0.0
    %2928 = vmatprep.subr.mxu0 0.0
    %2929 = vmatpush2.msra.mxu0 0.0
    %2930 = vmatprep.subr.mxu0 0.0
    %2931 = vmatpush2.msra.mxu0 0.0
    %2932 = vmatprep.subr.mxu0 0.0
    %2933 = vmatpush2.msra.mxu0 0.0
    %2934 = vmatprep.subr.mxu0 0.0
    %2935 = vmatpush2.msra.mxu0 0.0
    %2936 = vmatprep.subr.mxu0 0.0
    %2937 = vmatpush2.msra.mxu0 0.0
    %2938 = vmatprep.subr.mxu0 0.0
    %2939 = vmatpush2.msra.mxu0 0.0
    %2940 = vmatprep.subr.mxu0 0.0
    %2941 = vmatpush2.msra.mxu0 0.0
    %2942 = vmatprep.subr.mxu0 0.0
    %2943 = vmatpush2.msra.mxu0 0.0
    %2944 = vmatprep.subr.mxu0 0.0
    %2945 = vmatpush2.msra.mxu0 0.0
    %2946 = vmatprep.subr.mxu0 0.0
    %2947 = vmatpush2.msra.mxu0 0.0
    %2948 = vmatprep.subr.mxu0 0.0
    %2949 = vmatpush2.msra.mxu0 0.0
    %2950 = vmatprep.subr.mxu0 0.0
    %2951 = vmatpush2.msra.mxu0 0.0
    %2952 = vmatprep.mubr.f32.mxu0 0.0
    %2953 = vmatmul.mubr.f32.gmra.mxu0 %v2886
    %v2954 = vpop.f32.mrf.mxu0
    %v2955 = vadd.f32 0.0, %v2954
    %v2956 = vpop.f32.mrf.mxu0
    %2957 = vdwg.mxu0
    %2958 = vrot.lane.b32.xlu0 %v818, 8
    %v2959 = vpop.permute.xlu0 %2958
    %2960 = vrot.lane.b32.xlu0 %v819, 8
    %v2961 = vpop.permute.xlu0 %2960
    %2964 = vrot.lane.b32.xlu0 %v1152, 16
    %v2965 = vpop.permute.xlu0 %2964
    %2966 = vrot.lane.b32.xlu0 %v1153, 16
    %v2967 = vpop.permute.xlu0 %2966
    %2970 = vrot.lane.b32.xlu0 %v1484, 24
    %v2971 = vpop.permute.xlu0 %2970
    %2972 = vrot.lane.b32.xlu0 %v1485, 24
    %v2973 = vpop.permute.xlu0 %2972
    %2976 = vrot.lane.b32.xlu0 %v1812, 32
    %v2977 = vpop.permute.xlu0 %2976
    %2978 = vrot.lane.b32.xlu0 %v1813, 32
    %v2979 = vpop.permute.xlu0 %2978
    %2982 = vrot.lane.b32.xlu0 %v2138, 40
    %v2983 = vpop.permute.xlu0 %2982
    %2984 = vrot.lane.b32.xlu0 %v2139, 40
    %v2985 = vpop.permute.xlu0 %2984
    %2988 = vrot.lane.b32.xlu0 %v2472, 48
    %v2989 = vpop.permute.xlu0 %2988
    %2990 = vrot.lane.b32.xlu0 %v2473, 48
    %v2991 = vpop.permute.xlu0 %2990
    %2994 = vrot.lane.b32.xlu0 %v2804, 56
    %v2995 = vpop.permute.xlu0 %2994
    %2996 = vrot.lane.b32.xlu0 %v2805, 56
    %v2997 = vpop.permute.xlu0 %2996
    %v3000 = vsel %vm471, %v492, %v2959
    %v3001 = vsel %vm471, %v493, %v2961
    %vm3002 = vcmask 130048
    %v3003 = vsel %vm3002, %v3000, %v2965
    %v3004 = vsel %vm3002, %v3001, %v2967
    %vm3005 = vcmask 195584
    %v3006 = vsel %vm3005, %v3003, %v2971
    %v3007 = vsel %vm3005, %v3004, %v2973
    %v3008 = vsel %vm55, %v3006, %v2977
    %v3009 = vsel %vm55, %v3007, %v2979
    %vm3010 = vcmask 326656
    %v3011 = vsel %vm3010, %v3008, %v2983
    %v3012 = vsel %vm3010, %v3009, %v2985
    %vm3013 = vcmask 392192
    %v3014 = vsel %vm3013, %v3011, %v2989
    %v3015 = vsel %vm3013, %v3012, %v2991
    %vm3016 = vcmask 457728
    %v3017 = vsel %vm3016, %v3014, %v2995
    %v3018 = vsel %vm3016, %v3015, %v2997
    %vm3019 = vcmask 523264
    %3020 = vst.msk [vmem:[#allocation4] sm:$0xff] %vm3019, %v3017
    %3021 = vst.msk [vmem:[#allocation4 + $0x8] sm:$0xff] %vm3019, %v3018
    %3024 = vrot.lane.b32.xlu0 %v894, 32
    %v3025 = vpop.permute.xlu0 %3024
    %3026 = vrot.lane.b32.xlu0 %v971, 32
    %v3027 = vpop.permute.xlu0 %3026
    %3032 = vrot.lane.b32.xlu0 %v1227, 64
    %v3033 = vpop.permute.xlu0 %3032
    %3034 = vrot.lane.b32.xlu0 %v1303, 64
    %v3035 = vpop.permute.xlu0 %3034
    %3040 = vrot.lane.b32.xlu0 %v1559, 96
    %v3041 = vpop.permute.xlu0 %3040
    %3042 = vrot.lane.b32.xlu0 %v1635, 96
    %v3043 = vpop.permute.xlu0 %3042
    %3048 = vrot.lane.b32.xlu0 %v2214, 32
    %v3049 = vpop.permute.xlu0 %3048
    %3050 = vrot.lane.b32.xlu0 %v2291, 32
    %v3051 = vpop.permute.xlu0 %3050
    %3056 = vrot.lane.b32.xlu0 %v2547, 64
    %v3057 = vpop.permute.xlu0 %3056
    %3058 = vrot.lane.b32.xlu0 %v2623, 64
    %v3059 = vpop.permute.xlu0 %3058
    %3064 = vrot.lane.b32.xlu0 %v2879, 96
    %v3065 = vpop.permute.xlu0 %3064
    %3066 = vrot.lane.b32.xlu0 %v2955, 96
    %v3067 = vpop.permute.xlu0 %3066
    %v3070 = vsel %vm55, %v564, %v3025
    %v3071 = vsel %vm55, %v637, %v3027
    %v3072 = vsel %vm3019, %v3070, %v3033
    %v3073 = vsel %vm3019, %v3071, %v3035
    %vm3074 = vcmask 785408
    %v3075 = vsel %vm3074, %v3072, %v3041
    %v3076 = vsel %vm3074, %v3073, %v3043
    %v3077 = vsel %vm55, %v1884, %v3049
    %v3078 = vsel %vm55, %v1957, %v3051
    %v3079 = vsel %vm3019, %v3077, %v3057
    %v3080 = vsel %vm3019, %v3078, %v3059
    %v3081 = vsel %vm3074, %v3079, %v3065
    %v3082 = vsel %vm3074, %v3080, %v3067
    %v3083 = vld [vmem:[%s5] sm:$0xff]
    %v3084 = vld [vmem:[%s5 + $0x8] sm:$0xff]
    %v3085 = vld [vmem:[%s5 + $0x10] sm:$0xff]
    %v3086 = vld [vmem:[%s5 + $0x18] sm:$0xff]
    %v3087 = vld [vmem:[%s5 + $0x20] sm:$0xff]
    %v3088 = vld [vmem:[%s5 + $0x28] sm:$0xff]
    %v3089 = vld [vmem:[%s5 + $0x30] sm:$0xff]
    %v3090 = vld [vmem:[%s5 + $0x38] sm:$0xff]
    %v3091 = vld [vmem:[%s5 + $0x40] sm:$0xff]
    %v3092 = vld [vmem:[%s5 + $0x48] sm:$0xff]
    %v3093 = vld [vmem:[%s5 + $0x50] sm:$0xff]
    %v3094 = vld [vmem:[%s5 + $0x58] sm:$0xff]
    %v3095 = vld [vmem:[%s5 + $0x60] sm:$0xff]
    %v3096 = vld [vmem:[%s5 + $0x68] sm:$0xff]
    %v3097 = vld [vmem:[%s5 + $0x70] sm:$0xff]
    %v3098 = vld [vmem:[%s5 + $0x78] sm:$0xff]
    %v3099 = vld [vmem:[%s5 + $0x80] sm:$0xff]
    %v3100 = vld [vmem:[%s5 + $0x88] sm:$0xff]
    %v3101 = vld [vmem:[%s5 + $0x90] sm:$0xff]
    %v3102 = vld [vmem:[%s5 + $0x98] sm:$0xff]
    %v3103 = vld [vmem:[%s5 + $0xa0] sm:$0xff]
    %v3104 = vld [vmem:[%s5 + $0xa8] sm:$0xff]
    %v3105 = vld [vmem:[%s5 + $0xb0] sm:$0xff]
    %v3106 = vld [vmem:[%s5 + $0xb8] sm:$0xff]
    %v3107 = vld [vmem:[%s5 + $0xc0] sm:$0xff]
    %v3108 = vld [vmem:[%s5 + $0xc8] sm:$0xff]
    %v3109 = vld [vmem:[%s5 + $0xd0] sm:$0xff]
    %v3110 = vld [vmem:[%s5 + $0xd8] sm:$0xff]
    %v3111 = vld [vmem:[%s5 + $0xe0] sm:$0xff]
    %v3112 = vld [vmem:[%s5 + $0xe8] sm:$0xff]
    %v3113 = vld [vmem:[%s5 + $0xf0] sm:$0xff]
    %v3114 = vld [vmem:[%s5 + $0xf8] sm:$0xff]
    %3115 = vmatprep.subr.mxu0 0.0
    %3116 = vmatpush1.msra.mxu0 %v3098
    %3117 = vmatprep.subr.mxu0 0.0
    %3118 = vmatpush1.msra.mxu0 %v3097
    %3119 = vmatprep.subr.mxu0 0.0
    %3120 = vmatpush1.msra.mxu0 %v3096
    %3121 = vmatprep.subr.mxu0 0.0
    %3122 = vmatpush1.msra.mxu0 %v3095
    %3123 = vmatprep.subr.mxu0 0.0
    %3124 = vmatpush1.msra.mxu0 %v3094
    %3125 = vmatprep.subr.mxu0 0.0
    %3126 = vmatpush1.msra.mxu0 %v3093
    %3127 = vmatprep.subr.mxu0 0.0
    %3128 = vmatpush1.msra.mxu0 %v3092
    %3129 = vmatprep.subr.mxu0 0.0
    %3130 = vmatpush1.msra.mxu0 %v3091
    %3131 = vmatprep.subr.mxu0 0.0
    %3132 = vmatpush1.msra.mxu0 %v3090
    %3133 = vmatprep.subr.mxu0 0.0
    %3134 = vmatpush1.msra.mxu0 %v3089
    %3135 = vmatprep.subr.mxu0 0.0
    %3136 = vmatpush1.msra.mxu0 %v3088
    %3137 = vmatprep.subr.mxu0 0.0
    %3138 = vmatpush1.msra.mxu0 %v3087
    %3139 = vmatprep.subr.mxu0 0.0
    %3140 = vmatpush1.msra.mxu0 %v3086
    %3141 = vmatprep.subr.mxu0 0.0
    %3142 = vmatpush1.msra.mxu0 %v3085
    %3143 = vmatprep.subr.mxu0 0.0
    %3144 = vmatpush1.msra.mxu0 %v3084
    %3145 = vmatprep.subr.mxu0 0.0
    %3146 = vmatpush1.msra.mxu0 %v3083
    %3147 = vmatprep.subr.mxu0 0.0
    %3148 = vmatpush2.msra.mxu0 %v3114
    %3149 = vmatprep.subr.mxu0 0.0
    %3150 = vmatpush2.msra.mxu0 %v3113
    %3151 = vmatprep.subr.mxu0 0.0
    %3152 = vmatpush2.msra.mxu0 %v3112
    %3153 = vmatprep.subr.mxu0 0.0
    %3154 = vmatpush2.msra.mxu0 %v3111
    %3155 = vmatprep.subr.mxu0 0.0
    %3156 = vmatpush2.msra.mxu0 %v3110
    %3157 = vmatprep.subr.mxu0 0.0
    %3158 = vmatpush2.msra.mxu0 %v3109
    %3159 = vmatprep.subr.mxu0 0.0
    %3160 = vmatpush2.msra.mxu0 %v3108
    %3161 = vmatprep.subr.mxu0 0.0
    %3162 = vmatpush2.msra.mxu0 %v3107
    %3163 = vmatprep.subr.mxu0 0.0
    %3164 = vmatpush2.msra.mxu0 %v3106
    %3165 = vmatprep.subr.mxu0 0.0
    %3166 = vmatpush2.msra.mxu0 %v3105
    %3167 = vmatprep.subr.mxu0 0.0
    %3168 = vmatpush2.msra.mxu0 %v3104
    %3169 = vmatprep.subr.mxu0 0.0
    %3170 = vmatpush2.msra.mxu0 %v3103
    %3171 = vmatprep.subr.mxu0 0.0
    %3172 = vmatpush2.msra.mxu0 %v3102
    %3173 = vmatprep.subr.mxu0 0.0
    %3174 = vmatpush2.msra.mxu0 %v3101
    %3175 = vmatprep.subr.mxu0 0.0
    %3176 = vmatpush2.msra.mxu0 %v3100
    %3177 = vmatprep.subr.mxu0 0.0
    %3178 = vmatpush2.msra.mxu0 %v3099
    %3179 = vmatprep.mubr.f32.mxu0 %v3081
    %3180 = vmatmul.mubr.f32.gmra.mxu0 %v3075
    %v3181 = vpop.f32.mrf.mxu0
    %v3182 = vadd.f32 %v45, %v3181
    %v3183 = vpop.f32.mrf.mxu0
    %3184 = vmatprep.mubr.f32.mxu0 %v3082
    %3185 = vmatmul.mubr.f32.gmra.mxu0 %v3076
    %v3186 = vpop.f32.mrf.mxu0
    %v3187 = vadd.f32 %v46, %v3186
    %v3188 = vpop.f32.mrf.mxu0
    %3189 = vdwg.mxu0
    %v3190 = vld [vmem:[%s6] sm:$0x1]
    %v3191 = vld [vmem:[%s7] sm:$0x1]
    %v3192 = vsel %vm55, %v3182, 0.0
    %3193 = vadd.xlane.f32.xlu0 %v3192
    %v3194 = vpop.xlane.xlu0 %3193
    %v3195 = vsel %vm55, %v3187, 0.0
    %3196 = vadd.xlane.f32.xlu0 %v3195
    %v3197 = vpop.xlane.xlu0 %3196
    %v3198 = vrcp.pop 32.0
    %v3199 = vmul.f32 %v3194, %v3198
    %v3200 = vmul.f32 %v3197, %v3198
    %v3201 = vsub.f32 %v3182, %v3199
    %v3202 = vsub.f32 %v3187, %v3200
    %v3203 = vmul.f32 %v3201, %v3201
    %v3204 = vmul.f32 %v3202, %v3202
    %v3205 = vsel %vm55, %v3203, 0.0
    %3206 = vadd.xlane.f32.xlu0 %v3205
    %v3207 = vpop.xlane.xlu0 %3206
    %v3208 = vsel %vm55, %v3204, 0.0
    %3209 = vadd.xlane.f32.xlu0 %v3208
    %v3210 = vpop.xlane.xlu0 %3209
    %v3211 = vmul.f32 %v3207, %v3198
    %v3212 = vmul.f32 %v3210, %v3198
    %v3213 = vadd.f32 %v3211, 1e-05
    %v3214 = vadd.f32 %v3212, 1e-05
    %v3215 = vrsqrt.pop %v3213
    %v3216 = vrsqrt.pop %v3214
    %v3217 = vmul.f32 %v3201, %v3215
    %v3218 = vmul.f32 %v3202, %v3216
    %v3220 = vlaneseq
    %v3221 = vshrl.u32 %v3220, 7
    %v3222 = vsub.s32 0, %v3221
    %v3223 = vrot.slane %v3190, %v3222
    %v3225 = vmul.f32 %v3217, %v3223
    %v3226 = vmul.f32 %v3218, %v3223
    %v3228 = vlaneseq
    %v3229 = vshrl.u32 %v3228, 7
    %v3230 = vsub.s32 0, %v3229
    %v3231 = vrot.slane %v3191, %v3230
    %v3233 = vadd.f32 %v3225, %v3231
    %v3234 = vadd.f32 %v3226, %v3231
    %v3235 = vld [vmem:[%s8] sm:$0xff]
    %v3236 = vld [vmem:[%s8 + $0x8] sm:$0xff]
    %v3237 = vld [vmem:[%s8 + $0x10] sm:$0xff]
    %v3238 = vld [vmem:[%s8 + $0x18] sm:$0xff]
    %v3240 = vsel %vm55, %v3233, 0
    %v3243 = vsel %vm55, %v3234, 0
    %3245 = vmatprep.subr.mxu0 0.0
    %3246 = vmatpush1.msra.mxu0 0.0
    %3247 = vmatprep.subr.mxu0 0.0
    %3248 = vmatpush1.msra.mxu0 0.0
    %3249 = vmatprep.subr.mxu0 0.0
    %3250 = vmatpush1.msra.mxu0 0.0
    %3251 = vmatprep.subr.mxu0 0.0
    %3252 = vmatpush1.msra.mxu0 0.0
    %3253 = vmatprep.subr.mxu0 0.0
    %3254 = vmatpush1.msra.mxu0 0.0
    %3255 = vmatprep.subr.mxu0 0.0
    %3256 = vmatpush1.msra.mxu0 0.0
    %3257 = vmatprep.subr.mxu0 0.0
    %3258 = vmatpush1.msra.mxu0 0.0
    %3259 = vmatprep.subr.mxu0 0.0
    %3260 = vmatpush1.msra.mxu0 0.0
    %3261 = vmatprep.subr.mxu0 0.0
    %3262 = vmatpush1.msra.mxu0 0.0
    %3263 = vmatprep.subr.mxu0 0.0
    %3264 = vmatpush1.msra.mxu0 0.0
    %3265 = vmatprep.subr.mxu0 0.0
    %3266 = vmatpush1.msra.mxu0 0.0
    %3267 = vmatprep.subr.mxu0 0.0
    %3268 = vmatpush1.msra.mxu0 0.0
    %3269 = vmatprep.subr.mxu0 0.0
    %3270 = vmatpush1.msra.mxu0 %v3238
    %3271 = vmatprep.subr.mxu0 0.0
    %3272 = vmatpush1.msra.mxu0 %v3237
    %3273 = vmatprep.subr.mxu0 0.0
    %3274 = vmatpush1.msra.mxu0 %v3236
    %3275 = vmatprep.subr.mxu0 0.0
    %3276 = vmatpush1.msra.mxu0 %v3235
    %3277 = vmatprep.subr.mxu0 0.0
    %3278 = vmatpush2.msra.mxu0 0.0
    %3279 = vmatprep.subr.mxu0 0.0
    %3280 = vmatpush2.msra.mxu0 0.0
    %3281 = vmatprep.subr.mxu0 0.0
    %3282 = vmatpush2.msra.mxu0 0.0
    %3283 = vmatprep.subr.mxu0 0.0
    %3284 = vmatpush2.msra.mxu0 0.0
    %3285 = vmatprep.subr.mxu0 0.0
    %3286 = vmatpush2.msra.mxu0 0.0
    %3287 = vmatprep.subr.mxu0 0.0
    %3288 = vmatpush2.msra.mxu0 0.0
    %3289 = vmatprep.subr.mxu0 0.0
    %3290 = vmatpush2.msra.mxu0 0.0
    %3291 = vmatprep.subr.mxu0 0.0
    %3292 = vmatpush2.msra.mxu0 0.0
    %3293 = vmatprep.subr.mxu0 0.0
    %3294 = vmatpush2.msra.mxu0 0.0
    %3295 = vmatprep.subr.mxu0 0.0
    %3296 = vmatpush2.msra.mxu0 0.0
    %3297 = vmatprep.subr.mxu0 0.0
    %3298 = vmatpush2.msra.mxu0 0.0
    %3299 = vmatprep.subr.mxu0 0.0
    %3300 = vmatpush2.msra.mxu0 0.0
    %3301 = vmatprep.subr.mxu0 0.0
    %3302 = vmatpush2.msra.mxu0 0.0
    %3303 = vmatprep.subr.mxu0 0.0
    %3304 = vmatpush2.msra.mxu0 0.0
    %3305 = vmatprep.subr.mxu0 0.0
    %3306 = vmatpush2.msra.mxu0 0.0
    %3307 = vmatprep.subr.mxu0 0.0
    %3308 = vmatpush2.msra.mxu0 0.0
    %3309 = vmatprep.mubr.f32.mxu0 0.0
    %3310 = vmatmul.mubr.f32.gmra.mxu0 %v3240
    %v3311 = vpop.f32.mrf.mxu0
    %v3312 = vadd.f32 0.0, %v3311
    %v3313 = vpop.f32.mrf.mxu0
    %3314 = vmatprep.mubr.f32.mxu0 0.0
    %3315 = vmatmul.mubr.f32.gmra.mxu0 %v3243
    %v3316 = vpop.f32.mrf.mxu0
    %v3317 = vadd.f32 0.0, %v3316
    %v3318 = vpop.f32.mrf.mxu0
    %3319 = vdwg.mxu0
    %v3320 = vmax.f32 %v3312, 0.0
    %v3321 = vmax.f32 %v3317, 0.0
    %v3322 = vld [vmem:[%s9] sm:$0xff]
    %v3323 = vld [vmem:[%s9 + $0x8] sm:$0xff]
    %v3324 = vld [vmem:[%s9 + $0x10] sm:$0xff]
    %v3325 = vld [vmem:[%s9 + $0x18] sm:$0xff]
    %v3326 = vld [vmem:[%s9 + $0x20] sm:$0xff]
    %v3327 = vld [vmem:[%s9 + $0x28] sm:$0xff]
    %v3328 = vld [vmem:[%s9 + $0x30] sm:$0xff]
    %v3329 = vld [vmem:[%s9 + $0x38] sm:$0xff]
    %v3330 = vld [vmem:[%s9 + $0x40] sm:$0xff]
    %v3331 = vld [vmem:[%s9 + $0x48] sm:$0xff]
    %v3332 = vld [vmem:[%s9 + $0x50] sm:$0xff]
    %v3333 = vld [vmem:[%s9 + $0x58] sm:$0xff]
    %v3334 = vld [vmem:[%s9 + $0x60] sm:$0xff]
    %v3335 = vld [vmem:[%s9 + $0x68] sm:$0xff]
    %v3336 = vld [vmem:[%s9 + $0x70] sm:$0xff]
    %v3337 = vld [vmem:[%s9 + $0x78] sm:$0xff]
    %3338 = vmatprep.subr.mxu0 0.0
    %3339 = vmatpush1.msra.mxu0 %v3337
    %3340 = vmatprep.subr.mxu0 0.0
    %3341 = vmatpush1.msra.mxu0 %v3336
    %3342 = vmatprep.subr.mxu0 0.0
    %3343 = vmatpush1.msra.mxu0 %v3335
    %3344 = vmatprep.subr.mxu0 0.0
    %3345 = vmatpush1.msra.mxu0 %v3334
    %3346 = vmatprep.subr.mxu0 0.0
    %3347 = vmatpush1.msra.mxu0 %v3333
    %3348 = vmatprep.subr.mxu0 0.0
    %3349 = vmatpush1.msra.mxu0 %v3332
    %3350 = vmatprep.subr.mxu0 0.0
    %3351 = vmatpush1.msra.mxu0 %v3331
    %3352 = vmatprep.subr.mxu0 0.0
    %3353 = vmatpush1.msra.mxu0 %v3330
    %3354 = vmatprep.subr.mxu0 0.0
    %3355 = vmatpush1.msra.mxu0 %v3329
    %3356 = vmatprep.subr.mxu0 0.0
    %3357 = vmatpush1.msra.mxu0 %v3328
    %3358 = vmatprep.subr.mxu0 0.0
    %3359 = vmatpush1.msra.mxu0 %v3327
    %3360 = vmatprep.subr.mxu0 0.0
    %3361 = vmatpush1.msra.mxu0 %v3326
    %3362 = vmatprep.subr.mxu0 0.0
    %3363 = vmatpush1.msra.mxu0 %v3325
    %3364 = vmatprep.subr.mxu0 0.0
    %3365 = vmatpush1.msra.mxu0 %v3324
    %3366 = vmatprep.subr.mxu0 0.0
    %3367 = vmatpush1.msra.mxu0 %v3323
    %3368 = vmatprep.subr.mxu0 0.0
    %3369 = vmatpush1.msra.mxu0 %v3322
    %3370 = vmatprep.subr.mxu0 0.0
    %3371 = vmatpush2.msra.mxu0 0.0
    %3372 = vmatprep.subr.mxu0 0.0
    %3373 = vmatpush2.msra.mxu0 0.0
    %3374 = vmatprep.subr.mxu0 0.0
    %3375 = vmatpush2.msra.mxu0 0.0
    %3376 = vmatprep.subr.mxu0 0.0
    %3377 = vmatpush2.msra.mxu0 0.0
    %3378 = vmatprep.subr.mxu0 0.0
    %3379 = vmatpush2.msra.mxu0 0.0
    %3380 = vmatprep.subr.mxu0 0.0
    %3381 = vmatpush2.msra.mxu0 0.0
    %3382 = vmatprep.subr.mxu0 0.0
    %3383 = vmatpush2.msra.mxu0 0.0
    %3384 = vmatprep.subr.mxu0 0.0
    %3385 = vmatpush2.msra.mxu0 0.0
    %3386 = vmatprep.subr.mxu0 0.0
    %3387 = vmatpush2.msra.mxu0 0.0
    %3388 = vmatprep.subr.mxu0 0.0
    %3389 = vmatpush2.msra.mxu0 0.0
    %3390 = vmatprep.subr.mxu0 0.0
    %3391 = vmatpush2.msra.mxu0 0.0
    %3392 = vmatprep.subr.mxu0 0.0
    %3393 = vmatpush2.msra.mxu0 0.0
    %3394 = vmatprep.subr.mxu0 0.0
    %3395 = vmatpush2.msra.mxu0 0.0
    %3396 = vmatprep.subr.mxu0 0.0
    %3397 = vmatpush2.msra.mxu0 0.0
    %3398 = vmatprep.subr.mxu0 0.0
    %3399 = vmatpush2.msra.mxu0 0.0
    %3400 = vmatprep.subr.mxu0 0.0
    %3401 = vmatpush2.msra.mxu0 0.0
    %3402 = vmatprep.mubr.f32.mxu0 0.0
    %3403 = vmatmul.mubr.f32.gmra.mxu0 %v3320
    %v3404 = vpop.f32.mrf.mxu0
    %v3405 = vadd.f32 0.0, %v3404
    %v3406 = vpop.f32.mrf.mxu0
    %3407 = vmatprep.mubr.f32.mxu0 0.0
    %3408 = vmatmul.mubr.f32.gmra.mxu0 %v3321
    %v3409 = vpop.f32.mrf.mxu0
    %v3410 = vadd.f32 0.0, %v3409
    %v3411 = vpop.f32.mrf.mxu0
    %3412 = vdwg.mxu0
    %v3413 = vld [vmem:[%s10] sm:$0x1]
    %v3414 = vld [vmem:[%s11] sm:$0x1]
    %v3415 = vsel %vm55, %v3405, 0.0
    %3416 = vadd.xlane.f32.xlu0 %v3415
    %v3417 = vpop.xlane.xlu0 %3416
    %v3418 = vsel %vm55, %v3410, 0.0
    %3419 = vadd.xlane.f32.xlu0 %v3418
    %v3420 = vpop.xlane.xlu0 %3419
    %v3421 = vmul.f32 %v3417, %v3198
    %v3422 = vmul.f32 %v3420, %v3198
    %v3423 = vsub.f32 %v3405, %v3421
    %v3424 = vsub.f32 %v3410, %v3422
    %v3425 = vmul.f32 %v3423, %v3423
    %v3426 = vmul.f32 %v3424, %v3424
    %v3427 = vsel %vm55, %v3425, 0.0
    %3428 = vadd.xlane.f32.xlu0 %v3427
    %v3429 = vpop.xlane.xlu0 %3428
    %v3430 = vsel %vm55, %v3426, 0.0
    %3431 = vadd.xlane.f32.xlu0 %v3430
    %v3432 = vpop.xlane.xlu0 %3431
    %v3433 = vmul.f32 %v3429, %v3198
    %v3434 = vmul.f32 %v3432, %v3198
    %v3435 = vadd.f32 %v3433, 1e-05
    %v3436 = vadd.f32 %v3434, 1e-05
    %v3437 = vrsqrt.pop %v3435
    %v3438 = vrsqrt.pop %v3436
    %v3439 = vmul.f32 %v3423, %v3437
    %v3440 = vmul.f32 %v3424, %v3438
    %v3442 = vlaneseq
    %v3443 = vshrl.u32 %v3442, 7
    %v3444 = vsub.s32 0, %v3443
    %v3445 = vrot.slane %v3413, %v3444
    %v3447 = vmul.f32 %v3439, %v3445
    %v3448 = vmul.f32 %v3440, %v3445
    %v3450 = vlaneseq
    %v3451 = vshrl.u32 %v3450, 7
    %v3452 = vsub.s32 0, %v3451
    %v3453 = vrot.slane %v3414, %v3452
    %v3455 = vadd.f32 %v3447, %v3453
    %v3456 = vadd.f32 %v3448, %v3453
    %v3457 = vadd.f32 %v3455, %v3233
    %v3458 = vadd.f32 %v3456, %v3234
    %3459 = vst.msk [vmem:[#allocation2] sm:$0xff] %vm55, %v3457
    %3460 = vst.msk [vmem:[#allocation2 + $0x8] sm:$0xff] %vm55, %v3458
    // Predicated region
    $region50: #{tpu_custom_call.1} parent=1 // pred_check
      _
    $region51: #{tpu_custom_call.1} parent=1 // pred_check_branch
      %3462 = sbr.rel (0) target = $region53
    $region52: #{tpu_custom_call.1} parent=1 // pred_region
      %s3464 = ssub.s32 256, 256
      %3465 = vsyncadd [#allocation3], %s3464
      %s3466 = sshll.u32 [#allocation2], 4
      %s3467 = int_to_ptr.vmem [resolvable:$true] %s3466
      %3472 = dma.vmem_to_hbm [thread:$0]  %s3467, 256, %s12, [#allocation3], 128, 128, 8
    $region53: #{tpu_custom_call.1} parent=1 // pred_fallthru
      _
    // Predicated region
    $region54: #{tpu_custom_call.1} parent=1 // pred_check
      _
    $region55: #{tpu_custom_call.1} parent=1 // pred_check_branch
      %3474 = sbr.rel (0) target = $region57
    $region56: #{tpu_custom_call.1} parent=1 // pred_region
      %s3476 = ssub.s32 256, 256
      %3477 = vsyncadd [#allocation5], %s3476
      %s3478 = sshll.u32 [#allocation4], 4
      %s3479 = int_to_ptr.vmem [resolvable:$true] %s3478
      %3484 = dma.vmem_to_hbm [thread:$0]  %s3479, 256, %s13, [#allocation5], 128, 128, 8
    $region57: #{tpu_custom_call.1} parent=1 // pred_fallthru
      _
    // Predicated region
    $region58: #{tpu_custom_call.1} parent=1 // pred_check
      _
    $region59: #{tpu_custom_call.1} parent=1 // pred_check_branch
      %3486 = sbr.rel (0) target = $region61
    $region60: #{tpu_custom_call.1} parent=1 // pred_region
      %3487 = dma.done [#allocation3], 256
    $region61: #{tpu_custom_call.1} parent=1 // pred_fallthru
      _
    // Predicated region
    $region62: #{tpu_custom_call.1} parent=1 // pred_check
      _
    $region63: #{tpu_custom_call.1} parent=1 // pred_check_branch
      %3489 = sbr.rel (0) target = $region65
    $region64: #{tpu_custom_call.1} parent=1 // pred_region
      %3490 = dma.done [#allocation5], 256
    $region65: #{tpu_custom_call.1} parent=1 // pred_fallthru
      _
    %3491 = vsyncpa [#allocation3], 1
    %3492 = vsyncpa [#allocation5], 1

</llo_original>
